<compile_context>
chip_gen: v6e
topology: v6e:2x2x1
jax: 0.10.0
libtpu: 0.0.40
codegen_flags: <defaults>
</compile_context>

<pallas_src>
import functools

import jax
import jax.numpy as jnp
from jax import lax
from jax.experimental import pallas as pl
from jax.experimental.pallas import tpu as pltpu

EPS = 1e-5


def _layernorm(x, gamma, beta):
    # Single-pass statistics: mean and mean-of-squares are independent
    # reductions (var = E[x^2] - E[x]^2), matching torch.nn.LayerNorm.
    mu = jnp.mean(x, axis=-1, keepdims=True)
    ms = jnp.mean(x * x, axis=-1, keepdims=True)
    var = jnp.maximum(ms - mu * mu, 0.0)
    return (x - mu) * lax.rsqrt(var + EPS) * gamma + beta


def block_kernel(x_ref,
                 ln1g_ref, ln1b_ref,
                 wqkv_ref, wproj_ref, bproj_ref,
                 ln2g_ref, ln2b_ref,
                 w1_ref, b1_ref, w2_ref, b2_ref,
                 out_ref,
                 *, heads: int):
    # One batch element per grid step; batch dim squeezed -> (T, C) refs.
    x = x_ref[...].astype(jnp.float32)                      # (T, C) f32
    T, C = x.shape
    hs = C // heads

    # ---- LayerNorm 1 (f32 elementwise) ----
    xn = _layernorm(x, ln1g_ref[...], ln1b_ref[...])        # (T, C)

    # ---- Fused QKV projection: one bf16 MXU matmul, f32 accumulation.
    # The q columns of wqkv were pre-scaled by C**-0.5 in the wrapper, so the
    # softmax scale is already folded in.  Cast to bf16 ONCE; all per-head
    # slices below read the bf16 tensor.
    qkv = jnp.dot(xn.astype(jnp.bfloat16), wqkv_ref[...],
                  preferred_element_type=jnp.float32).astype(jnp.bfloat16)   # (T, 3C)

    # ---- Hoisted additive causal mask (0 where allowed, -1e30 where masked).
    row = lax.broadcasted_iota(jnp.int32, (T, T), 0)
    col = lax.broadcasted_iota(jnp.int32, (T, T), 1)
    mask_add = jnp.where(col <= row, 0.0, -1e30).astype(jnp.float32)         # (T, T)

    # ---- Per-head attention (heads is small & static).  Head outputs are
    # kept in bf16 and concatenated so the output projection is a single
    # full-K (T,C)@(C,C) MXU matmul (== concat(heads) @ Wproj).
    head_outs = []
    for h in range(heads):
        q = qkv[:, h * hs:(h + 1) * hs]                     # (T, hs) bf16 (pre-scaled)
        k = qkv[:, C + h * hs:C + (h + 1) * hs]             # (T, hs) bf16
        v = qkv[:, 2 * C + h * hs:2 * C + (h + 1) * hs]     # (T, hs) bf16

        # q @ k.T without an explicit transpose (NT matmul on the MXU).
        s = lax.dot_general(q, k, (((1,), (1,)), ((), ())),
                            preferred_element_type=jnp.float32) + mask_add   # (T, T)
        m = jnp.max(s, axis=-1, keepdims=True)
        e = jnp.exp(s - m)
        p = e * pl.reciprocal(jnp.sum(e, axis=-1, keepdims=True), approx=True)

        head_outs.append(
            jnp.dot(p.astype(jnp.bfloat16), v,
                    preferred_element_type=jnp.float32).astype(jnp.bfloat16))  # (T, hs)

    o_all = jnp.concatenate(head_outs, axis=-1)             # (T, C) bf16
    sa = jnp.dot(o_all, wproj_ref[...],
                 preferred_element_type=jnp.float32) + bproj_ref[...]          # (T, C)

    x1 = x + sa                                             # first residual (f32)

    # ---- LayerNorm 2 + FeedForward (bf16 matmuls, f32 accumulation) ----
    x2n = _layernorm(x1, ln2g_ref[...], ln2b_ref[...])
    h1 = jnp.dot(x2n.astype(jnp.bfloat16), w1_ref[...],
                 preferred_element_type=jnp.float32) + b1_ref[...]             # (T, 4C)
    h1 = jnp.maximum(h1, 0.0).astype(jnp.bfloat16)          # ReLU, then halve the buffer
    ff = jnp.dot(h1, w2_ref[...],
                 preferred_element_type=jnp.float32) + b2_ref[...]             # (T, C)

    out_ref[...] = (x1 + ff).astype(out_ref.dtype)          # second residual


def _vmem_limit_bytes():
    # Per-generation budget: ~3/4 of physical VMEM, capped at 100 MiB
    # (v5e/v6e: 128 MiB physical -> 96/100 MiB; v7x: 64 MiB -> 48 MiB).
    cap = 64 * 1024 * 1024
    try:
        cap = int(pltpu.get_tpu_info().vmem_capacity_bytes)
    except Exception:
        pass
    return min(100 * 1024 * 1024, (cap * 3) // 4)


def _weight_spec(a, single_buffer):
    # Grid-invariant full-array block (block index constant across the grid).
    idx = lambda b: (0,) * a.ndim
    if single_buffer:
        # Single-buffer: no point double-buffering a block whose index never
        # changes -- halves weight VMEM footprint.
        return pl.BlockSpec(a.shape, idx, pipeline_mode=pl.Buffered(1))
    return pl.BlockSpec(a.shape, idx)


def block_forward(x, params, *, heads: int):
    B, T, C = x.shape
    hs = C // heads
    scale = C ** (-0.5)   # matches the PyTorch spec (C**-0.5, not hs**-0.5)

    # Pack per-head (heads, C, hs) q/k/v weights into one (C, 3C) matrix with
    # head h occupying columns h*hs:(h+1)*hs of each C-wide group.  The
    # softmax scale is folded into the q columns (in f32, before the bf16
    # cast), so the kernel never scales the (T,T) score tile.
    to_cols = lambda w: jnp.transpose(w, (1, 0, 2)).reshape(C, heads * hs)
    wqkv = jnp.concatenate(
        [to_cols(params["wq"]) * scale, to_cols(params["wk"]), to_cols(params["wv"])],
        axis=1).astype(jnp.bfloat16)                        # (C, 3C)
    wproj = params["wproj"].astype(jnp.bfloat16)            # (C, C)
    w1 = params["w1"].astype(jnp.bfloat16)                  # (C, 4C)
    w2 = params["w2"].astype(jnp.bfloat16)                  # (4C, C)

    weight_args = (
        params["ln1_g"], params["ln1_b"],
        wqkv, wproj, params["bproj"],
        params["ln2_g"], params["ln2_b"],
        w1, params["b1"], w2, params["b2"],
    )

    def _call(single_buffer_weights):
        return pl.pallas_call(
            functools.partial(block_kernel, heads=heads),
            out_shape=jax.ShapeDtypeStruct((B, T, C), x.dtype),
            grid_spec=pltpu.PrefetchScalarGridSpec(
                num_scalar_prefetch=0,
                grid=(B,),
                in_specs=[pl.BlockSpec((None, T, C), lambda b: (b, 0, 0))]
                         + [_weight_spec(w, single_buffer_weights) for w in weight_args],
                out_specs=pl.BlockSpec((None, T, C), lambda b: (b, 0, 0)),
            ),
            compiler_params=pltpu.CompilerParams(
                dimension_semantics=("parallel",),
                vmem_limit_bytes=_vmem_limit_bytes()),
        )(x, *weight_args)

    try:
        return _call(True)
    except Exception:
        # Fallback for JAX builds that reject pipeline_mode=pl.Buffered(1);
        # identical semantics, just default (double) buffering of the weights.
        return _call(False)


# ------------------------- pure-JAX reference (f32) -------------------------
def block_reference(x, params, *, heads: int):
    x = x.astype(jnp.float32)
    B, T, C = x.shape
    xn = _layernorm(x, params["ln1_g"], params["ln1_b"])
    row = lax.broadcasted_iota(jnp.int32, (T, T), 0)
    col = lax.broadcasted_iota(jnp.int32, (T, T), 1)
    causal = col <= row
    outs = []
    for h in range(heads):
        q = xn @ params["wq"][h]
        k = xn @ params["wk"][h]
        v = xn @ params["wv"][h]
        wei = (q @ jnp.swapaxes(k, -1, -2)) * (C ** -0.5)
        wei = jnp.where(causal, wei, -jnp.inf)
        wei = jax.nn.softmax(wei, axis=-1)
        outs.append(wei @ v)
    sa = jnp.concatenate(outs, axis=-1) @ params["wproj"] + params["bproj"]
    x1 = x + sa
    x2n = _layernorm(x1, params["ln2_g"], params["ln2_b"])
    ff = jnp.maximum(x2n @ params["w1"] + params["b1"], 0.0) @ params["w2"] + params["b2"]
    return x1 + ff


def init_params(key, C, heads):
    hs = C // heads
    ks = jax.random.split(key, 8)
    s = 0.02
    return {
        "ln1_g": jnp.ones((1, C), jnp.float32),
        "ln1_b": jnp.zeros((1, C), jnp.float32),
        "wq": s * jax.random.normal(ks[0], (heads, C, hs), jnp.float32),
        "wk": s * jax.random.normal(ks[1], (heads, C, hs), jnp.float32),
        "wv": s * jax.random.normal(ks[2], (heads, C, hs), jnp.float32),
        "wproj": s * jax.random.normal(ks[3], (C, C), jnp.float32),
        "bproj": s * jax.random.normal(ks[4], (1, C), jnp.float32),
        "ln2_g": jnp.ones((1, C), jnp.float32),
        "ln2_b": jnp.zeros((1, C), jnp.float32),
        "w1": s * jax.random.normal(ks[5], (C, 4 * C), jnp.float32),
        "b1": s * jax.random.normal(ks[6], (1, 4 * C), jnp.float32),
        "w2": s * jax.random.normal(ks[7], (4 * C, C), jnp.float32),
        "b2": jnp.zeros((1, C), jnp.float32),
    }


if __name__ == "__main__":
    B, T, C, heads = 2, 8, 32, 4
    key = jax.random.PRNGKey(0)
    kx, kp = jax.random.split(key)
    x = jax.random.normal(kx, (B, T, C), jnp.float32)
    params = init_params(kp, C, heads)

    out = block_forward(x, params, heads=heads)
    out = jax.block_until_ready(out)

    ref = block_reference(x, params, heads=heads)
    assert out.shape == (B, T, C)
    # Kernel runs matmuls with bf16 operands (f32 accumulation); compare to
    # the pure-f32 reference with a tolerance that covers bf16 rounding.
    assert jnp.allclose(out, ref, atol=2e-2, rtol=2e-2), "mismatch vs reference"
    print("KERNEL_OK")
</pallas_src>

<mosaic_0001>
module attributes {stable_mosaic.version = 11 : i64} {
  func.func @block_kernel(%arg0: i32, %arg1: memref<1x8x32xf32, #tpu.memory_space<vmem>>, %arg2: memref<1x32xf32, #tpu.memory_space<vmem>>, %arg3: memref<1x32xf32, #tpu.memory_space<vmem>>, %arg4: memref<32x96xbf16, #tpu.memory_space<vmem>>, %arg5: memref<32x32xbf16, #tpu.memory_space<vmem>>, %arg6: memref<1x32xf32, #tpu.memory_space<vmem>>, %arg7: memref<1x32xf32, #tpu.memory_space<vmem>>, %arg8: memref<1x32xf32, #tpu.memory_space<vmem>>, %arg9: memref<32x128xbf16, #tpu.memory_space<vmem>>, %arg10: memref<1x128xf32, #tpu.memory_space<vmem>>, %arg11: memref<128x32xbf16, #tpu.memory_space<vmem>>, %arg12: memref<1x32xf32, #tpu.memory_space<vmem>>, %arg13: memref<1x8x32xf32, #tpu.memory_space<vmem>>) attributes {dimension_semantics = [#tpu.dimension_semantics<parallel>], iteration_bounds = array<i64: 2>, scalar_prefetch = 0 : i64, scratch_operands = 0 : i64, tpu.core_type = #tpu.core_type<tc>, window_params = [{transform_indices = @transform_0, window_bounds = array<i64: 1, 8, 32>}, {pipeline_mode = #tpu.pipeline_mode<synchronous>, transform_indices = @transform_1, window_bounds = array<i64: 1, 32>}, {pipeline_mode = #tpu.pipeline_mode<synchronous>, transform_indices = @transform_2, window_bounds = array<i64: 1, 32>}, {pipeline_mode = #tpu.pipeline_mode<synchronous>, transform_indices = @transform_3, window_bounds = array<i64: 32, 96>}, {pipeline_mode = #tpu.pipeline_mode<synchronous>, transform_indices = @transform_4, window_bounds = array<i64: 32, 32>}, {pipeline_mode = #tpu.pipeline_mode<synchronous>, transform_indices = @transform_5, window_bounds = array<i64: 1, 32>}, {pipeline_mode = #tpu.pipeline_mode<synchronous>, transform_indices = @transform_6, window_bounds = array<i64: 1, 32>}, {pipeline_mode = #tpu.pipeline_mode<synchronous>, transform_indices = @transform_7, window_bounds = array<i64: 1, 32>}, {pipeline_mode = #tpu.pipeline_mode<synchronous>, transform_indices = @transform_8, window_bounds = array<i64: 32, 128>}, {pipeline_mode = #tpu.pipeline_mode<synchronous>, transform_indices = @transform_9, window_bounds = array<i64: 1, 128>}, {pipeline_mode = #tpu.pipeline_mode<synchronous>, transform_indices = @transform_10, window_bounds = array<i64: 128, 32>}, {pipeline_mode = #tpu.pipeline_mode<synchronous>, transform_indices = @transform_11, window_bounds = array<i64: 1, 32>}, {transform_indices = @transform_12, window_bounds = array<i64: 1, 8, 32>}]} {
    %c0 = arith.constant 0 : index
    %c0_0 = arith.constant 0 : index
    %c0_1 = arith.constant 0 : index
    %0 = vector.load %arg1[%c0, %c0_0, %c0_1] : memref<1x8x32xf32, #tpu.memory_space<vmem>>, vector<1x8x32xf32>
    %1 = vector.shape_cast %0 : vector<1x8x32xf32> to vector<8x32xf32>
    %c0_2 = arith.constant 0 : index
    %c0_3 = arith.constant 0 : index
    %2 = vector.load %arg2[%c0_2, %c0_3] : memref<1x32xf32, #tpu.memory_space<vmem>>, vector<1x32xf32>
    %c0_4 = arith.constant 0 : index
    %c0_5 = arith.constant 0 : index
    %3 = vector.load %arg3[%c0_4, %c0_5] : memref<1x32xf32, #tpu.memory_space<vmem>>, vector<1x32xf32>
    %cst = arith.constant dense<0.000000e+00> : vector<8xf32>
    %4 = vector.multi_reduction <add>, %1, %cst [1] : vector<8x32xf32> to vector<8xf32>
    %5 = vector.shape_cast %4 : vector<8xf32> to vector<8x1xf32>
    %cst_6 = arith.constant 3.200000e+01 : f32
    %6 = vector.broadcast %cst_6 : f32 to vector<8x1xf32>
    %7 = arith.divf %5, %6 : vector<8x1xf32>
    %8 = arith.mulf %1, %1 : vector<8x32xf32>
    %cst_7 = arith.constant dense<0.000000e+00> : vector<8xf32>
    %9 = vector.multi_reduction <add>, %8, %cst_7 [1] : vector<8x32xf32> to vector<8xf32>
    %10 = vector.shape_cast %9 : vector<8xf32> to vector<8x1xf32>
    %cst_8 = arith.constant 3.200000e+01 : f32
    %11 = vector.broadcast %cst_8 : f32 to vector<8x1xf32>
    %12 = arith.divf %10, %11 : vector<8x1xf32>
    %13 = arith.mulf %7, %7 : vector<8x1xf32>
    %14 = arith.subf %12, %13 : vector<8x1xf32>
    %cst_9 = arith.constant 0.000000e+00 : f32
    %15 = vector.broadcast %cst_9 : f32 to vector<8x1xf32>
    %16 = arith.maximumf %14, %15 : vector<8x1xf32>
    %17 = vector.broadcast %7 : vector<8x1xf32> to vector<8x32xf32>
    %18 = arith.subf %1, %17 : vector<8x32xf32>
    %cst_10 = arith.constant 9.99999974E-6 : f32
    %19 = vector.broadcast %cst_10 : f32 to vector<8x1xf32>
    %20 = arith.addf %16, %19 : vector<8x1xf32>
    %21 = math.rsqrt %20 : vector<8x1xf32>
    %22 = vector.broadcast %21 : vector<8x1xf32> to vector<8x32xf32>
    %23 = arith.mulf %18, %22 : vector<8x32xf32>
    %24 = vector.broadcast %2 : vector<1x32xf32> to vector<8x32xf32>
    %25 = arith.mulf %23, %24 : vector<8x32xf32>
    %26 = vector.broadcast %3 : vector<1x32xf32> to vector<8x32xf32>
    %27 = arith.addf %25, %26 : vector<8x32xf32>
    %28 = arith.truncf %27 : vector<8x32xf32> to vector<8x32xbf16>
    %c0_11 = arith.constant 0 : index
    %c0_12 = arith.constant 0 : index
    %29 = vector.load %arg4[%c0_11, %c0_12] : memref<32x96xbf16, #tpu.memory_space<vmem>>, vector<32x96xbf16>
    %cst_13 = arith.constant dense<0.000000e+00> : vector<8x96xf32>
    %30 = tpu.matmul %28, %29, %cst_13 {dimension_numbers = #tpu.dot_dimension_numbers<[1], [0], [0], [1], [0, 0, 1, 1], [], []>} : vector<8x32xbf16>, vector<32x96xbf16>, vector<8x96xf32> -> vector<8x96xf32>
    %31 = arith.truncf %30 : vector<8x96xf32> to vector<8x96xbf16>
    %32 = tpu.iota {dimensions = array<i32: 0>} : vector<8x8xi32>
    %33 = tpu.iota {dimensions = array<i32: 1>} : vector<8x8xi32>
    %34 = arith.cmpi sle, %33, %32 : vector<8x8xi32>
    %cst_14 = arith.constant 0.000000e+00 : f32
    %cst_15 = arith.constant -1.000000e+30 : f32
    %35 = vector.broadcast %cst_14 : f32 to vector<8x8xf32>
    %36 = vector.broadcast %cst_15 : f32 to vector<8x8xf32>
    %37 = arith.select %34, %35, %36 : vector<8x8xi1>, vector<8x8xf32>
    %38 = vector.extract_strided_slice %31 {offsets = [0, 0], sizes = [8, 8], strides = [1, 1]} : vector<8x96xbf16> to vector<8x8xbf16>
    %39 = vector.extract_strided_slice %31 {offsets = [0, 32], sizes = [8, 8], strides = [1, 1]} : vector<8x96xbf16> to vector<8x8xbf16>
    %40 = vector.extract_strided_slice %31 {offsets = [0, 64], sizes = [8, 8], strides = [1, 1]} : vector<8x96xbf16> to vector<8x8xbf16>
    %cst_16 = arith.constant dense<0.000000e+00> : vector<8x8xf32>
    %41 = tpu.matmul %38, %39, %cst_16 {dimension_numbers = #tpu.dot_dimension_numbers<[1], [1], [0], [0], [0, 0, 1, 0], [], []>} : vector<8x8xbf16>, vector<8x8xbf16>, vector<8x8xf32> -> vector<8x8xf32>
    %42 = arith.addf %41, %37 : vector<8x8xf32>
    %cst_17 = arith.constant dense<0xFF800000> : vector<8xf32>
    %43 = vector.multi_reduction <maximumf>, %42, %cst_17 [1] : vector<8x8xf32> to vector<8xf32>
    %44 = vector.shape_cast %43 : vector<8xf32> to vector<8x1xf32>
    %45 = vector.broadcast %44 : vector<8x1xf32> to vector<8x8xf32>
    %46 = arith.subf %42, %45 : vector<8x8xf32>
    %47 = math.exp %46 : vector<8x8xf32>
    %cst_18 = arith.constant dense<0.000000e+00> : vector<8xf32>
    %48 = vector.multi_reduction <add>, %47, %cst_18 [1] : vector<8x8xf32> to vector<8xf32>
    %49 = vector.shape_cast %48 : vector<8xf32> to vector<8x1xf32>
    %50 = tpu.reciprocal %49 {approx = true} : vector<8x1xf32> -> vector<8x1xf32>
    %51 = vector.broadcast %50 : vector<8x1xf32> to vector<8x8xf32>
    %52 = arith.mulf %47, %51 : vector<8x8xf32>
    %53 = arith.truncf %52 : vector<8x8xf32> to vector<8x8xbf16>
    %cst_19 = arith.constant dense<0.000000e+00> : vector<8x8xf32>
    %54 = tpu.matmul %53, %40, %cst_19 {dimension_numbers = #tpu.dot_dimension_numbers<[1], [0], [0], [1], [0, 0, 1, 1], [], []>} : vector<8x8xbf16>, vector<8x8xbf16>, vector<8x8xf32> -> vector<8x8xf32>
    %55 = arith.truncf %54 : vector<8x8xf32> to vector<8x8xbf16>
    %56 = vector.extract_strided_slice %31 {offsets = [0, 8], sizes = [8, 8], strides = [1, 1]} : vector<8x96xbf16> to vector<8x8xbf16>
    %57 = vector.extract_strided_slice %31 {offsets = [0, 40], sizes = [8, 8], strides = [1, 1]} : vector<8x96xbf16> to vector<8x8xbf16>
    %58 = vector.extract_strided_slice %31 {offsets = [0, 72], sizes = [8, 8], strides = [1, 1]} : vector<8x96xbf16> to vector<8x8xbf16>
    %cst_20 = arith.constant dense<0.000000e+00> : vector<8x8xf32>
    %59 = tpu.matmul %56, %57, %cst_20 {dimension_numbers = #tpu.dot_dimension_numbers<[1], [1], [0], [0], [0, 0, 1, 0], [], []>} : vector<8x8xbf16>, vector<8x8xbf16>, vector<8x8xf32> -> vector<8x8xf32>
    %60 = arith.addf %59, %37 : vector<8x8xf32>
    %cst_21 = arith.constant dense<0xFF800000> : vector<8xf32>
    %61 = vector.multi_reduction <maximumf>, %60, %cst_21 [1] : vector<8x8xf32> to vector<8xf32>
    %62 = vector.shape_cast %61 : vector<8xf32> to vector<8x1xf32>
    %63 = vector.broadcast %62 : vector<8x1xf32> to vector<8x8xf32>
    %64 = arith.subf %60, %63 : vector<8x8xf32>
    %65 = math.exp %64 : vector<8x8xf32>
    %cst_22 = arith.constant dense<0.000000e+00> : vector<8xf32>
    %66 = vector.multi_reduction <add>, %65, %cst_22 [1] : vector<8x8xf32> to vector<8xf32>
    %67 = vector.shape_cast %66 : vector<8xf32> to vector<8x1xf32>
    %68 = tpu.reciprocal %67 {approx = true} : vector<8x1xf32> -> vector<8x1xf32>
    %69 = vector.broadcast %68 : vector<8x1xf32> to vector<8x8xf32>
    %70 = arith.mulf %65, %69 : vector<8x8xf32>
    %71 = arith.truncf %70 : vector<8x8xf32> to vector<8x8xbf16>
    %cst_23 = arith.constant dense<0.000000e+00> : vector<8x8xf32>
    %72 = tpu.matmul %71, %58, %cst_23 {dimension_numbers = #tpu.dot_dimension_numbers<[1], [0], [0], [1], [0, 0, 1, 1], [], []>} : vector<8x8xbf16>, vector<8x8xbf16>, vector<8x8xf32> -> vector<8x8xf32>
    %73 = arith.truncf %72 : vector<8x8xf32> to vector<8x8xbf16>
    %74 = vector.extract_strided_slice %31 {offsets = [0, 16], sizes = [8, 8], strides = [1, 1]} : vector<8x96xbf16> to vector<8x8xbf16>
    %75 = vector.extract_strided_slice %31 {offsets = [0, 48], sizes = [8, 8], strides = [1, 1]} : vector<8x96xbf16> to vector<8x8xbf16>
    %76 = vector.extract_strided_slice %31 {offsets = [0, 80], sizes = [8, 8], strides = [1, 1]} : vector<8x96xbf16> to vector<8x8xbf16>
    %cst_24 = arith.constant dense<0.000000e+00> : vector<8x8xf32>
    %77 = tpu.matmul %74, %75, %cst_24 {dimension_numbers = #tpu.dot_dimension_numbers<[1], [1], [0], [0], [0, 0, 1, 0], [], []>} : vector<8x8xbf16>, vector<8x8xbf16>, vector<8x8xf32> -> vector<8x8xf32>
    %78 = arith.addf %77, %37 : vector<8x8xf32>
    %cst_25 = arith.constant dense<0xFF800000> : vector<8xf32>
    %79 = vector.multi_reduction <maximumf>, %78, %cst_25 [1] : vector<8x8xf32> to vector<8xf32>
    %80 = vector.shape_cast %79 : vector<8xf32> to vector<8x1xf32>
    %81 = vector.broadcast %80 : vector<8x1xf32> to vector<8x8xf32>
    %82 = arith.subf %78, %81 : vector<8x8xf32>
    %83 = math.exp %82 : vector<8x8xf32>
    %cst_26 = arith.constant dense<0.000000e+00> : vector<8xf32>
    %84 = vector.multi_reduction <add>, %83, %cst_26 [1] : vector<8x8xf32> to vector<8xf32>
    %85 = vector.shape_cast %84 : vector<8xf32> to vector<8x1xf32>
    %86 = tpu.reciprocal %85 {approx = true} : vector<8x1xf32> -> vector<8x1xf32>
    %87 = vector.broadcast %86 : vector<8x1xf32> to vector<8x8xf32>
    %88 = arith.mulf %83, %87 : vector<8x8xf32>
    %89 = arith.truncf %88 : vector<8x8xf32> to vector<8x8xbf16>
    %cst_27 = arith.constant dense<0.000000e+00> : vector<8x8xf32>
    %90 = tpu.matmul %89, %76, %cst_27 {dimension_numbers = #tpu.dot_dimension_numbers<[1], [0], [0], [1], [0, 0, 1, 1], [], []>} : vector<8x8xbf16>, vector<8x8xbf16>, vector<8x8xf32> -> vector<8x8xf32>
    %91 = arith.truncf %90 : vector<8x8xf32> to vector<8x8xbf16>
    %92 = vector.extract_strided_slice %31 {offsets = [0, 24], sizes = [8, 8], strides = [1, 1]} : vector<8x96xbf16> to vector<8x8xbf16>
    %93 = vector.extract_strided_slice %31 {offsets = [0, 56], sizes = [8, 8], strides = [1, 1]} : vector<8x96xbf16> to vector<8x8xbf16>
    %94 = vector.extract_strided_slice %31 {offsets = [0, 88], sizes = [8, 8], strides = [1, 1]} : vector<8x96xbf16> to vector<8x8xbf16>
    %cst_28 = arith.constant dense<0.000000e+00> : vector<8x8xf32>
    %95 = tpu.matmul %92, %93, %cst_28 {dimension_numbers = #tpu.dot_dimension_numbers<[1], [1], [0], [0], [0, 0, 1, 0], [], []>} : vector<8x8xbf16>, vector<8x8xbf16>, vector<8x8xf32> -> vector<8x8xf32>
    %96 = arith.addf %95, %37 : vector<8x8xf32>
    %cst_29 = arith.constant dense<0xFF800000> : vector<8xf32>
    %97 = vector.multi_reduction <maximumf>, %96, %cst_29 [1] : vector<8x8xf32> to vector<8xf32>
    %98 = vector.shape_cast %97 : vector<8xf32> to vector<8x1xf32>
    %99 = vector.broadcast %98 : vector<8x1xf32> to vector<8x8xf32>
    %100 = arith.subf %96, %99 : vector<8x8xf32>
    %101 = math.exp %100 : vector<8x8xf32>
    %cst_30 = arith.constant dense<0.000000e+00> : vector<8xf32>
    %102 = vector.multi_reduction <add>, %101, %cst_30 [1] : vector<8x8xf32> to vector<8xf32>
    %103 = vector.shape_cast %102 : vector<8xf32> to vector<8x1xf32>
    %104 = tpu.reciprocal %103 {approx = true} : vector<8x1xf32> -> vector<8x1xf32>
    %105 = vector.broadcast %104 : vector<8x1xf32> to vector<8x8xf32>
    %106 = arith.mulf %101, %105 : vector<8x8xf32>
    %107 = arith.truncf %106 : vector<8x8xf32> to vector<8x8xbf16>
    %cst_31 = arith.constant dense<0.000000e+00> : vector<8x8xf32>
    %108 = tpu.matmul %107, %94, %cst_31 {dimension_numbers = #tpu.dot_dimension_numbers<[1], [0], [0], [1], [0, 0, 1, 1], [], []>} : vector<8x8xbf16>, vector<8x8xbf16>, vector<8x8xf32> -> vector<8x8xf32>
    %109 = arith.truncf %108 : vector<8x8xf32> to vector<8x8xbf16>
    %110 = tpu.concatenate %55, %73, %91, %109 in 1 : vector<8x8xbf16>, vector<8x8xbf16>, vector<8x8xbf16>, vector<8x8xbf16> -> vector<8x32xbf16>
    %c0_32 = arith.constant 0 : index
    %c0_33 = arith.constant 0 : index
    %111 = vector.load %arg5[%c0_32, %c0_33] : memref<32x32xbf16, #tpu.memory_space<vmem>>, vector<32x32xbf16>
    %cst_34 = arith.constant dense<0.000000e+00> : vector<8x32xf32>
    %112 = tpu.matmul %110, %111, %cst_34 {dimension_numbers = #tpu.dot_dimension_numbers<[1], [0], [0], [1], [0, 0, 1, 1], [], []>} : vector<8x32xbf16>, vector<32x32xbf16>, vector<8x32xf32> -> vector<8x32xf32>
    %c0_35 = arith.constant 0 : index
    %c0_36 = arith.constant 0 : index
    %113 = vector.load %arg6[%c0_35, %c0_36] : memref<1x32xf32, #tpu.memory_space<vmem>>, vector<1x32xf32>
    %114 = vector.broadcast %113 : vector<1x32xf32> to vector<8x32xf32>
    %115 = arith.addf %112, %114 : vector<8x32xf32>
    %116 = arith.addf %1, %115 : vector<8x32xf32>
    %c0_37 = arith.constant 0 : index
    %c0_38 = arith.constant 0 : index
    %117 = vector.load %arg7[%c0_37, %c0_38] : memref<1x32xf32, #tpu.memory_space<vmem>>, vector<1x32xf32>
    %c0_39 = arith.constant 0 : index
    %c0_40 = arith.constant 0 : index
    %118 = vector.load %arg8[%c0_39, %c0_40] : memref<1x32xf32, #tpu.memory_space<vmem>>, vector<1x32xf32>
    %cst_41 = arith.constant dense<0.000000e+00> : vector<8xf32>
    %119 = vector.multi_reduction <add>, %116, %cst_41 [1] : vector<8x32xf32> to vector<8xf32>
    %120 = vector.shape_cast %119 : vector<8xf32> to vector<8x1xf32>
    %cst_42 = arith.constant 3.200000e+01 : f32
    %121 = vector.broadcast %cst_42 : f32 to vector<8x1xf32>
    %122 = arith.divf %120, %121 : vector<8x1xf32>
    %123 = arith.mulf %116, %116 : vector<8x32xf32>
    %cst_43 = arith.constant dense<0.000000e+00> : vector<8xf32>
    %124 = vector.multi_reduction <add>, %123, %cst_43 [1] : vector<8x32xf32> to vector<8xf32>
    %125 = vector.shape_cast %124 : vector<8xf32> to vector<8x1xf32>
    %cst_44 = arith.constant 3.200000e+01 : f32
    %126 = vector.broadcast %cst_44 : f32 to vector<8x1xf32>
    %127 = arith.divf %125, %126 : vector<8x1xf32>
    %128 = arith.mulf %122, %122 : vector<8x1xf32>
    %129 = arith.subf %127, %128 : vector<8x1xf32>
    %cst_45 = arith.constant 0.000000e+00 : f32
    %130 = vector.broadcast %cst_45 : f32 to vector<8x1xf32>
    %131 = arith.maximumf %129, %130 : vector<8x1xf32>
    %132 = vector.broadcast %122 : vector<8x1xf32> to vector<8x32xf32>
    %133 = arith.subf %116, %132 : vector<8x32xf32>
    %cst_46 = arith.constant 9.99999974E-6 : f32
    %134 = vector.broadcast %cst_46 : f32 to vector<8x1xf32>
    %135 = arith.addf %131, %134 : vector<8x1xf32>
    %136 = math.rsqrt %135 : vector<8x1xf32>
    %137 = vector.broadcast %136 : vector<8x1xf32> to vector<8x32xf32>
    %138 = arith.mulf %133, %137 : vector<8x32xf32>
    %139 = vector.broadcast %117 : vector<1x32xf32> to vector<8x32xf32>
    %140 = arith.mulf %138, %139 : vector<8x32xf32>
    %141 = vector.broadcast %118 : vector<1x32xf32> to vector<8x32xf32>
    %142 = arith.addf %140, %141 : vector<8x32xf32>
    %143 = arith.truncf %142 : vector<8x32xf32> to vector<8x32xbf16>
    %c0_47 = arith.constant 0 : index
    %c0_48 = arith.constant 0 : index
    %144 = vector.load %arg9[%c0_47, %c0_48] : memref<32x128xbf16, #tpu.memory_space<vmem>>, vector<32x128xbf16>
    %cst_49 = arith.constant dense<0.000000e+00> : vector<8x128xf32>
    %145 = tpu.matmul %143, %144, %cst_49 {dimension_numbers = #tpu.dot_dimension_numbers<[1], [0], [0], [1], [0, 0, 1, 1], [], []>} : vector<8x32xbf16>, vector<32x128xbf16>, vector<8x128xf32> -> vector<8x128xf32>
    %c0_50 = arith.constant 0 : index
    %c0_51 = arith.constant 0 : index
    %146 = vector.load %arg10[%c0_50, %c0_51] : memref<1x128xf32, #tpu.memory_space<vmem>>, vector<1x128xf32>
    %147 = vector.broadcast %146 : vector<1x128xf32> to vector<8x128xf32>
    %148 = arith.addf %145, %147 : vector<8x128xf32>
    %cst_52 = arith.constant 0.000000e+00 : f32
    %149 = vector.broadcast %cst_52 : f32 to vector<8x128xf32>
    %150 = arith.maximumf %148, %149 : vector<8x128xf32>
    %151 = arith.truncf %150 : vector<8x128xf32> to vector<8x128xbf16>
    %c0_53 = arith.constant 0 : index
    %c0_54 = arith.constant 0 : index
    %152 = vector.load %arg11[%c0_53, %c0_54] : memref<128x32xbf16, #tpu.memory_space<vmem>>, vector<128x32xbf16>
    %cst_55 = arith.constant dense<0.000000e+00> : vector<8x32xf32>
    %153 = tpu.matmul %151, %152, %cst_55 {dimension_numbers = #tpu.dot_dimension_numbers<[1], [0], [0], [1], [0, 0, 1, 1], [], []>} : vector<8x128xbf16>, vector<128x32xbf16>, vector<8x32xf32> -> vector<8x32xf32>
    %c0_56 = arith.constant 0 : index
    %c0_57 = arith.constant 0 : index
    %154 = vector.load %arg12[%c0_56, %c0_57] : memref<1x32xf32, #tpu.memory_space<vmem>>, vector<1x32xf32>
    %155 = vector.broadcast %154 : vector<1x32xf32> to vector<8x32xf32>
    %156 = arith.addf %153, %155 : vector<8x32xf32>
    %157 = arith.addf %116, %156 : vector<8x32xf32>
    %c0_58 = arith.constant 0 : index
    %c0_59 = arith.constant 0 : index
    %c0_60 = arith.constant 0 : index
    %158 = vector.load %arg13[%c0_58, %c0_59, %c0_60] : memref<1x8x32xf32, #tpu.memory_space<vmem>>, vector<1x8x32xf32>
    %159 = vector.shape_cast %158 : vector<1x8x32xf32> to vector<8x32xf32>
    %160 = vector.shape_cast %157 : vector<8x32xf32> to vector<1x8x32xf32>
    tpu.vector_store %arg13[%c0_58, %c0_59, %c0_60], %160 {strides = array<i32>} : memref<1x8x32xf32, #tpu.memory_space<vmem>>, vector<1x8x32xf32>,
    return
  }
  func.func @transform_0(%arg0: i32) -> (i32, i32, i32) {
    %c0_i32 = arith.constant 0 : i32
    %c0_i32_0 = arith.constant 0 : i32
    %c0_i32_1 = arith.constant 0 : i32
    return %arg0, %c0_i32, %c0_i32_0 : i32, i32, i32
  }
  func.func @transform_1(%arg0: i32) -> (i32, i32) {
    %c0_i32 = arith.constant 0 : i32
    %c0_i32_0 = arith.constant 0 : i32
    %c0_i32_1 = arith.constant 0 : i32
    return %c0_i32, %c0_i32_0 : i32, i32
  }
  func.func @transform_2(%arg0: i32) -> (i32, i32) {
    %c0_i32 = arith.constant 0 : i32
    %c0_i32_0 = arith.constant 0 : i32
    %c0_i32_1 = arith.constant 0 : i32
    return %c0_i32, %c0_i32_0 : i32, i32
  }
  func.func @transform_3(%arg0: i32) -> (i32, i32) {
    %c0_i32 = arith.constant 0 : i32
    %c0_i32_0 = arith.constant 0 : i32
    %c0_i32_1 = arith.constant 0 : i32
    return %c0_i32, %c0_i32_0 : i32, i32
  }
  func.func @transform_4(%arg0: i32) -> (i32, i32) {
    %c0_i32 = arith.constant 0 : i32
    %c0_i32_0 = arith.constant 0 : i32
    %c0_i32_1 = arith.constant 0 : i32
    return %c0_i32, %c0_i32_0 : i32, i32
  }
  func.func @transform_5(%arg0: i32) -> (i32, i32) {
    %c0_i32 = arith.constant 0 : i32
    %c0_i32_0 = arith.constant 0 : i32
    %c0_i32_1 = arith.constant 0 : i32
    return %c0_i32, %c0_i32_0 : i32, i32
  }
  func.func @transform_6(%arg0: i32) -> (i32, i32) {
    %c0_i32 = arith.constant 0 : i32
    %c0_i32_0 = arith.constant 0 : i32
    %c0_i32_1 = arith.constant 0 : i32
    return %c0_i32, %c0_i32_0 : i32, i32
  }
  func.func @transform_7(%arg0: i32) -> (i32, i32) {
    %c0_i32 = arith.constant 0 : i32
    %c0_i32_0 = arith.constant 0 : i32
    %c0_i32_1 = arith.constant 0 : i32
    return %c0_i32, %c0_i32_0 : i32, i32
  }
  func.func @transform_8(%arg0: i32) -> (i32, i32) {
    %c0_i32 = arith.constant 0 : i32
    %c0_i32_0 = arith.constant 0 : i32
    %c0_i32_1 = arith.constant 0 : i32
    return %c0_i32, %c0_i32_0 : i32, i32
  }
  func.func @transform_9(%arg0: i32) -> (i32, i32) {
    %c0_i32 = arith.constant 0 : i32
    %c0_i32_0 = arith.constant 0 : i32
    %c0_i32_1 = arith.constant 0 : i32
    return %c0_i32, %c0_i32_0 : i32, i32
  }
  func.func @transform_10(%arg0: i32) -> (i32, i32) {
    %c0_i32 = arith.constant 0 : i32
    %c0_i32_0 = arith.constant 0 : i32
    %c0_i32_1 = arith.constant 0 : i32
    return %c0_i32, %c0_i32_0 : i32, i32
  }
  func.func @transform_11(%arg0: i32) -> (i32, i32) {
    %c0_i32 = arith.constant 0 : i32
    %c0_i32_0 = arith.constant 0 : i32
    %c0_i32_1 = arith.constant 0 : i32
    return %c0_i32, %c0_i32_0 : i32, i32
  }
  func.func @transform_12(%arg0: i32) -> (i32, i32, i32) {
    %c0_i32 = arith.constant 0 : i32
    %c0_i32_0 = arith.constant 0 : i32
    %c0_i32_1 = arith.constant 0 : i32
    return %arg0, %c0_i32, %c0_i32_0 : i32, i32, i32
  }
}

module attributes {stable_mosaic.version = 11 : i64} {
  func.func @block_kernel(%arg0: i32, %arg1: memref<1x8x32xf32, #tpu.memory_space<vmem>>, %arg2: memref<1x32xf32, #tpu.memory_space<vmem>>, %arg3: memref<1x32xf32, #tpu.memory_space<vmem>>, %arg4: memref<32x96xbf16, #tpu.memory_space<vmem>>, %arg5: memref<32x32xbf16, #tpu.memory_space<vmem>>, %arg6: memref<1x32xf32, #tpu.memory_space<vmem>>, %arg7: memref<1x32xf32, #tpu.memory_space<vmem>>, %arg8: memref<1x32xf32, #tpu.memory_space<vmem>>, %arg9: memref<32x128xbf16, #tpu.memory_space<vmem>>, %arg10: memref<1x128xf32, #tpu.memory_space<vmem>>, %arg11: memref<128x32xbf16, #tpu.memory_space<vmem>>, %arg12: memref<1x32xf32, #tpu.memory_space<vmem>>, %arg13: memref<1x8x32xf32, #tpu.memory_space<vmem>>) attributes {dimension_semantics = [#tpu.dimension_semantics<parallel>], iteration_bounds = array<i64: 2>, scalar_prefetch = 0 : i64, scratch_operands = 0 : i64, tpu.core_type = #tpu.core_type<tc>, window_params = [{transform_indices = @transform_0, window_bounds = array<i64: 1, 8, 32>}, {pipeline_mode = #tpu.pipeline_mode<synchronous>, transform_indices = @transform_1, window_bounds = array<i64: 1, 32>}, {pipeline_mode = #tpu.pipeline_mode<synchronous>, transform_indices = @transform_2, window_bounds = array<i64: 1, 32>}, {pipeline_mode = #tpu.pipeline_mode<synchronous>, transform_indices = @transform_3, window_bounds = array<i64: 32, 96>}, {pipeline_mode = #tpu.pipeline_mode<synchronous>, transform_indices = @transform_4, window_bounds = array<i64: 32, 32>}, {pipeline_mode = #tpu.pipeline_mode<synchronous>, transform_indices = @transform_5, window_bounds = array<i64: 1, 32>}, {pipeline_mode = #tpu.pipeline_mode<synchronous>, transform_indices = @transform_6, window_bounds = array<i64: 1, 32>}, {pipeline_mode = #tpu.pipeline_mode<synchronous>, transform_indices = @transform_7, window_bounds = array<i64: 1, 32>}, {pipeline_mode = #tpu.pipeline_mode<synchronous>, transform_indices = @transform_8, window_bounds = array<i64: 32, 128>}, {pipeline_mode = #tpu.pipeline_mode<synchronous>, transform_indices = @transform_9, window_bounds = array<i64: 1, 128>}, {pipeline_mode = #tpu.pipeline_mode<synchronous>, transform_indices = @transform_10, window_bounds = array<i64: 128, 32>}, {pipeline_mode = #tpu.pipeline_mode<synchronous>, transform_indices = @transform_11, window_bounds = array<i64: 1, 32>}, {transform_indices = @transform_12, window_bounds = array<i64: 1, 8, 32>}]} {
    %c0 = arith.constant 0 : index
    %c0_0 = arith.constant 0 : index
    %c0_1 = arith.constant 0 : index
    %0 = vector.load %arg1[%c0, %c0_0, %c0_1] : memref<1x8x32xf32, #tpu.memory_space<vmem>>, vector<1x8x32xf32>
    %1 = vector.shape_cast %0 : vector<1x8x32xf32> to vector<8x32xf32>
    %c0_2 = arith.constant 0 : index
    %c0_3 = arith.constant 0 : index
    %2 = vector.load %arg2[%c0_2, %c0_3] : memref<1x32xf32, #tpu.memory_space<vmem>>, vector<1x32xf32>
    %c0_4 = arith.constant 0 : index
    %c0_5 = arith.constant 0 : index
    %3 = vector.load %arg3[%c0_4, %c0_5] : memref<1x32xf32, #tpu.memory_space<vmem>>, vector<1x32xf32>
    %cst = arith.constant dense<0.000000e+00> : vector<8xf32>
    %4 = vector.multi_reduction <add>, %1, %cst [1] : vector<8x32xf32> to vector<8xf32>
    %5 = vector.shape_cast %4 : vector<8xf32> to vector<8x1xf32>
    %cst_6 = arith.constant 3.200000e+01 : f32
    %6 = vector.broadcast %cst_6 : f32 to vector<8x1xf32>
    %7 = arith.divf %5, %6 : vector<8x1xf32>
    %8 = arith.mulf %1, %1 : vector<8x32xf32>
    %cst_7 = arith.constant dense<0.000000e+00> : vector<8xf32>
    %9 = vector.multi_reduction <add>, %8, %cst_7 [1] : vector<8x32xf32> to vector<8xf32>
    %10 = vector.shape_cast %9 : vector<8xf32> to vector<8x1xf32>
    %cst_8 = arith.constant 3.200000e+01 : f32
    %11 = vector.broadcast %cst_8 : f32 to vector<8x1xf32>
    %12 = arith.divf %10, %11 : vector<8x1xf32>
    %13 = arith.mulf %7, %7 : vector<8x1xf32>
    %14 = arith.subf %12, %13 : vector<8x1xf32>
    %cst_9 = arith.constant 0.000000e+00 : f32
    %15 = vector.broadcast %cst_9 : f32 to vector<8x1xf32>
    %16 = arith.maximumf %14, %15 : vector<8x1xf32>
    %17 = vector.broadcast %7 : vector<8x1xf32> to vector<8x32xf32>
    %18 = arith.subf %1, %17 : vector<8x32xf32>
    %cst_10 = arith.constant 9.99999974E-6 : f32
    %19 = vector.broadcast %cst_10 : f32 to vector<8x1xf32>
    %20 = arith.addf %16, %19 : vector<8x1xf32>
    %21 = math.rsqrt %20 : vector<8x1xf32>
    %22 = vector.broadcast %21 : vector<8x1xf32> to vector<8x32xf32>
    %23 = arith.mulf %18, %22 : vector<8x32xf32>
    %24 = vector.broadcast %2 : vector<1x32xf32> to vector<8x32xf32>
    %25 = arith.mulf %23, %24 : vector<8x32xf32>
    %26 = vector.broadcast %3 : vector<1x32xf32> to vector<8x32xf32>
    %27 = arith.addf %25, %26 : vector<8x32xf32>
    %28 = arith.truncf %27 : vector<8x32xf32> to vector<8x32xbf16>
    %c0_11 = arith.constant 0 : index
    %c0_12 = arith.constant 0 : index
    %29 = vector.load %arg4[%c0_11, %c0_12] : memref<32x96xbf16, #tpu.memory_space<vmem>>, vector<32x96xbf16>
    %cst_13 = arith.constant dense<0.000000e+00> : vector<8x96xf32>
    %30 = tpu.matmul %28, %29, %cst_13 {dimension_numbers = #tpu.dot_dimension_numbers<[1], [0], [0], [1], [0, 0, 1, 1], [], []>} : vector<8x32xbf16>, vector<32x96xbf16>, vector<8x96xf32> -> vector<8x96xf32>
    %31 = arith.truncf %30 : vector<8x96xf32> to vector<8x96xbf16>
    %32 = tpu.iota {dimensions = array<i32: 0>} : vector<8x8xi32>
    %33 = tpu.iota {dimensions = array<i32: 1>} : vector<8x8xi32>
    %34 = arith.cmpi sle, %33, %32 : vector<8x8xi32>
    %cst_14 = arith.constant 0.000000e+00 : f32
    %cst_15 = arith.constant -1.000000e+30 : f32
    %35 = vector.broadcast %cst_14 : f32 to vector<8x8xf32>
    %36 = vector.broadcast %cst_15 : f32 to vector<8x8xf32>
    %37 = arith.select %34, %35, %36 : vector<8x8xi1>, vector<8x8xf32>
    %38 = vector.extract_strided_slice %31 {offsets = [0, 0], sizes = [8, 8], strides = [1, 1]} : vector<8x96xbf16> to vector<8x8xbf16>
    %39 = vector.extract_strided_slice %31 {offsets = [0, 32], sizes = [8, 8], strides = [1, 1]} : vector<8x96xbf16> to vector<8x8xbf16>
    %40 = vector.extract_strided_slice %31 {offsets = [0, 64], sizes = [8, 8], strides = [1, 1]} : vector<8x96xbf16> to vector<8x8xbf16>
    %cst_16 = arith.constant dense<0.000000e+00> : vector<8x8xf32>
    %41 = tpu.matmul %38, %39, %cst_16 {dimension_numbers = #tpu.dot_dimension_numbers<[1], [1], [0], [0], [0, 0, 1, 0], [], []>} : vector<8x8xbf16>, vector<8x8xbf16>, vector<8x8xf32> -> vector<8x8xf32>
    %42 = arith.addf %41, %37 : vector<8x8xf32>
    %cst_17 = arith.constant dense<0xFF800000> : vector<8xf32>
    %43 = vector.multi_reduction <maximumf>, %42, %cst_17 [1] : vector<8x8xf32> to vector<8xf32>
    %44 = vector.shape_cast %43 : vector<8xf32> to vector<8x1xf32>
    %45 = vector.broadcast %44 : vector<8x1xf32> to vector<8x8xf32>
    %46 = arith.subf %42, %45 : vector<8x8xf32>
    %47 = math.exp %46 : vector<8x8xf32>
    %cst_18 = arith.constant dense<0.000000e+00> : vector<8xf32>
    %48 = vector.multi_reduction <add>, %47, %cst_18 [1] : vector<8x8xf32> to vector<8xf32>
    %49 = vector.shape_cast %48 : vector<8xf32> to vector<8x1xf32>
    %50 = tpu.reciprocal %49 {approx = true} : vector<8x1xf32> -> vector<8x1xf32>
    %51 = vector.broadcast %50 : vector<8x1xf32> to vector<8x8xf32>
    %52 = arith.mulf %47, %51 : vector<8x8xf32>
    %53 = arith.truncf %52 : vector<8x8xf32> to vector<8x8xbf16>
    %cst_19 = arith.constant dense<0.000000e+00> : vector<8x8xf32>
    %54 = tpu.matmul %53, %40, %cst_19 {dimension_numbers = #tpu.dot_dimension_numbers<[1], [0], [0], [1], [0, 0, 1, 1], [], []>} : vector<8x8xbf16>, vector<8x8xbf16>, vector<8x8xf32> -> vector<8x8xf32>
    %55 = arith.truncf %54 : vector<8x8xf32> to vector<8x8xbf16>
    %56 = vector.extract_strided_slice %31 {offsets = [0, 8], sizes = [8, 8], strides = [1, 1]} : vector<8x96xbf16> to vector<8x8xbf16>
    %57 = vector.extract_strided_slice %31 {offsets = [0, 40], sizes = [8, 8], strides = [1, 1]} : vector<8x96xbf16> to vector<8x8xbf16>
    %58 = vector.extract_strided_slice %31 {offsets = [0, 72], sizes = [8, 8], strides = [1, 1]} : vector<8x96xbf16> to vector<8x8xbf16>
    %cst_20 = arith.constant dense<0.000000e+00> : vector<8x8xf32>
    %59 = tpu.matmul %56, %57, %cst_20 {dimension_numbers = #tpu.dot_dimension_numbers<[1], [1], [0], [0], [0, 0, 1, 0], [], []>} : vector<8x8xbf16>, vector<8x8xbf16>, vector<8x8xf32> -> vector<8x8xf32>
    %60 = arith.addf %59, %37 : vector<8x8xf32>
    %cst_21 = arith.constant dense<0xFF800000> : vector<8xf32>
    %61 = vector.multi_reduction <maximumf>, %60, %cst_21 [1] : vector<8x8xf32> to vector<8xf32>
    %62 = vector.shape_cast %61 : vector<8xf32> to vector<8x1xf32>
    %63 = vector.broadcast %62 : vector<8x1xf32> to vector<8x8xf32>
    %64 = arith.subf %60, %63 : vector<8x8xf32>
    %65 = math.exp %64 : vector<8x8xf32>
    %cst_22 = arith.constant dense<0.000000e+00> : vector<8xf32>
    %66 = vector.multi_reduction <add>, %65, %cst_22 [1] : vector<8x8xf32> to vector<8xf32>
    %67 = vector.shape_cast %66 : vector<8xf32> to vector<8x1xf32>
    %68 = tpu.reciprocal %67 {approx = true} : vector<8x1xf32> -> vector<8x1xf32>
    %69 = vector.broadcast %68 : vector<8x1xf32> to vector<8x8xf32>
    %70 = arith.mulf %65, %69 : vector<8x8xf32>
    %71 = arith.truncf %70 : vector<8x8xf32> to vector<8x8xbf16>
    %cst_23 = arith.constant dense<0.000000e+00> : vector<8x8xf32>
    %72 = tpu.matmul %71, %58, %cst_23 {dimension_numbers = #tpu.dot_dimension_numbers<[1], [0], [0], [1], [0, 0, 1, 1], [], []>} : vector<8x8xbf16>, vector<8x8xbf16>, vector<8x8xf32> -> vector<8x8xf32>
    %73 = arith.truncf %72 : vector<8x8xf32> to vector<8x8xbf16>
    %74 = vector.extract_strided_slice %31 {offsets = [0, 16], sizes = [8, 8], strides = [1, 1]} : vector<8x96xbf16> to vector<8x8xbf16>
    %75 = vector.extract_strided_slice %31 {offsets = [0, 48], sizes = [8, 8], strides = [1, 1]} : vector<8x96xbf16> to vector<8x8xbf16>
    %76 = vector.extract_strided_slice %31 {offsets = [0, 80], sizes = [8, 8], strides = [1, 1]} : vector<8x96xbf16> to vector<8x8xbf16>
    %cst_24 = arith.constant dense<0.000000e+00> : vector<8x8xf32>
    %77 = tpu.matmul %74, %75, %cst_24 {dimension_numbers = #tpu.dot_dimension_numbers<[1], [1], [0], [0], [0, 0, 1, 0], [], []>} : vector<8x8xbf16>, vector<8x8xbf16>, vector<8x8xf32> -> vector<8x8xf32>
    %78 = arith.addf %77, %37 : vector<8x8xf32>
    %cst_25 = arith.constant dense<0xFF800000> : vector<8xf32>
    %79 = vector.multi_reduction <maximumf>, %78, %cst_25 [1] : vector<8x8xf32> to vector<8xf32>
    %80 = vector.shape_cast %79 : vector<8xf32> to vector<8x1xf32>
    %81 = vector.broadcast %80 : vector<8x1xf32> to vector<8x8xf32>
    %82 = arith.subf %78, %81 : vector<8x8xf32>
    %83 = math.exp %82 : vector<8x8xf32>
    %cst_26 = arith.constant dense<0.000000e+00> : vector<8xf32>
    %84 = vector.multi_reduction <add>, %83, %cst_26 [1] : vector<8x8xf32> to vector<8xf32>
    %85 = vector.shape_cast %84 : vector<8xf32> to vector<8x1xf32>
    %86 = tpu.reciprocal %85 {approx = true} : vector<8x1xf32> -> vector<8x1xf32>
    %87 = vector.broadcast %86 : vector<8x1xf32> to vector<8x8xf32>
    %88 = arith.mulf %83, %87 : vector<8x8xf32>
    %89 = arith.truncf %88 : vector<8x8xf32> to vector<8x8xbf16>
    %cst_27 = arith.constant dense<0.000000e+00> : vector<8x8xf32>
    %90 = tpu.matmul %89, %76, %cst_27 {dimension_numbers = #tpu.dot_dimension_numbers<[1], [0], [0], [1], [0, 0, 1, 1], [], []>} : vector<8x8xbf16>, vector<8x8xbf16>, vector<8x8xf32> -> vector<8x8xf32>
    %91 = arith.truncf %90 : vector<8x8xf32> to vector<8x8xbf16>
    %92 = vector.extract_strided_slice %31 {offsets = [0, 24], sizes = [8, 8], strides = [1, 1]} : vector<8x96xbf16> to vector<8x8xbf16>
    %93 = vector.extract_strided_slice %31 {offsets = [0, 56], sizes = [8, 8], strides = [1, 1]} : vector<8x96xbf16> to vector<8x8xbf16>
    %94 = vector.extract_strided_slice %31 {offsets = [0, 88], sizes = [8, 8], strides = [1, 1]} : vector<8x96xbf16> to vector<8x8xbf16>
    %cst_28 = arith.constant dense<0.000000e+00> : vector<8x8xf32>
    %95 = tpu.matmul %92, %93, %cst_28 {dimension_numbers = #tpu.dot_dimension_numbers<[1], [1], [0], [0], [0, 0, 1, 0], [], []>} : vector<8x8xbf16>, vector<8x8xbf16>, vector<8x8xf32> -> vector<8x8xf32>
    %96 = arith.addf %95, %37 : vector<8x8xf32>
    %cst_29 = arith.constant dense<0xFF800000> : vector<8xf32>
    %97 = vector.multi_reduction <maximumf>, %96, %cst_29 [1] : vector<8x8xf32> to vector<8xf32>
    %98 = vector.shape_cast %97 : vector<8xf32> to vector<8x1xf32>
    %99 = vector.broadcast %98 : vector<8x1xf32> to vector<8x8xf32>
    %100 = arith.subf %96, %99 : vector<8x8xf32>
    %101 = math.exp %100 : vector<8x8xf32>
    %cst_30 = arith.constant dense<0.000000e+00> : vector<8xf32>
    %102 = vector.multi_reduction <add>, %101, %cst_30 [1] : vector<8x8xf32> to vector<8xf32>
    %103 = vector.shape_cast %102 : vector<8xf32> to vector<8x1xf32>
    %104 = tpu.reciprocal %103 {approx = true} : vector<8x1xf32> -> vector<8x1xf32>
    %105 = vector.broadcast %104 : vector<8x1xf32> to vector<8x8xf32>
    %106 = arith.mulf %101, %105 : vector<8x8xf32>
    %107 = arith.truncf %106 : vector<8x8xf32> to vector<8x8xbf16>
    %cst_31 = arith.constant dense<0.000000e+00> : vector<8x8xf32>
    %108 = tpu.matmul %107, %94, %cst_31 {dimension_numbers = #tpu.dot_dimension_numbers<[1], [0], [0], [1], [0, 0, 1, 1], [], []>} : vector<8x8xbf16>, vector<8x8xbf16>, vector<8x8xf32> -> vector<8x8xf32>
    %109 = arith.truncf %108 : vector<8x8xf32> to vector<8x8xbf16>
    %110 = tpu.concatenate %55, %73, %91, %109 in 1 : vector<8x8xbf16>, vector<8x8xbf16>, vector<8x8xbf16>, vector<8x8xbf16> -> vector<8x32xbf16>
    %c0_32 = arith.constant 0 : index
    %c0_33 = arith.constant 0 : index
    %111 = vector.load %arg5[%c0_32, %c0_33] : memref<32x32xbf16, #tpu.memory_space<vmem>>, vector<32x32xbf16>
    %cst_34 = arith.constant dense<0.000000e+00> : vector<8x32xf32>
    %112 = tpu.matmul %110, %111, %cst_34 {dimension_numbers = #tpu.dot_dimension_numbers<[1], [0], [0], [1], [0, 0, 1, 1], [], []>} : vector<8x32xbf16>, vector<32x32xbf16>, vector<8x32xf32> -> vector<8x32xf32>
    %c0_35 = arith.constant 0 : index
    %c0_36 = arith.constant 0 : index
    %113 = vector.load %arg6[%c0_35, %c0_36] : memref<1x32xf32, #tpu.memory_space<vmem>>, vector<1x32xf32>
    %114 = vector.broadcast %113 : vector<1x32xf32> to vector<8x32xf32>
    %115 = arith.addf %112, %114 : vector<8x32xf32>
    %116 = arith.addf %1, %115 : vector<8x32xf32>
    %c0_37 = arith.constant 0 : index
    %c0_38 = arith.constant 0 : index
    %117 = vector.load %arg7[%c0_37, %c0_38] : memref<1x32xf32, #tpu.memory_space<vmem>>, vector<1x32xf32>
    %c0_39 = arith.constant 0 : index
    %c0_40 = arith.constant 0 : index
    %118 = vector.load %arg8[%c0_39, %c0_40] : memref<1x32xf32, #tpu.memory_space<vmem>>, vector<1x32xf32>
    %cst_41 = arith.constant dense<0.000000e+00> : vector<8xf32>
    %119 = vector.multi_reduction <add>, %116, %cst_41 [1] : vector<8x32xf32> to vector<8xf32>
    %120 = vector.shape_cast %119 : vector<8xf32> to vector<8x1xf32>
    %cst_42 = arith.constant 3.200000e+01 : f32
    %121 = vector.broadcast %cst_42 : f32 to vector<8x1xf32>
    %122 = arith.divf %120, %121 : vector<8x1xf32>
    %123 = arith.mulf %116, %116 : vector<8x32xf32>
    %cst_43 = arith.constant dense<0.000000e+00> : vector<8xf32>
    %124 = vector.multi_reduction <add>, %123, %cst_43 [1] : vector<8x32xf32> to vector<8xf32>
    %125 = vector.shape_cast %124 : vector<8xf32> to vector<8x1xf32>
    %cst_44 = arith.constant 3.200000e+01 : f32
    %126 = vector.broadcast %cst_44 : f32 to vector<8x1xf32>
    %127 = arith.divf %125, %126 : vector<8x1xf32>
    %128 = arith.mulf %122, %122 : vector<8x1xf32>
    %129 = arith.subf %127, %128 : vector<8x1xf32>
    %cst_45 = arith.constant 0.000000e+00 : f32
    %130 = vector.broadcast %cst_45 : f32 to vector<8x1xf32>
    %131 = arith.maximumf %129, %130 : vector<8x1xf32>
    %132 = vector.broadcast %122 : vector<8x1xf32> to vector<8x32xf32>
    %133 = arith.subf %116, %132 : vector<8x32xf32>
    %cst_46 = arith.constant 9.99999974E-6 : f32
    %134 = vector.broadcast %cst_46 : f32 to vector<8x1xf32>
    %135 = arith.addf %131, %134 : vector<8x1xf32>
    %136 = math.rsqrt %135 : vector<8x1xf32>
    %137 = vector.broadcast %136 : vector<8x1xf32> to vector<8x32xf32>
    %138 = arith.mulf %133, %137 : vector<8x32xf32>
    %139 = vector.broadcast %117 : vector<1x32xf32> to vector<8x32xf32>
    %140 = arith.mulf %138, %139 : vector<8x32xf32>
    %141 = vector.broadcast %118 : vector<1x32xf32> to vector<8x32xf32>
    %142 = arith.addf %140, %141 : vector<8x32xf32>
    %143 = arith.truncf %142 : vector<8x32xf32> to vector<8x32xbf16>
    %c0_47 = arith.constant 0 : index
    %c0_48 = arith.constant 0 : index
    %144 = vector.load %arg9[%c0_47, %c0_48] : memref<32x128xbf16, #tpu.memory_space<vmem>>, vector<32x128xbf16>
    %cst_49 = arith.constant dense<0.000000e+00> : vector<8x128xf32>
    %145 = tpu.matmul %143, %144, %cst_49 {dimension_numbers = #tpu.dot_dimension_numbers<[1], [0], [0], [1], [0, 0, 1, 1], [], []>} : vector<8x32xbf16>, vector<32x128xbf16>, vector<8x128xf32> -> vector<8x128xf32>
    %c0_50 = arith.constant 0 : index
    %c0_51 = arith.constant 0 : index
    %146 = vector.load %arg10[%c0_50, %c0_51] : memref<1x128xf32, #tpu.memory_space<vmem>>, vector<1x128xf32>
    %147 = vector.broadcast %146 : vector<1x128xf32> to vector<8x128xf32>
    %148 = arith.addf %145, %147 : vector<8x128xf32>
    %cst_52 = arith.constant 0.000000e+00 : f32
    %149 = vector.broadcast %cst_52 : f32 to vector<8x128xf32>
    %150 = arith.maximumf %148, %149 : vector<8x128xf32>
    %151 = arith.truncf %150 : vector<8x128xf32> to vector<8x128xbf16>
    %c0_53 = arith.constant 0 : index
    %c0_54 = arith.constant 0 : index
    %152 = vector.load %arg11[%c0_53, %c0_54] : memref<128x32xbf16, #tpu.memory_space<vmem>>, vector<128x32xbf16>
    %cst_55 = arith.constant dense<0.000000e+00> : vector<8x32xf32>
    %153 = tpu.matmul %151, %152, %cst_55 {dimension_numbers = #tpu.dot_dimension_numbers<[1], [0], [0], [1], [0, 0, 1, 1], [], []>} : vector<8x128xbf16>, vector<128x32xbf16>, vector<8x32xf32> -> vector<8x32xf32>
    %c0_56 = arith.constant 0 : index
    %c0_57 = arith.constant 0 : index
    %154 = vector.load %arg12[%c0_56, %c0_57] : memref<1x32xf32, #tpu.memory_space<vmem>>, vector<1x32xf32>
    %155 = vector.broadcast %154 : vector<1x32xf32> to vector<8x32xf32>
    %156 = arith.addf %153, %155 : vector<8x32xf32>
    %157 = arith.addf %116, %156 : vector<8x32xf32>
    %c0_58 = arith.constant 0 : index
    %c0_59 = arith.constant 0 : index
    %c0_60 = arith.constant 0 : index
    %158 = vector.load %arg13[%c0_58, %c0_59, %c0_60] : memref<1x8x32xf32, #tpu.memory_space<vmem>>, vector<1x8x32xf32>
    %159 = vector.shape_cast %158 : vector<1x8x32xf32> to vector<8x32xf32>
    %160 = vector.shape_cast %157 : vector<8x32xf32> to vector<1x8x32xf32>
    tpu.vector_store %arg13[%c0_58, %c0_59, %c0_60], %160 {strides = array<i32>} : memref<1x8x32xf32, #tpu.memory_space<vmem>>, vector<1x8x32xf32>,
    return
  }
  func.func @transform_0(%arg0: i32) -> (i32, i32, i32) {
    %c0_i32 = arith.constant 0 : i32
    %c0_i32_0 = arith.constant 0 : i32
    %c0_i32_1 = arith.constant 0 : i32
    return %arg0, %c0_i32, %c0_i32_0 : i32, i32, i32
  }
  func.func @transform_1(%arg0: i32) -> (i32, i32) {
    %c0_i32 = arith.constant 0 : i32
    %c0_i32_0 = arith.constant 0 : i32
    %c0_i32_1 = arith.constant 0 : i32
    return %c0_i32, %c0_i32_0 : i32, i32
  }
  func.func @transform_2(%arg0: i32) -> (i32, i32) {
    %c0_i32 = arith.constant 0 : i32
    %c0_i32_0 = arith.constant 0 : i32
    %c0_i32_1 = arith.constant 0 : i32
    return %c0_i32, %c0_i32_0 : i32, i32
  }
  func.func @transform_3(%arg0: i32) -> (i32, i32) {
    %c0_i32 = arith.constant 0 : i32
    %c0_i32_0 = arith.constant 0 : i32
    %c0_i32_1 = arith.constant 0 : i32
    return %c0_i32, %c0_i32_0 : i32, i32
  }
  func.func @transform_4(%arg0: i32) -> (i32, i32) {
    %c0_i32 = arith.constant 0 : i32
    %c0_i32_0 = arith.constant 0 : i32
    %c0_i32_1 = arith.constant 0 : i32
    return %c0_i32, %c0_i32_0 : i32, i32
  }
  func.func @transform_5(%arg0: i32) -> (i32, i32) {
    %c0_i32 = arith.constant 0 : i32
    %c0_i32_0 = arith.constant 0 : i32
    %c0_i32_1 = arith.constant 0 : i32
    return %c0_i32, %c0_i32_0 : i32, i32
  }
  func.func @transform_6(%arg0: i32) -> (i32, i32) {
    %c0_i32 = arith.constant 0 : i32
    %c0_i32_0 = arith.constant 0 : i32
    %c0_i32_1 = arith.constant 0 : i32
    return %c0_i32, %c0_i32_0 : i32, i32
  }
  func.func @transform_7(%arg0: i32) -> (i32, i32) {
    %c0_i32 = arith.constant 0 : i32
    %c0_i32_0 = arith.constant 0 : i32
    %c0_i32_1 = arith.constant 0 : i32
    return %c0_i32, %c0_i32_0 : i32, i32
  }
  func.func @transform_8(%arg0: i32) -> (i32, i32) {
    %c0_i32 = arith.constant 0 : i32
    %c0_i32_0 = arith.constant 0 : i32
    %c0_i32_1 = arith.constant 0 : i32
    return %c0_i32, %c0_i32_0 : i32, i32
  }
  func.func @transform_9(%arg0: i32) -> (i32, i32) {
    %c0_i32 = arith.constant 0 : i32
    %c0_i32_0 = arith.constant 0 : i32
    %c0_i32_1 = arith.constant 0 : i32
    return %c0_i32, %c0_i32_0 : i32, i32
  }
  func.func @transform_10(%arg0: i32) -> (i32, i32) {
    %c0_i32 = arith.constant 0 : i32
    %c0_i32_0 = arith.constant 0 : i32
    %c0_i32_1 = arith.constant 0 : i32
    return %c0_i32, %c0_i32_0 : i32, i32
  }
  func.func @transform_11(%arg0: i32) -> (i32, i32) {
    %c0_i32 = arith.constant 0 : i32
    %c0_i32_0 = arith.constant 0 : i32
    %c0_i32_1 = arith.constant 0 : i32
    return %c0_i32, %c0_i32_0 : i32, i32
  }
  func.func @transform_12(%arg0: i32) -> (i32, i32, i32) {
    %c0_i32 = arith.constant 0 : i32
    %c0_i32_0 = arith.constant 0 : i32
    %c0_i32_1 = arith.constant 0 : i32
    return %arg0, %c0_i32, %c0_i32_0 : i32, i32, i32
  }
}

</mosaic_0001>

<llo_original>
// kernel: tpu_custom_call.1
$region0: #{tpu_custom_call.1}
  #allocation0 [shape = 'u32[]', space=smem, size = 0x4, offset = 0x4, fixed_abs, tag = 'smem constant byte address 0x4 - core index']
  #allocation1 [shape = 'u32[144,128]{1,0:T(1,128)}', space=vmem, size = 0x12000, scoped, tag = 'internal scratch']
  %s0 = inlined_call_operand.vmem [shape: f32[2,8,32], index: 0, kind: input, shape index: {}]
  %s1 = inlined_call_operand.vmem [shape: f32[1,32], index: 1, kind: input, shape index: {}]
  %s2 = inlined_call_operand.vmem [shape: f32[1,32], index: 2, kind: input, shape index: {}]
  %s3 = inlined_call_operand.vmem [shape: bf16[32,96], index: 3, kind: input, shape index: {}]
  %s4 = inlined_call_operand.vmem [shape: bf16[32,32], index: 4, kind: input, shape index: {}]
  %s5 = inlined_call_operand.vmem [shape: f32[1,32], index: 5, kind: input, shape index: {}]
  %s6 = inlined_call_operand.vmem [shape: f32[1,32], index: 6, kind: input, shape index: {}]
  %s7 = inlined_call_operand.vmem [shape: f32[1,32], index: 7, kind: input, shape index: {}]
  %s8 = inlined_call_operand.vmem [shape: bf16[32,128], index: 8, kind: input, shape index: {}]
  %s9 = inlined_call_operand.vmem [shape: f32[1,128], index: 9, kind: input, shape index: {}]
  %s10 = inlined_call_operand.vmem [shape: bf16[128,32], index: 10, kind: input, shape index: {}]
  %s11 = inlined_call_operand.vmem [shape: f32[1,32], index: 11, kind: input, shape index: {}]
  %s12 = inlined_call_operand.hbm [shape: f32[2,8,32], index: 12, kind: output, shape index: {}]
  %s13 = sld [smem:[#allocation0]]
  $region81: #{tpu_custom_call.1} parent=0
    _
  %s15 = ssub.s32 1, %s13
  %s16 = scalar_select 0, %s15, %s13
  $region1: #{tpu_custom_call.1} parent=0
    #allocation2 [shape = 'u8[8192]{0}', space=vmem, size = 0x2000, scoped, tag = 'output window, operand 0']
    #allocation3 [shape = 's32[2]{0}', space=sflag, size = 0x8, scoped, tag = 'scoped memory for tpu_custom_call.1']
    %17 = vsyncpa [#allocation3], 0
    %s18 = scalar_lea.sflag [#allocation3], 1
    %19 = vsyncpa %s18, 0
    loop: start=0, step=1, limit=4
    $region2: #{tpu_custom_call.1} parent=1 // loop_pre_header
      _
    $region3: #{tpu_custom_call.1} parent=1 // loop_header
      %s21 = sphi 0, %s25
      %p22 = scmp.ge.s32.totalorder %s21, 4
      %s31 = sphi 0, %s33
      %s34 = sphi 0, %s31
      %s35 = sphi 0, %s34
      %s51 = sphi 0, %s35
      %s55 = sphi 0, %s55
      %s57 = sphi 0, %s55
      %s58 = sphi 0, %s57
      %s72 = sphi 0, %s58
      %s76 = sphi 0, %s76
      %s78 = sphi 0, %s76
      %s79 = sphi 0, %s78
      %s93 = sphi 0, %s79
      %s97 = sphi 0, %s97
      %s99 = sphi 0, %s97
      %s100 = sphi 0, %s99
      %s114 = sphi 0, %s100
      %s118 = sphi 0, %s118
      %s120 = sphi 0, %s118
      %s121 = sphi 0, %s120
      %s135 = sphi 0, %s121
      %s139 = sphi 0, %s139
      %s141 = sphi 0, %s139
      %s142 = sphi 0, %s141
      %s156 = sphi 0, %s142
      %s160 = sphi 0, %s160
      %s162 = sphi 0, %s160
      %s163 = sphi 0, %s162
      %s177 = sphi 0, %s163
      %s181 = sphi 0, %s181
      %s183 = sphi 0, %s181
      %s184 = sphi 0, %s183
      %s198 = sphi 0, %s184
      %s202 = sphi 0, %s202
      %s204 = sphi 0, %s202
      %s205 = sphi 0, %s204
      %s219 = sphi 0, %s205
      %s223 = sphi 0, %s223
      %s225 = sphi 0, %s223
      %s226 = sphi 0, %s225
      %s240 = sphi 0, %s226
      %s244 = sphi 0, %s244
      %s246 = sphi 0, %s244
      %s247 = sphi 0, %s246
      %s261 = sphi 0, %s247
      %s265 = sphi 0, %s265
      %s267 = sphi 0, %s265
      %s268 = sphi 0, %s267
      %s282 = sphi 0, %s268
      %s288 = sphi 0, %s290
      %s291 = sphi 0, %s288
      %s292 = sphi 0, %s291
      %s308 = sphi 0, %s292
    $region4: #{tpu_custom_call.1} parent=1 // loop_header_branch
      %24 = sbr.rel (%p22) target = $region8
    $region5: #{tpu_custom_call.1} parent=1 // loop_body
      %s26 = ssub.s32 %s21, 1
      %s27 = ssub.s32 %s21, 2
      %s28 = sadd.s32 %s21, 1
      %s29 = ssub.s32 %s21, %s28
      %p30 = scmp.eq.s32.totalorder %s29, 0
      %s32 = sadd.s32 %s31, 1
      %s33 = scalar_select %p30, %s31, %s32
      %p36 = pneg %p30
      %p37 = scmp.eq.s32.totalorder %s21, 1
      %p38 = por %p36, %p37
      %p39 = scmp.ne.s32.totalorder %s31, %s34
      %p40 = scmp.eq.s32.totalorder %s21, 0
      %p41 = por %p39, %p40
      %p42 = scmp.ne.s32.totalorder %s31, %s34
      %p43 = scmp.eq.s32.totalorder %s26, 1
      %p44 = por %p42, %p43
      %p45 = scmp.ne.s32.totalorder %s34, %s35
      %p46 = scmp.eq.s32.totalorder %s26, 0
      %p47 = por %p45, %p46
      %p48 = scmp.ne.s32.totalorder %s34, %s35
      %p49 = scmp.eq.s32.totalorder %s27, 1
      %p50 = por %p48, %p49
      %p52 = scmp.ne.s32.totalorder %s35, %s51
      %p53 = scmp.eq.s32.totalorder %s27, 0
      %p54 = por %p52, %p53
      %s56 = sadd.s32 %s55, 1
      %p59 = scmp.eq.s32.totalorder %s21, 1
      %p60 = scmp.ne.s32.totalorder %s55, %s57
      %p61 = scmp.eq.s32.totalorder %s21, 0
      %p62 = por %p60, %p61
      %p63 = scmp.ne.s32.totalorder %s55, %s57
      %p64 = scmp.eq.s32.totalorder %s26, 1
      %p65 = por %p63, %p64
      %p66 = scmp.ne.s32.totalorder %s57, %s58
      %p67 = scmp.eq.s32.totalorder %s26, 0
      %p68 = por %p66, %p67
      %p69 = scmp.ne.s32.totalorder %s57, %s58
      %p70 = scmp.eq.s32.totalorder %s27, 1
      %p71 = por %p69, %p70
      %p73 = scmp.ne.s32.totalorder %s58, %s72
      %p74 = scmp.eq.s32.totalorder %s27, 0
      %p75 = por %p73, %p74
      %s77 = sadd.s32 %s76, 1
      %p80 = scmp.eq.s32.totalorder %s21, 1
      %p81 = scmp.ne.s32.totalorder %s76, %s78
      %p82 = scmp.eq.s32.totalorder %s21, 0
      %p83 = por %p81, %p82
      %p84 = scmp.ne.s32.totalorder %s76, %s78
      %p85 = scmp.eq.s32.totalorder %s26, 1
      %p86 = por %p84, %p85
      %p87 = scmp.ne.s32.totalorder %s78, %s79
      %p88 = scmp.eq.s32.totalorder %s26, 0
      %p89 = por %p87, %p88
      %p90 = scmp.ne.s32.totalorder %s78, %s79
      %p91 = scmp.eq.s32.totalorder %s27, 1
      %p92 = por %p90, %p91
      %p94 = scmp.ne.s32.totalorder %s79, %s93
      %p95 = scmp.eq.s32.totalorder %s27, 0
      %p96 = por %p94, %p95
      %s98 = sadd.s32 %s97, 1
      %p101 = scmp.eq.s32.totalorder %s21, 1
      %p102 = scmp.ne.s32.totalorder %s97, %s99
      %p103 = scmp.eq.s32.totalorder %s21, 0
      %p104 = por %p102, %p103
      %p105 = scmp.ne.s32.totalorder %s97, %s99
      %p106 = scmp.eq.s32.totalorder %s26, 1
      %p107 = por %p105, %p106
      %p108 = scmp.ne.s32.totalorder %s99, %s100
      %p109 = scmp.eq.s32.totalorder %s26, 0
      %p110 = por %p108, %p109
      %p111 = scmp.ne.s32.totalorder %s99, %s100
      %p112 = scmp.eq.s32.totalorder %s27, 1
      %p113 = por %p111, %p112
      %p115 = scmp.ne.s32.totalorder %s100, %s114
      %p116 = scmp.eq.s32.totalorder %s27, 0
      %p117 = por %p115, %p116
      %s119 = sadd.s32 %s118, 1
      %p122 = scmp.eq.s32.totalorder %s21, 1
      %p123 = scmp.ne.s32.totalorder %s118, %s120
      %p124 = scmp.eq.s32.totalorder %s21, 0
      %p125 = por %p123, %p124
      %p126 = scmp.ne.s32.totalorder %s118, %s120
      %p127 = scmp.eq.s32.totalorder %s26, 1
      %p128 = por %p126, %p127
      %p129 = scmp.ne.s32.totalorder %s120, %s121
      %p130 = scmp.eq.s32.totalorder %s26, 0
      %p131 = por %p129, %p130
      %p132 = scmp.ne.s32.totalorder %s120, %s121
      %p133 = scmp.eq.s32.totalorder %s27, 1
      %p134 = por %p132, %p133
      %p136 = scmp.ne.s32.totalorder %s121, %s135
      %p137 = scmp.eq.s32.totalorder %s27, 0
      %p138 = por %p136, %p137
      %s140 = sadd.s32 %s139, 1
      %p143 = scmp.eq.s32.totalorder %s21, 1
      %p144 = scmp.ne.s32.totalorder %s139, %s141
      %p145 = scmp.eq.s32.totalorder %s21, 0
      %p146 = por %p144, %p145
      %p147 = scmp.ne.s32.totalorder %s139, %s141
      %p148 = scmp.eq.s32.totalorder %s26, 1
      %p149 = por %p147, %p148
      %p150 = scmp.ne.s32.totalorder %s141, %s142
      %p151 = scmp.eq.s32.totalorder %s26, 0
      %p152 = por %p150, %p151
      %p153 = scmp.ne.s32.totalorder %s141, %s142
      %p154 = scmp.eq.s32.totalorder %s27, 1
      %p155 = por %p153, %p154
      %p157 = scmp.ne.s32.totalorder %s142, %s156
      %p158 = scmp.eq.s32.totalorder %s27, 0
      %p159 = por %p157, %p158
      %s161 = sadd.s32 %s160, 1
      %p164 = scmp.eq.s32.totalorder %s21, 1
      %p165 = scmp.ne.s32.totalorder %s160, %s162
      %p166 = scmp.eq.s32.totalorder %s21, 0
      %p167 = por %p165, %p166
      %p168 = scmp.ne.s32.totalorder %s160, %s162
      %p169 = scmp.eq.s32.totalorder %s26, 1
      %p170 = por %p168, %p169
      %p171 = scmp.ne.s32.totalorder %s162, %s163
      %p172 = scmp.eq.s32.totalorder %s26, 0
      %p173 = por %p171, %p172
      %p174 = scmp.ne.s32.totalorder %s162, %s163
      %p175 = scmp.eq.s32.totalorder %s27, 1
      %p176 = por %p174, %p175
      %p178 = scmp.ne.s32.totalorder %s163, %s177
      %p179 = scmp.eq.s32.totalorder %s27, 0
      %p180 = por %p178, %p179
      %s182 = sadd.s32 %s181, 1
      %p185 = scmp.eq.s32.totalorder %s21, 1
      %p186 = scmp.ne.s32.totalorder %s181, %s183
      %p187 = scmp.eq.s32.totalorder %s21, 0
      %p188 = por %p186, %p187
      %p189 = scmp.ne.s32.totalorder %s181, %s183
      %p190 = scmp.eq.s32.totalorder %s26, 1
      %p191 = por %p189, %p190
      %p192 = scmp.ne.s32.totalorder %s183, %s184
      %p193 = scmp.eq.s32.totalorder %s26, 0
      %p194 = por %p192, %p193
      %p195 = scmp.ne.s32.totalorder %s183, %s184
      %p196 = scmp.eq.s32.totalorder %s27, 1
      %p197 = por %p195, %p196
      %p199 = scmp.ne.s32.totalorder %s184, %s198
      %p200 = scmp.eq.s32.totalorder %s27, 0
      %p201 = por %p199, %p200
      %s203 = sadd.s32 %s202, 1
      %p206 = scmp.eq.s32.totalorder %s21, 1
      %p207 = scmp.ne.s32.totalorder %s202, %s204
      %p208 = scmp.eq.s32.totalorder %s21, 0
      %p209 = por %p207, %p208
      %p210 = scmp.ne.s32.totalorder %s202, %s204
      %p211 = scmp.eq.s32.totalorder %s26, 1
      %p212 = por %p210, %p211
      %p213 = scmp.ne.s32.totalorder %s204, %s205
      %p214 = scmp.eq.s32.totalorder %s26, 0
      %p215 = por %p213, %p214
      %p216 = scmp.ne.s32.totalorder %s204, %s205
      %p217 = scmp.eq.s32.totalorder %s27, 1
      %p218 = por %p216, %p217
      %p220 = scmp.ne.s32.totalorder %s205, %s219
      %p221 = scmp.eq.s32.totalorder %s27, 0
      %p222 = por %p220, %p221
      %s224 = sadd.s32 %s223, 1
      %p227 = scmp.eq.s32.totalorder %s21, 1
      %p228 = scmp.ne.s32.totalorder %s223, %s225
      %p229 = scmp.eq.s32.totalorder %s21, 0
      %p230 = por %p228, %p229
      %p231 = scmp.ne.s32.totalorder %s223, %s225
      %p232 = scmp.eq.s32.totalorder %s26, 1
      %p233 = por %p231, %p232
      %p234 = scmp.ne.s32.totalorder %s225, %s226
      %p235 = scmp.eq.s32.totalorder %s26, 0
      %p236 = por %p234, %p235
      %p237 = scmp.ne.s32.totalorder %s225, %s226
      %p238 = scmp.eq.s32.totalorder %s27, 1
      %p239 = por %p237, %p238
      %p241 = scmp.ne.s32.totalorder %s226, %s240
      %p242 = scmp.eq.s32.totalorder %s27, 0
      %p243 = por %p241, %p242
      %s245 = sadd.s32 %s244, 1
      %p248 = scmp.eq.s32.totalorder %s21, 1
      %p249 = scmp.ne.s32.totalorder %s244, %s246
      %p250 = scmp.eq.s32.totalorder %s21, 0
      %p251 = por %p249, %p250
      %p252 = scmp.ne.s32.totalorder %s244, %s246
      %p253 = scmp.eq.s32.totalorder %s26, 1
      %p254 = por %p252, %p253
      %p255 = scmp.ne.s32.totalorder %s246, %s247
      %p256 = scmp.eq.s32.totalorder %s26, 0
      %p257 = por %p255, %p256
      %p258 = scmp.ne.s32.totalorder %s246, %s247
      %p259 = scmp.eq.s32.totalorder %s27, 1
      %p260 = por %p258, %p259
      %p262 = scmp.ne.s32.totalorder %s247, %s261
      %p263 = scmp.eq.s32.totalorder %s27, 0
      %p264 = por %p262, %p263
      %s266 = sadd.s32 %s265, 1
      %p269 = scmp.eq.s32.totalorder %s21, 1
      %p270 = scmp.ne.s32.totalorder %s265, %s267
      %p271 = scmp.eq.s32.totalorder %s21, 0
      %p272 = por %p270, %p271
      %p273 = scmp.ne.s32.totalorder %s265, %s267
      %p274 = scmp.eq.s32.totalorder %s26, 1
      %p275 = por %p273, %p274
      %p276 = scmp.ne.s32.totalorder %s267, %s268
      %p277 = scmp.eq.s32.totalorder %s26, 0
      %p278 = por %p276, %p277
      %p279 = scmp.ne.s32.totalorder %s267, %s268
      %p280 = scmp.eq.s32.totalorder %s27, 1
      %p281 = por %p279, %p280
      %p283 = scmp.ne.s32.totalorder %s268, %s282
      %p284 = scmp.eq.s32.totalorder %s27, 0
      %p285 = por %p283, %p284
      %s286 = ssub.s32 %s21, %s28
      %p287 = scmp.eq.s32.totalorder %s286, 0
      %s289 = sadd.s32 %s288, 1
      %s290 = scalar_select %p287, %s288, %s289
      %p293 = pneg %p287
      %p294 = scmp.eq.s32.totalorder %s21, 1
      %p295 = por %p293, %p294
      %p296 = scmp.ne.s32.totalorder %s288, %s291
      %p297 = scmp.eq.s32.totalorder %s21, 0
      %p298 = por %p296, %p297
      %p299 = scmp.ne.s32.totalorder %s288, %s291
      %p300 = scmp.eq.s32.totalorder %s26, 1
      %p301 = por %p299, %p300
      %p302 = scmp.ne.s32.totalorder %s291, %s292
      %p303 = scmp.eq.s32.totalorder %s26, 0
      %p304 = por %p302, %p303
      %p305 = scmp.ne.s32.totalorder %s291, %s292
      %p306 = scmp.eq.s32.totalorder %s27, 1
      %p307 = por %p305, %p306
      %p309 = scmp.ne.s32.totalorder %s292, %s308
      %p310 = scmp.eq.s32.totalorder %s27, 0
      %p311 = por %p309, %p310
      %p312 = scmp.le.s32.totalorder 1, %s21
      %p313 = scmp.lt.s32.totalorder %s21, 3
      %p314 = pnand %p312, %p313
      %p315 = pneg %p314
      // Predicated region
      $region9: #{tpu_custom_call.1} parent=5 // pred_check
        _
      $region10: #{tpu_custom_call.1} parent=5 // pred_check_branch
        %317 = sbr.rel (%p314) target = $region12
      $region11: #{tpu_custom_call.1} parent=5 // pred_region
        %s318 = ssub.s32 %s21, 1
        // Predicated region
        $region13: #{tpu_custom_call.1} parent=11 // pred_check
          %p319 = pneg %p68
        $region14: #{tpu_custom_call.1} parent=11 // pred_check_branch
          %321 = sbr.rel (%p319) target = $region16
        $region15: #{tpu_custom_call.1} parent=11 // pred_region
          _
        $region16: #{tpu_custom_call.1} parent=11 // pred_fallthru
          _
        // Predicated region
        $region17: #{tpu_custom_call.1} parent=11 // pred_check
          %p322 = pneg %p89
        $region18: #{tpu_custom_call.1} parent=11 // pred_check_branch
          %324 = sbr.rel (%p322) target = $region20
        $region19: #{tpu_custom_call.1} parent=11 // pred_region
          _
        $region20: #{tpu_custom_call.1} parent=11 // pred_fallthru
          _
        // Predicated region
        $region21: #{tpu_custom_call.1} parent=11 // pred_check
          %p325 = pneg %p110
        $region22: #{tpu_custom_call.1} parent=11 // pred_check_branch
          %327 = sbr.rel (%p325) target = $region24
        $region23: #{tpu_custom_call.1} parent=11 // pred_region
          _
        $region24: #{tpu_custom_call.1} parent=11 // pred_fallthru
          _
        // Predicated region
        $region25: #{tpu_custom_call.1} parent=11 // pred_check
          %p328 = pneg %p131
        $region26: #{tpu_custom_call.1} parent=11 // pred_check_branch
          %330 = sbr.rel (%p328) target = $region28
        $region27: #{tpu_custom_call.1} parent=11 // pred_region
          _
        $region28: #{tpu_custom_call.1} parent=11 // pred_fallthru
          _
        // Predicated region
        $region29: #{tpu_custom_call.1} parent=11 // pred_check
          %p331 = pneg %p152
        $region30: #{tpu_custom_call.1} parent=11 // pred_check_branch
          %333 = sbr.rel (%p331) target = $region32
        $region31: #{tpu_custom_call.1} parent=11 // pred_region
          _
        $region32: #{tpu_custom_call.1} parent=11 // pred_fallthru
          _
        // Predicated region
        $region33: #{tpu_custom_call.1} parent=11 // pred_check
          %p334 = pneg %p173
        $region34: #{tpu_custom_call.1} parent=11 // pred_check_branch
          %336 = sbr.rel (%p334) target = $region36
        $region35: #{tpu_custom_call.1} parent=11 // pred_region
          _
        $region36: #{tpu_custom_call.1} parent=11 // pred_fallthru
          _
        // Predicated region
        $region37: #{tpu_custom_call.1} parent=11 // pred_check
          %p337 = pneg %p194
        $region38: #{tpu_custom_call.1} parent=11 // pred_check_branch
          %339 = sbr.rel (%p337) target = $region40
        $region39: #{tpu_custom_call.1} parent=11 // pred_region
          _
        $region40: #{tpu_custom_call.1} parent=11 // pred_fallthru
          _
        // Predicated region
        $region41: #{tpu_custom_call.1} parent=11 // pred_check
          %p340 = pneg %p215
        $region42: #{tpu_custom_call.1} parent=11 // pred_check_branch
          %342 = sbr.rel (%p340) target = $region44
        $region43: #{tpu_custom_call.1} parent=11 // pred_region
          _
        $region44: #{tpu_custom_call.1} parent=11 // pred_fallthru
          _
        // Predicated region
        $region45: #{tpu_custom_call.1} parent=11 // pred_check
          %p343 = pneg %p236
        $region46: #{tpu_custom_call.1} parent=11 // pred_check_branch
          %345 = sbr.rel (%p343) target = $region48
        $region47: #{tpu_custom_call.1} parent=11 // pred_region
          _
        $region48: #{tpu_custom_call.1} parent=11 // pred_fallthru
          _
        // Predicated region
        $region49: #{tpu_custom_call.1} parent=11 // pred_check
          %p346 = pneg %p257
        $region50: #{tpu_custom_call.1} parent=11 // pred_check_branch
          %348 = sbr.rel (%p346) target = $region52
        $region51: #{tpu_custom_call.1} parent=11 // pred_region
          _
        $region52: #{tpu_custom_call.1} parent=11 // pred_fallthru
          _
        // Predicated region
        $region53: #{tpu_custom_call.1} parent=11 // pred_check
          %p349 = pneg %p278
        $region54: #{tpu_custom_call.1} parent=11 // pred_check_branch
          %351 = sbr.rel (%p349) target = $region56
        $region55: #{tpu_custom_call.1} parent=11 // pred_region
          _
        $region56: #{tpu_custom_call.1} parent=11 // pred_fallthru
          _
      $region12: #{tpu_custom_call.1} parent=5 // pred_fallthru
        _
      %p352 = scmp.lt.s32.totalorder %s21, 2
      // Predicated region
      $region57: #{tpu_custom_call.1} parent=5 // pred_check
        %p353 = pneg %p352
      $region58: #{tpu_custom_call.1} parent=5 // pred_check_branch
        %355 = sbr.rel (%p353) target = $region60
      $region59: #{tpu_custom_call.1} parent=5 // pred_region
        // Predicated region
        $region61: #{tpu_custom_call.1} parent=59 // pred_check
          %p356 = pneg %p41
        $region62: #{tpu_custom_call.1} parent=59 // pred_check_branch
          %358 = sbr.rel (%p356) target = $region64
        $region63: #{tpu_custom_call.1} parent=59 // pred_region
          %p359 = scmp.lt.s32.totalorder %s21, 1
          %s360 = scalar_select %p359, %s21, 1
          %s361 = smul.addr %s360, 8
          %s362 = scalar_lea.vmem %s0, %s361
        $region64: #{tpu_custom_call.1} parent=59 // pred_fallthru
          _
      $region60: #{tpu_custom_call.1} parent=5 // pred_fallthru
        _
      %p363 = scmp.le.s32.totalorder 1, %s21
      %p364 = scmp.lt.s32.totalorder %s21, 3
      %p365 = pnand %p363, %p364
      %p366 = pneg %p365
      // Predicated region
      $region65: #{tpu_custom_call.1} parent=5 // pred_check
        _
      $region66: #{tpu_custom_call.1} parent=5 // pred_check_branch
        %368 = sbr.rel (%p365) target = $region68
      $region67: #{tpu_custom_call.1} parent=5 // pred_region
        %s369 = ssub.s32 %s21, 1
        %p370 = scmp.lt.s32.totalorder %s26, 1
        %s371 = scalar_select %p370, %s26, 1
        %s372 = smul.addr %s371, 8
        %s373 = scalar_lea.vmem %s0, %s372
        %p374 = pneg %p47
        %p375 = pneg %p44
        %p376 = pneg %p68
        %p377 = pneg %p65
        %p378 = pneg %p89
        %p379 = pneg %p86
        %p380 = pneg %p110
        %p381 = pneg %p107
        %p382 = pneg %p131
        %p383 = pneg %p128
        %p384 = pneg %p152
        %p385 = pneg %p149
        %p386 = pneg %p173
        %p387 = pneg %p170
        %p388 = pneg %p194
        %p389 = pneg %p191
        %p390 = pneg %p215
        %p391 = pneg %p212
        %p392 = pneg %p236
        %p393 = pneg %p233
        %p394 = pneg %p257
        %p395 = pneg %p254
        %p396 = pneg %p278
        %p397 = pneg %p275
        %p398 = pneg %p304
        %p399 = pneg %p301
        %s400 = sand.u32 %s291, 1
        %s401 = scalar_lea.sflag [#allocation3], %s400
        %s402 = sand.u32 %s291, 1
        %s403 = smul.addr %s402, 8
        %s404 = scalar_lea.vmem [#allocation2], %s403
        %p405 = scmp.lt.s32.totalorder %s26, 1
        %s406 = scalar_select %p405, %s26, 1
        %s407 = smul.addr %s406, 8
        %s408 = scalar_lea.vmem %s0, %s407
        %v410 = vld [vmem:[%s408] sm:$0xff]
        %v411 = vld [vmem:[%s1] sm:$0x1]
        %v412 = vld [vmem:[%s2] sm:$0x1]
        %vm413 = vcmask 261120
        %v414 = vsel %vm413, %v410, 0.0
        %415 = vadd.xlane.f32.xlu0 %v414
        %v416 = vpop.xlane.xlu0 %415
        %v417 = vrcp.pop 32.0
        %v418 = vmul.f32 %v416, %v417
        %v419 = vmul.f32 %v410, %v410
        %v420 = vsel %vm413, %v419, 0.0
        %421 = vadd.xlane.f32.xlu0 %v420
        %v422 = vpop.xlane.xlu0 %421
        %v423 = vmul.f32 %v422, %v417
        %v424 = vmul.f32 %v418, %v418
        %v425 = vsub.f32 %v423, %v424
        %v426 = vmax.f32 %v425, 0.0
        %v427 = vsub.f32 %v410, %v418
        %v428 = vadd.f32 %v426, 1e-05
        %v429 = vrsqrt.pop %v428
        %v430 = vmul.f32 %v427, %v429
        %v432 = vlaneseq
        %v433 = vshrl.u32 %v432, 7
        %v434 = vsub.s32 0, %v433
        %v435 = vrot.slane %v411, %v434
        %v437 = vmul.f32 %v430, %v435
        %v439 = vlaneseq
        %v440 = vshrl.u32 %v439, 7
        %v441 = vsub.s32 0, %v440
        %v442 = vrot.slane %v412, %v441
        %v444 = vadd.f32 %v437, %v442
        %v445 = vpack.c.bf16 %v444, %v444
        %v446 = vld [vmem:[%s3] sm:$0xf]
        %v447 = vld [vmem:[%s3 + $0x4] sm:$0xf]
        %v448 = vld [vmem:[%s3 + $0x8] sm:$0xf]
        %v449 = vld [vmem:[%s3 + $0xc] sm:$0xf]
        %v454 = vunpack.c.l.b16 %v446
        %v455 = vunpack.c.l.b16 %v447
        %v456 = vunpack.c.l.b16 %v448
        %v457 = vunpack.c.l.b16 %v449
        %v458 = vpack.c.b16 %v455, %v454
        %v459 = vpack.c.b16 %v457, %v456
        %v463 = vsel %vm413, %v445, 0
        %465 = vmatprep.subr.bf16.mxu0 0
        %466 = vmatpush1.bf16.msra.mxu0 0
        %467 = vmatprep.subr.bf16.mxu0 0
        %468 = vmatpush1.bf16.msra.mxu0 0
        %469 = vmatprep.subr.bf16.mxu0 0
        %470 = vmatpush1.bf16.msra.mxu0 0
        %471 = vmatprep.subr.bf16.mxu0 0
        %472 = vmatpush1.bf16.msra.mxu0 0
        %473 = vmatprep.subr.bf16.mxu0 0
        %474 = vmatpush1.bf16.msra.mxu0 0
        %475 = vmatprep.subr.bf16.mxu0 0
        %476 = vmatpush1.bf16.msra.mxu0 0
        %477 = vmatprep.subr.bf16.mxu0 0
        %478 = vmatpush1.bf16.msra.mxu0 %v459
        %479 = vmatprep.subr.bf16.mxu0 0
        %480 = vmatpush1.bf16.msra.mxu0 %v458
        %481 = vmatprep.subr.bf16.mxu0 0
        %482 = vmatpush2.bf16.msra.mxu0 0
        %483 = vmatprep.subr.bf16.mxu0 0
        %484 = vmatpush2.bf16.msra.mxu0 0
        %485 = vmatprep.subr.bf16.mxu0 0
        %486 = vmatpush2.bf16.msra.mxu0 0
        %487 = vmatprep.subr.bf16.mxu0 0
        %488 = vmatpush2.bf16.msra.mxu0 0
        %489 = vmatprep.subr.bf16.mxu0 0
        %490 = vmatpush2.bf16.msra.mxu0 0
        %491 = vmatprep.subr.bf16.mxu0 0
        %492 = vmatpush2.bf16.msra.mxu0 0
        %493 = vmatprep.subr.bf16.mxu0 0
        %494 = vmatpush2.bf16.msra.mxu0 0
        %495 = vmatprep.subr.bf16.mxu0 0
        %496 = vmatpush2.bf16.msra.mxu0 0
        %497 = vmatprep.mubr.bf16.mxu0 0
        %498 = vmatmul.mubr.bf16.gmra.mxu0 %v463
        %v499 = vpop.f32.mrf.mxu0
        %v500 = vadd.f32 0.0, %v499
        %v501 = vpop.f32.mrf.mxu0
        %v502 = vpop.f32.mrf.mxu0
        %v503 = vpop.f32.mrf.mxu0
        %504 = vdwg.mxu0
        %v505 = vpack.c.bf16 %v500, %v500
        %v506 = vlaneseq
        %v507 = vshrl.u32 %v506, 7
        %v508 = vlaneseq
        %v509 = vand.u32 %v508, 127
        %vm510 = vcmp.le.s32.totalorder %v509, %v507
        %v511 = vsel %vm510, 0.0, -1e+30
        %513 = vrot.lane.b32.xlu0 %v505, 96
        %v514 = vpop.permute.xlu0 %513
        %vm515 = vcmask 64512
        %v517 = vsel %vm515, %v505, 0
        %v520 = vsel %vm515, %v514, 0
        %522 = vmatprep.subr.bf16.mxu0 0
        %523 = vmatpush1.bf16.xpose.msra.mxu0 0
        %524 = vmatprep.subr.bf16.mxu0 0
        %525 = vmatpush1.bf16.xpose.msra.mxu0 0
        %526 = vmatprep.subr.bf16.mxu0 0
        %527 = vmatpush1.bf16.xpose.msra.mxu0 0
        %528 = vmatprep.subr.bf16.mxu0 0
        %529 = vmatpush1.bf16.xpose.msra.mxu0 0
        %530 = vmatprep.subr.bf16.mxu0 0
        %531 = vmatpush1.bf16.xpose.msra.mxu0 0
        %532 = vmatprep.subr.bf16.mxu0 0
        %533 = vmatpush1.bf16.xpose.msra.mxu0 0
        %534 = vmatprep.subr.bf16.mxu0 0
        %535 = vmatpush1.bf16.xpose.msra.mxu0 0
        %536 = vmatprep.subr.bf16.mxu0 0
        %537 = vmatpush1.bf16.xpose.msra.mxu0 %v520
        %538 = vmatprep.subr.bf16.mxu0 0
        %539 = vmatpush2.bf16.xpose.msra.mxu0 0
        %540 = vmatprep.subr.bf16.mxu0 0
        %541 = vmatpush2.bf16.xpose.msra.mxu0 0
        %542 = vmatprep.subr.bf16.mxu0 0
        %543 = vmatpush2.bf16.xpose.msra.mxu0 0
        %544 = vmatprep.subr.bf16.mxu0 0
        %545 = vmatpush2.bf16.xpose.msra.mxu0 0
        %546 = vmatprep.subr.bf16.mxu0 0
        %547 = vmatpush2.bf16.xpose.msra.mxu0 0
        %548 = vmatprep.subr.bf16.mxu0 0
        %549 = vmatpush2.bf16.xpose.msra.mxu0 0
        %550 = vmatprep.subr.bf16.mxu0 0
        %551 = vmatpush2.bf16.xpose.msra.mxu0 0
        %552 = vmatprep.subr.bf16.mxu0 0
        %553 = vmatpush2.bf16.xpose.msra.mxu0 0
        %554 = vmatprep.mubr.bf16.mxu0 0
        %555 = vmatmul.mubr.bf16.gmra.mxu0 %v517
        %v556 = vpop.f32.mrf.mxu0
        %v557 = vadd.f32 %v511, %v556
        %v558 = vpop.f32.mrf.mxu0
        %v559 = vpop.f32.mrf.mxu0
        %v560 = vpop.f32.mrf.mxu0
        %561 = vdwg.mxu0
        %v562 = vsel %vm515, %v557, -inf
        %563 = vmax.xlane.f32.xlu0 %v562
        %v564 = vpop.xlane.xlu0 %563
        %v565 = vsub.f32 %v557, %v564
        %v566 = vmul.f32 %v565, 1.442695
        %v567 = vpow.pop %v566
        %v568 = vsel %vm515, %v567, 0.0
        %569 = vadd.xlane.f32.xlu0 %v568
        %v570 = vpop.xlane.xlu0 %569
        %v571 = vrcp.pop %v570
        %v572 = vmul.f32 %v567, %v571
        %v573 = vpack.c.bf16 %v572, %v572
        %574 = vrot.lane.b32.xlu0 %v505, 64
        %v575 = vpop.permute.xlu0 %574
        %v577 = vsel %vm515, %v573, 0
        %vm579 = vcmask 1043456
        %v581 = vsel %vm579, %v575, 0
        %583 = vmatprep.subr.bf16.mxu0 0
        %584 = vmatpush1.bf16.msra.mxu0 0
        %585 = vmatprep.subr.bf16.mxu0 0
        %586 = vmatpush1.bf16.msra.mxu0 0
        %587 = vmatprep.subr.bf16.mxu0 0
        %588 = vmatpush1.bf16.msra.mxu0 0
        %589 = vmatprep.subr.bf16.mxu0 0
        %590 = vmatpush1.bf16.msra.mxu0 0
        %591 = vmatprep.subr.bf16.mxu0 0
        %592 = vmatpush1.bf16.msra.mxu0 0
        %593 = vmatprep.subr.bf16.mxu0 0
        %594 = vmatpush1.bf16.msra.mxu0 0
        %595 = vmatprep.subr.bf16.mxu0 0
        %596 = vmatpush1.bf16.msra.mxu0 0
        %597 = vmatprep.subr.bf16.mxu0 0
        %598 = vmatpush1.bf16.msra.mxu0 %v581
        %599 = vmatprep.subr.bf16.mxu0 0
        %600 = vmatpush2.bf16.msra.mxu0 0
        %601 = vmatprep.subr.bf16.mxu0 0
        %602 = vmatpush2.bf16.msra.mxu0 0
        %603 = vmatprep.subr.bf16.mxu0 0
        %604 = vmatpush2.bf16.msra.mxu0 0
        %605 = vmatprep.subr.bf16.mxu0 0
        %606 = vmatpush2.bf16.msra.mxu0 0
        %607 = vmatprep.subr.bf16.mxu0 0
        %608 = vmatpush2.bf16.msra.mxu0 0
        %609 = vmatprep.subr.bf16.mxu0 0
        %610 = vmatpush2.bf16.msra.mxu0 0
        %611 = vmatprep.subr.bf16.mxu0 0
        %612 = vmatpush2.bf16.msra.mxu0 0
        %613 = vmatprep.subr.bf16.mxu0 0
        %614 = vmatpush2.bf16.msra.mxu0 0
        %615 = vmatprep.mubr.bf16.mxu0 0
        %616 = vmatmul.mubr.bf16.gmra.mxu0 %v577
        %v617 = vpop.f32.mrf.mxu0
        %v618 = vadd.f32 0.0, %v617
        %v619 = vpop.f32.mrf.mxu0
        %v620 = vpop.f32.mrf.mxu0
        %v621 = vpop.f32.mrf.mxu0
        %622 = vdwg.mxu0
        %v623 = vpack.c.bf16 %v618, %v618
        %624 = vrot.lane.b32.xlu0 %v505, 120
        %v625 = vpop.permute.xlu0 %624
        %626 = vrot.lane.b32.xlu0 %v505, 88
        %v627 = vpop.permute.xlu0 %626
        %v629 = vsel %vm515, %v625, 0
        %v632 = vsel %vm515, %v627, 0
        %634 = vmatprep.subr.bf16.mxu0 0
        %635 = vmatpush1.bf16.xpose.msra.mxu0 0
        %636 = vmatprep.subr.bf16.mxu0 0
        %637 = vmatpush1.bf16.xpose.msra.mxu0 0
        %638 = vmatprep.subr.bf16.mxu0 0
        %639 = vmatpush1.bf16.xpose.msra.mxu0 0
        %640 = vmatprep.subr.bf16.mxu0 0
        %641 = vmatpush1.bf16.xpose.msra.mxu0 0
        %642 = vmatprep.subr.bf16.mxu0 0
        %643 = vmatpush1.bf16.xpose.msra.mxu0 0
        %644 = vmatprep.subr.bf16.mxu0 0
        %645 = vmatpush1.bf16.xpose.msra.mxu0 0
        %646 = vmatprep.subr.bf16.mxu0 0
        %647 = vmatpush1.bf16.xpose.msra.mxu0 0
        %648 = vmatprep.subr.bf16.mxu0 0
        %649 = vmatpush1.bf16.xpose.msra.mxu0 %v632
        %650 = vmatprep.subr.bf16.mxu0 0
        %651 = vmatpush2.bf16.xpose.msra.mxu0 0
        %652 = vmatprep.subr.bf16.mxu0 0
        %653 = vmatpush2.bf16.xpose.msra.mxu0 0
        %654 = vmatprep.subr.bf16.mxu0 0
        %655 = vmatpush2.bf16.xpose.msra.mxu0 0
        %656 = vmatprep.subr.bf16.mxu0 0
        %657 = vmatpush2.bf16.xpose.msra.mxu0 0
        %658 = vmatprep.subr.bf16.mxu0 0
        %659 = vmatpush2.bf16.xpose.msra.mxu0 0
        %660 = vmatprep.subr.bf16.mxu0 0
        %661 = vmatpush2.bf16.xpose.msra.mxu0 0
        %662 = vmatprep.subr.bf16.mxu0 0
        %663 = vmatpush2.bf16.xpose.msra.mxu0 0
        %664 = vmatprep.subr.bf16.mxu0 0
        %665 = vmatpush2.bf16.xpose.msra.mxu0 0
        %666 = vmatprep.mubr.bf16.mxu0 0
        %667 = vmatmul.mubr.bf16.gmra.mxu0 %v629
        %v668 = vpop.f32.mrf.mxu0
        %v669 = vadd.f32 %v511, %v668
        %v670 = vpop.f32.mrf.mxu0
        %v671 = vpop.f32.mrf.mxu0
        %v672 = vpop.f32.mrf.mxu0
        %673 = vdwg.mxu0
        %v674 = vsel %vm515, %v669, -inf
        %675 = vmax.xlane.f32.xlu0 %v674
        %v676 = vpop.xlane.xlu0 %675
        %v677 = vsub.f32 %v669, %v676
        %v678 = vmul.f32 %v677, 1.442695
        %v679 = vpow.pop %v678
        %v680 = vsel %vm515, %v679, 0.0
        %681 = vadd.xlane.f32.xlu0 %v680
        %v682 = vpop.xlane.xlu0 %681
        %v683 = vrcp.pop %v682
        %v684 = vmul.f32 %v679, %v683
        %v685 = vpack.c.bf16 %v684, %v684
        %686 = vrot.lane.b32.xlu0 %v505, 56
        %v687 = vpop.permute.xlu0 %686
        %v689 = vsel %vm515, %v685, 0
        %v692 = vsel %vm579, %v687, 0
        %694 = vmatprep.subr.bf16.mxu0 0
        %695 = vmatpush1.bf16.msra.mxu0 0
        %696 = vmatprep.subr.bf16.mxu0 0
        %697 = vmatpush1.bf16.msra.mxu0 0
        %698 = vmatprep.subr.bf16.mxu0 0
        %699 = vmatpush1.bf16.msra.mxu0 0
        %700 = vmatprep.subr.bf16.mxu0 0
        %701 = vmatpush1.bf16.msra.mxu0 0
        %702 = vmatprep.subr.bf16.mxu0 0
        %703 = vmatpush1.bf16.msra.mxu0 0
        %704 = vmatprep.subr.bf16.mxu0 0
        %705 = vmatpush1.bf16.msra.mxu0 0
        %706 = vmatprep.subr.bf16.mxu0 0
        %707 = vmatpush1.bf16.msra.mxu0 0
        %708 = vmatprep.subr.bf16.mxu0 0
        %709 = vmatpush1.bf16.msra.mxu0 %v692
        %710 = vmatprep.subr.bf16.mxu0 0
        %711 = vmatpush2.bf16.msra.mxu0 0
        %712 = vmatprep.subr.bf16.mxu0 0
        %713 = vmatpush2.bf16.msra.mxu0 0
        %714 = vmatprep.subr.bf16.mxu0 0
        %715 = vmatpush2.bf16.msra.mxu0 0
        %716 = vmatprep.subr.bf16.mxu0 0
        %717 = vmatpush2.bf16.msra.mxu0 0
        %718 = vmatprep.subr.bf16.mxu0 0
        %719 = vmatpush2.bf16.msra.mxu0 0
        %720 = vmatprep.subr.bf16.mxu0 0
        %721 = vmatpush2.bf16.msra.mxu0 0
        %722 = vmatprep.subr.bf16.mxu0 0
        %723 = vmatpush2.bf16.msra.mxu0 0
        %724 = vmatprep.subr.bf16.mxu0 0
        %725 = vmatpush2.bf16.msra.mxu0 0
        %726 = vmatprep.mubr.bf16.mxu0 0
        %727 = vmatmul.mubr.bf16.gmra.mxu0 %v689
        %v728 = vpop.f32.mrf.mxu0
        %v729 = vadd.f32 0.0, %v728
        %v730 = vpop.f32.mrf.mxu0
        %v731 = vpop.f32.mrf.mxu0
        %v732 = vpop.f32.mrf.mxu0
        %733 = vdwg.mxu0
        %v734 = vpack.c.bf16 %v729, %v729
        %735 = vrot.lane.b32.xlu0 %v505, 112
        %v736 = vpop.permute.xlu0 %735
        %737 = vrot.lane.b32.xlu0 %v505, 80
        %v738 = vpop.permute.xlu0 %737
        %v740 = vsel %vm515, %v736, 0
        %v743 = vsel %vm515, %v738, 0
        %745 = vmatprep.subr.bf16.mxu0 0
        %746 = vmatpush1.bf16.xpose.msra.mxu0 0
        %747 = vmatprep.subr.bf16.mxu0 0
        %748 = vmatpush1.bf16.xpose.msra.mxu0 0
        %749 = vmatprep.subr.bf16.mxu0 0
        %750 = vmatpush1.bf16.xpose.msra.mxu0 0
        %751 = vmatprep.subr.bf16.mxu0 0
        %752 = vmatpush1.bf16.xpose.msra.mxu0 0
        %753 = vmatprep.subr.bf16.mxu0 0
        %754 = vmatpush1.bf16.xpose.msra.mxu0 0
        %755 = vmatprep.subr.bf16.mxu0 0
        %756 = vmatpush1.bf16.xpose.msra.mxu0 0
        %757 = vmatprep.subr.bf16.mxu0 0
        %758 = vmatpush1.bf16.xpose.msra.mxu0 0
        %759 = vmatprep.subr.bf16.mxu0 0
        %760 = vmatpush1.bf16.xpose.msra.mxu0 %v743
        %761 = vmatprep.subr.bf16.mxu0 0
        %762 = vmatpush2.bf16.xpose.msra.mxu0 0
        %763 = vmatprep.subr.bf16.mxu0 0
        %764 = vmatpush2.bf16.xpose.msra.mxu0 0
        %765 = vmatprep.subr.bf16.mxu0 0
        %766 = vmatpush2.bf16.xpose.msra.mxu0 0
        %767 = vmatprep.subr.bf16.mxu0 0
        %768 = vmatpush2.bf16.xpose.msra.mxu0 0
        %769 = vmatprep.subr.bf16.mxu0 0
        %770 = vmatpush2.bf16.xpose.msra.mxu0 0
        %771 = vmatprep.subr.bf16.mxu0 0
        %772 = vmatpush2.bf16.xpose.msra.mxu0 0
        %773 = vmatprep.subr.bf16.mxu0 0
        %774 = vmatpush2.bf16.xpose.msra.mxu0 0
        %775 = vmatprep.subr.bf16.mxu0 0
        %776 = vmatpush2.bf16.xpose.msra.mxu0 0
        %777 = vmatprep.mubr.bf16.mxu0 0
        %778 = vmatmul.mubr.bf16.gmra.mxu0 %v740
        %v779 = vpop.f32.mrf.mxu0
        %v780 = vadd.f32 %v511, %v779
        %v781 = vpop.f32.mrf.mxu0
        %v782 = vpop.f32.mrf.mxu0
        %v783 = vpop.f32.mrf.mxu0
        %784 = vdwg.mxu0
        %v785 = vsel %vm515, %v780, -inf
        %786 = vmax.xlane.f32.xlu0 %v785
        %v787 = vpop.xlane.xlu0 %786
        %v788 = vsub.f32 %v780, %v787
        %v789 = vmul.f32 %v788, 1.442695
        %v790 = vpow.pop %v789
        %v791 = vsel %vm515, %v790, 0.0
        %792 = vadd.xlane.f32.xlu0 %v791
        %v793 = vpop.xlane.xlu0 %792
        %v794 = vrcp.pop %v793
        %v795 = vmul.f32 %v790, %v794
        %v796 = vpack.c.bf16 %v795, %v795
        %797 = vrot.lane.b32.xlu0 %v505, 48
        %v798 = vpop.permute.xlu0 %797
        %v800 = vsel %vm515, %v796, 0
        %v803 = vsel %vm579, %v798, 0
        %805 = vmatprep.subr.bf16.mxu0 0
        %806 = vmatpush1.bf16.msra.mxu0 0
        %807 = vmatprep.subr.bf16.mxu0 0
        %808 = vmatpush1.bf16.msra.mxu0 0
        %809 = vmatprep.subr.bf16.mxu0 0
        %810 = vmatpush1.bf16.msra.mxu0 0
        %811 = vmatprep.subr.bf16.mxu0 0
        %812 = vmatpush1.bf16.msra.mxu0 0
        %813 = vmatprep.subr.bf16.mxu0 0
        %814 = vmatpush1.bf16.msra.mxu0 0
        %815 = vmatprep.subr.bf16.mxu0 0
        %816 = vmatpush1.bf16.msra.mxu0 0
        %817 = vmatprep.subr.bf16.mxu0 0
        %818 = vmatpush1.bf16.msra.mxu0 0
        %819 = vmatprep.subr.bf16.mxu0 0
        %820 = vmatpush1.bf16.msra.mxu0 %v803
        %821 = vmatprep.subr.bf16.mxu0 0
        %822 = vmatpush2.bf16.msra.mxu0 0
        %823 = vmatprep.subr.bf16.mxu0 0
        %824 = vmatpush2.bf16.msra.mxu0 0
        %825 = vmatprep.subr.bf16.mxu0 0
        %826 = vmatpush2.bf16.msra.mxu0 0
        %827 = vmatprep.subr.bf16.mxu0 0
        %828 = vmatpush2.bf16.msra.mxu0 0
        %829 = vmatprep.subr.bf16.mxu0 0
        %830 = vmatpush2.bf16.msra.mxu0 0
        %831 = vmatprep.subr.bf16.mxu0 0
        %832 = vmatpush2.bf16.msra.mxu0 0
        %833 = vmatprep.subr.bf16.mxu0 0
        %834 = vmatpush2.bf16.msra.mxu0 0
        %835 = vmatprep.subr.bf16.mxu0 0
        %836 = vmatpush2.bf16.msra.mxu0 0
        %837 = vmatprep.mubr.bf16.mxu0 0
        %838 = vmatmul.mubr.bf16.gmra.mxu0 %v800
        %v839 = vpop.f32.mrf.mxu0
        %v840 = vadd.f32 0.0, %v839
        %v841 = vpop.f32.mrf.mxu0
        %v842 = vpop.f32.mrf.mxu0
        %v843 = vpop.f32.mrf.mxu0
        %844 = vdwg.mxu0
        %v845 = vpack.c.bf16 %v840, %v840
        %846 = vrot.lane.b32.xlu0 %v505, 104
        %v847 = vpop.permute.xlu0 %846
        %848 = vrot.lane.b32.xlu0 %v505, 72
        %v849 = vpop.permute.xlu0 %848
        %v851 = vsel %vm515, %v847, 0
        %v854 = vsel %vm515, %v849, 0
        %856 = vmatprep.subr.bf16.mxu0 0
        %857 = vmatpush1.bf16.xpose.msra.mxu0 0
        %858 = vmatprep.subr.bf16.mxu0 0
        %859 = vmatpush1.bf16.xpose.msra.mxu0 0
        %860 = vmatprep.subr.bf16.mxu0 0
        %861 = vmatpush1.bf16.xpose.msra.mxu0 0
        %862 = vmatprep.subr.bf16.mxu0 0
        %863 = vmatpush1.bf16.xpose.msra.mxu0 0
        %864 = vmatprep.subr.bf16.mxu0 0
        %865 = vmatpush1.bf16.xpose.msra.mxu0 0
        %866 = vmatprep.subr.bf16.mxu0 0
        %867 = vmatpush1.bf16.xpose.msra.mxu0 0
        %868 = vmatprep.subr.bf16.mxu0 0
        %869 = vmatpush1.bf16.xpose.msra.mxu0 0
        %870 = vmatprep.subr.bf16.mxu0 0
        %871 = vmatpush1.bf16.xpose.msra.mxu0 %v854
        %872 = vmatprep.subr.bf16.mxu0 0
        %873 = vmatpush2.bf16.xpose.msra.mxu0 0
        %874 = vmatprep.subr.bf16.mxu0 0
        %875 = vmatpush2.bf16.xpose.msra.mxu0 0
        %876 = vmatprep.subr.bf16.mxu0 0
        %877 = vmatpush2.bf16.xpose.msra.mxu0 0
        %878 = vmatprep.subr.bf16.mxu0 0
        %879 = vmatpush2.bf16.xpose.msra.mxu0 0
        %880 = vmatprep.subr.bf16.mxu0 0
        %881 = vmatpush2.bf16.xpose.msra.mxu0 0
        %882 = vmatprep.subr.bf16.mxu0 0
        %883 = vmatpush2.bf16.xpose.msra.mxu0 0
        %884 = vmatprep.subr.bf16.mxu0 0
        %885 = vmatpush2.bf16.xpose.msra.mxu0 0
        %886 = vmatprep.subr.bf16.mxu0 0
        %887 = vmatpush2.bf16.xpose.msra.mxu0 0
        %888 = vmatprep.mubr.bf16.mxu0 0
        %889 = vmatmul.mubr.bf16.gmra.mxu0 %v851
        %v890 = vpop.f32.mrf.mxu0
        %v891 = vadd.f32 %v511, %v890
        %v892 = vpop.f32.mrf.mxu0
        %v893 = vpop.f32.mrf.mxu0
        %v894 = vpop.f32.mrf.mxu0
        %895 = vdwg.mxu0
        %v896 = vsel %vm515, %v891, -inf
        %897 = vmax.xlane.f32.xlu0 %v896
        %v898 = vpop.xlane.xlu0 %897
        %v899 = vsub.f32 %v891, %v898
        %v900 = vmul.f32 %v899, 1.442695
        %v901 = vpow.pop %v900
        %v902 = vsel %vm515, %v901, 0.0
        %903 = vadd.xlane.f32.xlu0 %v902
        %v904 = vpop.xlane.xlu0 %903
        %v905 = vrcp.pop %v904
        %v906 = vmul.f32 %v901, %v905
        %v907 = vpack.c.bf16 %v906, %v906
        %908 = vrot.lane.b32.xlu0 %v505, 40
        %v909 = vpop.permute.xlu0 %908
        %v911 = vsel %vm515, %v907, 0
        %v914 = vsel %vm579, %v909, 0
        %916 = vmatprep.subr.bf16.mxu0 0
        %917 = vmatpush1.bf16.msra.mxu0 0
        %918 = vmatprep.subr.bf16.mxu0 0
        %919 = vmatpush1.bf16.msra.mxu0 0
        %920 = vmatprep.subr.bf16.mxu0 0
        %921 = vmatpush1.bf16.msra.mxu0 0
        %922 = vmatprep.subr.bf16.mxu0 0
        %923 = vmatpush1.bf16.msra.mxu0 0
        %924 = vmatprep.subr.bf16.mxu0 0
        %925 = vmatpush1.bf16.msra.mxu0 0
        %926 = vmatprep.subr.bf16.mxu0 0
        %927 = vmatpush1.bf16.msra.mxu0 0
        %928 = vmatprep.subr.bf16.mxu0 0
        %929 = vmatpush1.bf16.msra.mxu0 0
        %930 = vmatprep.subr.bf16.mxu0 0
        %931 = vmatpush1.bf16.msra.mxu0 %v914
        %932 = vmatprep.subr.bf16.mxu0 0
        %933 = vmatpush2.bf16.msra.mxu0 0
        %934 = vmatprep.subr.bf16.mxu0 0
        %935 = vmatpush2.bf16.msra.mxu0 0
        %936 = vmatprep.subr.bf16.mxu0 0
        %937 = vmatpush2.bf16.msra.mxu0 0
        %938 = vmatprep.subr.bf16.mxu0 0
        %939 = vmatpush2.bf16.msra.mxu0 0
        %940 = vmatprep.subr.bf16.mxu0 0
        %941 = vmatpush2.bf16.msra.mxu0 0
        %942 = vmatprep.subr.bf16.mxu0 0
        %943 = vmatpush2.bf16.msra.mxu0 0
        %944 = vmatprep.subr.bf16.mxu0 0
        %945 = vmatpush2.bf16.msra.mxu0 0
        %946 = vmatprep.subr.bf16.mxu0 0
        %947 = vmatpush2.bf16.msra.mxu0 0
        %948 = vmatprep.mubr.bf16.mxu0 0
        %949 = vmatmul.mubr.bf16.gmra.mxu0 %v911
        %v950 = vpop.f32.mrf.mxu0
        %v951 = vadd.f32 0.0, %v950
        %v952 = vpop.f32.mrf.mxu0
        %v953 = vpop.f32.mrf.mxu0
        %v954 = vpop.f32.mrf.mxu0
        %955 = vdwg.mxu0
        %v956 = vpack.c.bf16 %v951, %v951
        %958 = vrot.lane.b32.xlu0 %v734, 8
        %v959 = vpop.permute.xlu0 %958
        %961 = vrot.lane.b32.xlu0 %v845, 16
        %v962 = vpop.permute.xlu0 %961
        %964 = vrot.lane.b32.xlu0 %v956, 24
        %v965 = vpop.permute.xlu0 %964
        %v968 = vsel %vm515, %v623, %v959
        %vm969 = vcmask 130048
        %v971 = vsel %vm969, %v968, %v962
        %vm972 = vcmask 195584
        %v974 = vsel %vm972, %v971, %v965
        %v975 = vld [vmem:[%s4] sm:$0xf]
        %v976 = vld [vmem:[%s4 + $0x4] sm:$0xf]
        %v977 = vld [vmem:[%s4 + $0x8] sm:$0xf]
        %v978 = vld [vmem:[%s4 + $0xc] sm:$0xf]
        %v979 = vld [vmem:[%s5] sm:$0x1]
        %v981 = vlaneseq
        %v982 = vshrl.u32 %v981, 7
        %v983 = vsub.s32 0, %v982
        %v984 = vrot.slane %v979, %v983
        %v990 = vunpack.c.l.b16 %v975
        %v991 = vunpack.c.l.b16 %v976
        %v992 = vunpack.c.l.b16 %v977
        %v993 = vunpack.c.l.b16 %v978
        %v994 = vpack.c.b16 %v991, %v990
        %v995 = vpack.c.b16 %v993, %v992
        %v998 = vsel %vm413, %v974, 0
        %1000 = vmatprep.subr.bf16.mxu0 0
        %1001 = vmatpush1.bf16.msra.mxu0 0
        %1002 = vmatprep.subr.bf16.mxu0 0
        %1003 = vmatpush1.bf16.msra.mxu0 0
        %1004 = vmatprep.subr.bf16.mxu0 0
        %1005 = vmatpush1.bf16.msra.mxu0 0
        %1006 = vmatprep.subr.bf16.mxu0 0
        %1007 = vmatpush1.bf16.msra.mxu0 0
        %1008 = vmatprep.subr.bf16.mxu0 0
        %1009 = vmatpush1.bf16.msra.mxu0 0
        %1010 = vmatprep.subr.bf16.mxu0 0
        %1011 = vmatpush1.bf16.msra.mxu0 0
        %1012 = vmatprep.subr.bf16.mxu0 0
        %1013 = vmatpush1.bf16.msra.mxu0 %v995
        %1014 = vmatprep.subr.bf16.mxu0 0
        %1015 = vmatpush1.bf16.msra.mxu0 %v994
        %1016 = vmatprep.subr.bf16.mxu0 0
        %1017 = vmatpush2.bf16.msra.mxu0 0
        %1018 = vmatprep.subr.bf16.mxu0 0
        %1019 = vmatpush2.bf16.msra.mxu0 0
        %1020 = vmatprep.subr.bf16.mxu0 0
        %1021 = vmatpush2.bf16.msra.mxu0 0
        %1022 = vmatprep.subr.bf16.mxu0 0
        %1023 = vmatpush2.bf16.msra.mxu0 0
        %1024 = vmatprep.subr.bf16.mxu0 0
        %1025 = vmatpush2.bf16.msra.mxu0 0
        %1026 = vmatprep.subr.bf16.mxu0 0
        %1027 = vmatpush2.bf16.msra.mxu0 0
        %1028 = vmatprep.subr.bf16.mxu0 0
        %1029 = vmatpush2.bf16.msra.mxu0 0
        %1030 = vmatprep.subr.bf16.mxu0 0
        %1031 = vmatpush2.bf16.msra.mxu0 0
        %1032 = vmatprep.mubr.bf16.mxu0 0
        %1033 = vmatmul.mubr.bf16.gmra.mxu0 %v998
        %v1034 = vpop.f32.mrf.mxu0
        %v1035 = vadd.f32 %v984, %v1034
        %v1036 = vpop.f32.mrf.mxu0
        %v1037 = vpop.f32.mrf.mxu0
        %v1038 = vpop.f32.mrf.mxu0
        %1039 = vdwg.mxu0
        %v1040 = vadd.f32 %v410, %v1035
        %v1041 = vld [vmem:[%s6] sm:$0x1]
        %v1042 = vld [vmem:[%s7] sm:$0x1]
        %v1043 = vsel %vm413, %v1040, 0.0
        %1044 = vadd.xlane.f32.xlu0 %v1043
        %v1045 = vpop.xlane.xlu0 %1044
        %v1046 = vmul.f32 %v1045, %v417
        %v1047 = vmul.f32 %v1040, %v1040
        %v1048 = vsel %vm413, %v1047, 0.0
        %1049 = vadd.xlane.f32.xlu0 %v1048
        %v1050 = vpop.xlane.xlu0 %1049
        %v1051 = vmul.f32 %v1050, %v417
        %v1052 = vmul.f32 %v1046, %v1046
        %v1053 = vsub.f32 %v1051, %v1052
        %v1054 = vmax.f32 %v1053, 0.0
        %v1055 = vsub.f32 %v1040, %v1046
        %v1056 = vadd.f32 %v1054, 1e-05
        %v1057 = vrsqrt.pop %v1056
        %v1058 = vmul.f32 %v1055, %v1057
        %v1060 = vlaneseq
        %v1061 = vshrl.u32 %v1060, 7
        %v1062 = vsub.s32 0, %v1061
        %v1063 = vrot.slane %v1041, %v1062
        %v1065 = vmul.f32 %v1058, %v1063
        %v1067 = vlaneseq
        %v1068 = vshrl.u32 %v1067, 7
        %v1069 = vsub.s32 0, %v1068
        %v1070 = vrot.slane %v1042, %v1069
        %v1072 = vadd.f32 %v1065, %v1070
        %v1073 = vpack.c.bf16 %v1072, %v1072
        %v1074 = vld [vmem:[%s8] sm:$0xf]
        %v1075 = vld [vmem:[%s8 + $0x4] sm:$0xf]
        %v1076 = vld [vmem:[%s8 + $0x8] sm:$0xf]
        %v1077 = vld [vmem:[%s8 + $0xc] sm:$0xf]
        %v1078 = vld [vmem:[%s9] sm:$0x1]
        %v1080 = vlaneseq
        %v1081 = vshrl.u32 %v1080, 7
        %v1082 = vsub.s32 0, %v1081
        %v1083 = vrot.slane %v1078, %v1082
        %v1089 = vunpack.c.l.b16 %v1074
        %v1090 = vunpack.c.l.b16 %v1075
        %v1091 = vunpack.c.l.b16 %v1076
        %v1092 = vunpack.c.l.b16 %v1077
        %v1093 = vpack.c.b16 %v1090, %v1089
        %v1094 = vpack.c.b16 %v1092, %v1091
        %v1098 = vsel %vm413, %v1073, 0
        %1100 = vmatprep.subr.bf16.mxu0 0
        %1101 = vmatpush1.bf16.msra.mxu0 0
        %1102 = vmatprep.subr.bf16.mxu0 0
        %1103 = vmatpush1.bf16.msra.mxu0 0
        %1104 = vmatprep.subr.bf16.mxu0 0
        %1105 = vmatpush1.bf16.msra.mxu0 0
        %1106 = vmatprep.subr.bf16.mxu0 0
        %1107 = vmatpush1.bf16.msra.mxu0 0
        %1108 = vmatprep.subr.bf16.mxu0 0
        %1109 = vmatpush1.bf16.msra.mxu0 0
        %1110 = vmatprep.subr.bf16.mxu0 0
        %1111 = vmatpush1.bf16.msra.mxu0 0
        %1112 = vmatprep.subr.bf16.mxu0 0
        %1113 = vmatpush1.bf16.msra.mxu0 %v1094
        %1114 = vmatprep.subr.bf16.mxu0 0
        %1115 = vmatpush1.bf16.msra.mxu0 %v1093
        %1116 = vmatprep.subr.bf16.mxu0 0
        %1117 = vmatpush2.bf16.msra.mxu0 0
        %1118 = vmatprep.subr.bf16.mxu0 0
        %1119 = vmatpush2.bf16.msra.mxu0 0
        %1120 = vmatprep.subr.bf16.mxu0 0
        %1121 = vmatpush2.bf16.msra.mxu0 0
        %1122 = vmatprep.subr.bf16.mxu0 0
        %1123 = vmatpush2.bf16.msra.mxu0 0
        %1124 = vmatprep.subr.bf16.mxu0 0
        %1125 = vmatpush2.bf16.msra.mxu0 0
        %1126 = vmatprep.subr.bf16.mxu0 0
        %1127 = vmatpush2.bf16.msra.mxu0 0
        %1128 = vmatprep.subr.bf16.mxu0 0
        %1129 = vmatpush2.bf16.msra.mxu0 0
        %1130 = vmatprep.subr.bf16.mxu0 0
        %1131 = vmatpush2.bf16.msra.mxu0 0
        %1132 = vmatprep.mubr.bf16.mxu0 0
        %1133 = vmatmul.mubr.bf16.gmra.mxu0 %v1098
        %v1134 = vpop.f32.mrf.mxu0
        %v1135 = vadd.f32 %v1083, %v1134
        %v1136 = vpop.f32.mrf.mxu0
        %v1137 = vpop.f32.mrf.mxu0
        %v1138 = vpop.f32.mrf.mxu0
        %1139 = vdwg.mxu0
        %v1140 = vmax.f32 %v1135, 0.0
        %v1141 = vpack.c.bf16 %v1140, %v1140
        %v1142 = vld [vmem:[%s10] sm:$0xf]
        %v1143 = vld [vmem:[%s10 + $0x4] sm:$0xf]
        %v1144 = vld [vmem:[%s10 + $0x8] sm:$0xf]
        %v1145 = vld [vmem:[%s10 + $0xc] sm:$0xf]
        %v1146 = vld [vmem:[%s10 + $0x10] sm:$0xf]
        %v1147 = vld [vmem:[%s10 + $0x14] sm:$0xf]
        %v1148 = vld [vmem:[%s10 + $0x18] sm:$0xf]
        %v1149 = vld [vmem:[%s10 + $0x1c] sm:$0xf]
        %v1150 = vld [vmem:[%s10 + $0x20] sm:$0xf]
        %v1151 = vld [vmem:[%s10 + $0x24] sm:$0xf]
        %v1152 = vld [vmem:[%s10 + $0x28] sm:$0xf]
        %v1153 = vld [vmem:[%s10 + $0x2c] sm:$0xf]
        %v1154 = vld [vmem:[%s10 + $0x30] sm:$0xf]
        %v1155 = vld [vmem:[%s10 + $0x34] sm:$0xf]
        %v1156 = vld [vmem:[%s10 + $0x38] sm:$0xf]
        %v1157 = vld [vmem:[%s10 + $0x3c] sm:$0xf]
        %v1158 = vld [vmem:[%s11] sm:$0x1]
        %v1160 = vlaneseq
        %v1161 = vshrl.u32 %v1160, 7
        %v1162 = vsub.s32 0, %v1161
        %v1163 = vrot.slane %v1158, %v1162
        %v1181 = vunpack.c.l.b16 %v1142
        %v1182 = vunpack.c.l.b16 %v1143
        %v1183 = vunpack.c.l.b16 %v1144
        %v1184 = vunpack.c.l.b16 %v1145
        %v1185 = vunpack.c.l.b16 %v1146
        %v1186 = vunpack.c.l.b16 %v1147
        %v1187 = vunpack.c.l.b16 %v1148
        %v1188 = vunpack.c.l.b16 %v1149
        %v1189 = vunpack.c.l.b16 %v1150
        %v1190 = vunpack.c.l.b16 %v1151
        %v1191 = vunpack.c.l.b16 %v1152
        %v1192 = vunpack.c.l.b16 %v1153
        %v1193 = vunpack.c.l.b16 %v1154
        %v1194 = vunpack.c.l.b16 %v1155
        %v1195 = vunpack.c.l.b16 %v1156
        %v1196 = vunpack.c.l.b16 %v1157
        %v1197 = vpack.c.b16 %v1182, %v1181
        %v1198 = vpack.c.b16 %v1184, %v1183
        %v1199 = vpack.c.b16 %v1186, %v1185
        %v1200 = vpack.c.b16 %v1188, %v1187
        %v1201 = vpack.c.b16 %v1190, %v1189
        %v1202 = vpack.c.b16 %v1192, %v1191
        %v1203 = vpack.c.b16 %v1194, %v1193
        %v1204 = vpack.c.b16 %v1196, %v1195
        %1213 = vmatprep.subr.bf16.mxu0 0
        %1214 = vmatpush1.bf16.msra.mxu0 %v1204
        %1215 = vmatprep.subr.bf16.mxu0 0
        %1216 = vmatpush1.bf16.msra.mxu0 %v1203
        %1217 = vmatprep.subr.bf16.mxu0 0
        %1218 = vmatpush1.bf16.msra.mxu0 %v1202
        %1219 = vmatprep.subr.bf16.mxu0 0
        %1220 = vmatpush1.bf16.msra.mxu0 %v1201
        %1221 = vmatprep.subr.bf16.mxu0 0
        %1222 = vmatpush1.bf16.msra.mxu0 %v1200
        %1223 = vmatprep.subr.bf16.mxu0 0
        %1224 = vmatpush1.bf16.msra.mxu0 %v1199
        %1225 = vmatprep.subr.bf16.mxu0 0
        %1226 = vmatpush1.bf16.msra.mxu0 %v1198
        %1227 = vmatprep.subr.bf16.mxu0 0
        %1228 = vmatpush1.bf16.msra.mxu0 %v1197
        %1229 = vmatprep.subr.bf16.mxu0 0
        %1230 = vmatpush2.bf16.msra.mxu0 0
        %1231 = vmatprep.subr.bf16.mxu0 0
        %1232 = vmatpush2.bf16.msra.mxu0 0
        %1233 = vmatprep.subr.bf16.mxu0 0
        %1234 = vmatpush2.bf16.msra.mxu0 0
        %1235 = vmatprep.subr.bf16.mxu0 0
        %1236 = vmatpush2.bf16.msra.mxu0 0
        %1237 = vmatprep.subr.bf16.mxu0 0
        %1238 = vmatpush2.bf16.msra.mxu0 0
        %1239 = vmatprep.subr.bf16.mxu0 0
        %1240 = vmatpush2.bf16.msra.mxu0 0
        %1241 = vmatprep.subr.bf16.mxu0 0
        %1242 = vmatpush2.bf16.msra.mxu0 0
        %1243 = vmatprep.subr.bf16.mxu0 0
        %1244 = vmatpush2.bf16.msra.mxu0 0
        %1245 = vmatprep.mubr.bf16.mxu0 0
        %1246 = vmatmul.mubr.bf16.gmra.mxu0 %v1141
        %v1247 = vpop.f32.mrf.mxu0
        %v1248 = vadd.f32 %v1163, %v1247
        %v1249 = vpop.f32.mrf.mxu0
        %v1250 = vpop.f32.mrf.mxu0
        %v1251 = vpop.f32.mrf.mxu0
        %1252 = vdwg.mxu0
        %v1253 = vadd.f32 %v1040, %v1248
        %1254 = vst.msk [vmem:[%s404] sm:$0xff] %vm413, %v1253
        %s1255 = sand.u32 %s291, 1
        %s1256 = scalar_lea.sflag [#allocation3], %s1255
        %s1257 = sand.u32 %s291, 1
        %s1258 = smul.addr %s1257, 8
        %s1259 = scalar_lea.vmem [#allocation2], %s1258
        // Predicated region
        $region69: #{tpu_custom_call.1} parent=67 // pred_check
          %p1260 = pneg %p301
        $region70: #{tpu_custom_call.1} parent=67 // pred_check_branch
          %1262 = sbr.rel (%p1260) target = $region72
        $region71: #{tpu_custom_call.1} parent=67 // pred_region
          %s1264 = ssub.s32 128, 128
          %1265 = vsyncadd %s1256, %s1264
          %s1266 = smul.addr %s26, 128
          %s1267 = scalar_lea.hbm %s12, %s1266
          %s1269 = sshll.u32 %s1259, 4
          %s1270 = int_to_ptr.vmem [resolvable:$true] %s1269
          %1272 = dma.vmem_to_hbm [thread:$0]  %s1270, 128, %s1267, %s1256
        $region72: #{tpu_custom_call.1} parent=67 // pred_fallthru
          _
      $region68: #{tpu_custom_call.1} parent=5 // pred_fallthru
        _
      %p1273 = scmp.le.s32.totalorder 2, %s21
      // Predicated region
      $region73: #{tpu_custom_call.1} parent=5 // pred_check
        %p1274 = pneg %p1273
      $region74: #{tpu_custom_call.1} parent=5 // pred_check_branch
        %1276 = sbr.rel (%p1274) target = $region76
      $region75: #{tpu_custom_call.1} parent=5 // pred_region
        %s1277 = ssub.s32 %s21, 2
        // Predicated region
        $region77: #{tpu_custom_call.1} parent=75 // pred_check
          %p1278 = pneg %p307
        $region78: #{tpu_custom_call.1} parent=75 // pred_check_branch
          %1280 = sbr.rel (%p1278) target = $region80
        $region79: #{tpu_custom_call.1} parent=75 // pred_region
          %s1281 = sand.u32 %s292, 1
          %s1282 = scalar_lea.sflag [#allocation3], %s1281
          %s1283 = sand.u32 %s292, 1
          %s1284 = smul.addr %s1283, 8
          %s1285 = scalar_lea.vmem [#allocation2], %s1284
          %1286 = dma.done %s1282, 128
        $region80: #{tpu_custom_call.1} parent=75 // pred_fallthru
          _
      $region76: #{tpu_custom_call.1} parent=5 // pred_fallthru
        _
    $region6: #{tpu_custom_call.1} parent=1 // loop_footer
      %s25 = sadd.s32 1, %s21
    $region7: #{tpu_custom_call.1} parent=1 // loop_footer_branch
      %20 = sbr.rel target = $region3
    $region8: #{tpu_custom_call.1} parent=1 // loop_exit
      _
    %1287 = vsyncpa [#allocation3], 1
    %s1288 = scalar_lea.sflag [#allocation3], 1
    %1289 = vsyncpa %s1288, 1

// kernel: tpu_custom_call.1
$region0: #{tpu_custom_call.1}
  #allocation0 [shape = 'u32[]', space=smem, size = 0x4, offset = 0x4, fixed_abs, tag = 'smem constant byte address 0x4 - core index']
  #allocation1 [shape = 'u32[144,128]{1,0:T(1,128)}', space=vmem, size = 0x12000, scoped, tag = 'internal scratch']
  %s0 = inlined_call_operand.vmem [shape: f32[2,8,32], index: 0, kind: input, shape index: {}]
  %s1 = inlined_call_operand.vmem [shape: f32[1,32], index: 1, kind: input, shape index: {}]
  %s2 = inlined_call_operand.vmem [shape: f32[1,32], index: 2, kind: input, shape index: {}]
  %s3 = inlined_call_operand.vmem [shape: bf16[32,96], index: 3, kind: input, shape index: {}]
  %s4 = inlined_call_operand.vmem [shape: bf16[32,32], index: 4, kind: input, shape index: {}]
  %s5 = inlined_call_operand.vmem [shape: f32[1,32], index: 5, kind: input, shape index: {}]
  %s6 = inlined_call_operand.vmem [shape: f32[1,32], index: 6, kind: input, shape index: {}]
  %s7 = inlined_call_operand.vmem [shape: f32[1,32], index: 7, kind: input, shape index: {}]
  %s8 = inlined_call_operand.vmem [shape: bf16[32,128], index: 8, kind: input, shape index: {}]
  %s9 = inlined_call_operand.vmem [shape: f32[1,128], index: 9, kind: input, shape index: {}]
  %s10 = inlined_call_operand.vmem [shape: bf16[128,32], index: 10, kind: input, shape index: {}]
  %s11 = inlined_call_operand.vmem [shape: f32[1,32], index: 11, kind: input, shape index: {}]
  %s12 = inlined_call_operand.hbm [shape: f32[2,8,32], index: 12, kind: output, shape index: {}]
  %s13 = sld [smem:[#allocation0]]
  $region81: #{tpu_custom_call.1} parent=0
    _
  %s15 = ssub.s32 1, %s13
  %s16 = scalar_select 0, %s15, %s13
  $region1: #{tpu_custom_call.1} parent=0
    #allocation2 [shape = 'u8[8192]{0}', space=vmem, size = 0x2000, scoped, tag = 'output window, operand 0']
    #allocation3 [shape = 's32[2]{0}', space=sflag, size = 0x8, scoped, tag = 'scoped memory for tpu_custom_call.1']
    %17 = vsyncpa [#allocation3], 0
    %s18 = scalar_lea.sflag [#allocation3], 1
    %19 = vsyncpa %s18, 0
    loop: start=0, step=1, limit=4
    $region2: #{tpu_custom_call.1} parent=1 // loop_pre_header
      _
    $region3: #{tpu_custom_call.1} parent=1 // loop_header
      %s21 = sphi 0, %s25
      %p22 = scmp.ge.s32.totalorder %s21, 4
      %s31 = sphi 0, %s33
      %s34 = sphi 0, %s31
      %s35 = sphi 0, %s34
      %s51 = sphi 0, %s35
      %s55 = sphi 0, %s55
      %s57 = sphi 0, %s55
      %s58 = sphi 0, %s57
      %s72 = sphi 0, %s58
      %s76 = sphi 0, %s76
      %s78 = sphi 0, %s76
      %s79 = sphi 0, %s78
      %s93 = sphi 0, %s79
      %s97 = sphi 0, %s97
      %s99 = sphi 0, %s97
      %s100 = sphi 0, %s99
      %s114 = sphi 0, %s100
      %s118 = sphi 0, %s118
      %s120 = sphi 0, %s118
      %s121 = sphi 0, %s120
      %s135 = sphi 0, %s121
      %s139 = sphi 0, %s139
      %s141 = sphi 0, %s139
      %s142 = sphi 0, %s141
      %s156 = sphi 0, %s142
      %s160 = sphi 0, %s160
      %s162 = sphi 0, %s160
      %s163 = sphi 0, %s162
      %s177 = sphi 0, %s163
      %s181 = sphi 0, %s181
      %s183 = sphi 0, %s181
      %s184 = sphi 0, %s183
      %s198 = sphi 0, %s184
      %s202 = sphi 0, %s202
      %s204 = sphi 0, %s202
      %s205 = sphi 0, %s204
      %s219 = sphi 0, %s205
      %s223 = sphi 0, %s223
      %s225 = sphi 0, %s223
      %s226 = sphi 0, %s225
      %s240 = sphi 0, %s226
      %s244 = sphi 0, %s244
      %s246 = sphi 0, %s244
      %s247 = sphi 0, %s246
      %s261 = sphi 0, %s247
      %s265 = sphi 0, %s265
      %s267 = sphi 0, %s265
      %s268 = sphi 0, %s267
      %s282 = sphi 0, %s268
      %s288 = sphi 0, %s290
      %s291 = sphi 0, %s288
      %s292 = sphi 0, %s291
      %s308 = sphi 0, %s292
    $region4: #{tpu_custom_call.1} parent=1 // loop_header_branch
      %24 = sbr.rel (%p22) target = $region8
    $region5: #{tpu_custom_call.1} parent=1 // loop_body
      %s26 = ssub.s32 %s21, 1
      %s27 = ssub.s32 %s21, 2
      %s28 = sadd.s32 %s21, 1
      %s29 = ssub.s32 %s21, %s28
      %p30 = scmp.eq.s32.totalorder %s29, 0
      %s32 = sadd.s32 %s31, 1
      %s33 = scalar_select %p30, %s31, %s32
      %p36 = pneg %p30
      %p37 = scmp.eq.s32.totalorder %s21, 1
      %p38 = por %p36, %p37
      %p39 = scmp.ne.s32.totalorder %s31, %s34
      %p40 = scmp.eq.s32.totalorder %s21, 0
      %p41 = por %p39, %p40
      %p42 = scmp.ne.s32.totalorder %s31, %s34
      %p43 = scmp.eq.s32.totalorder %s26, 1
      %p44 = por %p42, %p43
      %p45 = scmp.ne.s32.totalorder %s34, %s35
      %p46 = scmp.eq.s32.totalorder %s26, 0
      %p47 = por %p45, %p46
      %p48 = scmp.ne.s32.totalorder %s34, %s35
      %p49 = scmp.eq.s32.totalorder %s27, 1
      %p50 = por %p48, %p49
      %p52 = scmp.ne.s32.totalorder %s35, %s51
      %p53 = scmp.eq.s32.totalorder %s27, 0
      %p54 = por %p52, %p53
      %s56 = sadd.s32 %s55, 1
      %p59 = scmp.eq.s32.totalorder %s21, 1
      %p60 = scmp.ne.s32.totalorder %s55, %s57
      %p61 = scmp.eq.s32.totalorder %s21, 0
      %p62 = por %p60, %p61
      %p63 = scmp.ne.s32.totalorder %s55, %s57
      %p64 = scmp.eq.s32.totalorder %s26, 1
      %p65 = por %p63, %p64
      %p66 = scmp.ne.s32.totalorder %s57, %s58
      %p67 = scmp.eq.s32.totalorder %s26, 0
      %p68 = por %p66, %p67
      %p69 = scmp.ne.s32.totalorder %s57, %s58
      %p70 = scmp.eq.s32.totalorder %s27, 1
      %p71 = por %p69, %p70
      %p73 = scmp.ne.s32.totalorder %s58, %s72
      %p74 = scmp.eq.s32.totalorder %s27, 0
      %p75 = por %p73, %p74
      %s77 = sadd.s32 %s76, 1
      %p80 = scmp.eq.s32.totalorder %s21, 1
      %p81 = scmp.ne.s32.totalorder %s76, %s78
      %p82 = scmp.eq.s32.totalorder %s21, 0
      %p83 = por %p81, %p82
      %p84 = scmp.ne.s32.totalorder %s76, %s78
      %p85 = scmp.eq.s32.totalorder %s26, 1
      %p86 = por %p84, %p85
      %p87 = scmp.ne.s32.totalorder %s78, %s79
      %p88 = scmp.eq.s32.totalorder %s26, 0
      %p89 = por %p87, %p88
      %p90 = scmp.ne.s32.totalorder %s78, %s79
      %p91 = scmp.eq.s32.totalorder %s27, 1
      %p92 = por %p90, %p91
      %p94 = scmp.ne.s32.totalorder %s79, %s93
      %p95 = scmp.eq.s32.totalorder %s27, 0
      %p96 = por %p94, %p95
      %s98 = sadd.s32 %s97, 1
      %p101 = scmp.eq.s32.totalorder %s21, 1
      %p102 = scmp.ne.s32.totalorder %s97, %s99
      %p103 = scmp.eq.s32.totalorder %s21, 0
      %p104 = por %p102, %p103
      %p105 = scmp.ne.s32.totalorder %s97, %s99
      %p106 = scmp.eq.s32.totalorder %s26, 1
      %p107 = por %p105, %p106
      %p108 = scmp.ne.s32.totalorder %s99, %s100
      %p109 = scmp.eq.s32.totalorder %s26, 0
      %p110 = por %p108, %p109
      %p111 = scmp.ne.s32.totalorder %s99, %s100
      %p112 = scmp.eq.s32.totalorder %s27, 1
      %p113 = por %p111, %p112
      %p115 = scmp.ne.s32.totalorder %s100, %s114
      %p116 = scmp.eq.s32.totalorder %s27, 0
      %p117 = por %p115, %p116
      %s119 = sadd.s32 %s118, 1
      %p122 = scmp.eq.s32.totalorder %s21, 1
      %p123 = scmp.ne.s32.totalorder %s118, %s120
      %p124 = scmp.eq.s32.totalorder %s21, 0
      %p125 = por %p123, %p124
      %p126 = scmp.ne.s32.totalorder %s118, %s120
      %p127 = scmp.eq.s32.totalorder %s26, 1
      %p128 = por %p126, %p127
      %p129 = scmp.ne.s32.totalorder %s120, %s121
      %p130 = scmp.eq.s32.totalorder %s26, 0
      %p131 = por %p129, %p130
      %p132 = scmp.ne.s32.totalorder %s120, %s121
      %p133 = scmp.eq.s32.totalorder %s27, 1
      %p134 = por %p132, %p133
      %p136 = scmp.ne.s32.totalorder %s121, %s135
      %p137 = scmp.eq.s32.totalorder %s27, 0
      %p138 = por %p136, %p137
      %s140 = sadd.s32 %s139, 1
      %p143 = scmp.eq.s32.totalorder %s21, 1
      %p144 = scmp.ne.s32.totalorder %s139, %s141
      %p145 = scmp.eq.s32.totalorder %s21, 0
      %p146 = por %p144, %p145
      %p147 = scmp.ne.s32.totalorder %s139, %s141
      %p148 = scmp.eq.s32.totalorder %s26, 1
      %p149 = por %p147, %p148
      %p150 = scmp.ne.s32.totalorder %s141, %s142
      %p151 = scmp.eq.s32.totalorder %s26, 0
      %p152 = por %p150, %p151
      %p153 = scmp.ne.s32.totalorder %s141, %s142
      %p154 = scmp.eq.s32.totalorder %s27, 1
      %p155 = por %p153, %p154
      %p157 = scmp.ne.s32.totalorder %s142, %s156
      %p158 = scmp.eq.s32.totalorder %s27, 0
      %p159 = por %p157, %p158
      %s161 = sadd.s32 %s160, 1
      %p164 = scmp.eq.s32.totalorder %s21, 1
      %p165 = scmp.ne.s32.totalorder %s160, %s162
      %p166 = scmp.eq.s32.totalorder %s21, 0
      %p167 = por %p165, %p166
      %p168 = scmp.ne.s32.totalorder %s160, %s162
      %p169 = scmp.eq.s32.totalorder %s26, 1
      %p170 = por %p168, %p169
      %p171 = scmp.ne.s32.totalorder %s162, %s163
      %p172 = scmp.eq.s32.totalorder %s26, 0
      %p173 = por %p171, %p172
      %p174 = scmp.ne.s32.totalorder %s162, %s163
      %p175 = scmp.eq.s32.totalorder %s27, 1
      %p176 = por %p174, %p175
      %p178 = scmp.ne.s32.totalorder %s163, %s177
      %p179 = scmp.eq.s32.totalorder %s27, 0
      %p180 = por %p178, %p179
      %s182 = sadd.s32 %s181, 1
      %p185 = scmp.eq.s32.totalorder %s21, 1
      %p186 = scmp.ne.s32.totalorder %s181, %s183
      %p187 = scmp.eq.s32.totalorder %s21, 0
      %p188 = por %p186, %p187
      %p189 = scmp.ne.s32.totalorder %s181, %s183
      %p190 = scmp.eq.s32.totalorder %s26, 1
      %p191 = por %p189, %p190
      %p192 = scmp.ne.s32.totalorder %s183, %s184
      %p193 = scmp.eq.s32.totalorder %s26, 0
      %p194 = por %p192, %p193
      %p195 = scmp.ne.s32.totalorder %s183, %s184
      %p196 = scmp.eq.s32.totalorder %s27, 1
      %p197 = por %p195, %p196
      %p199 = scmp.ne.s32.totalorder %s184, %s198
      %p200 = scmp.eq.s32.totalorder %s27, 0
      %p201 = por %p199, %p200
      %s203 = sadd.s32 %s202, 1
      %p206 = scmp.eq.s32.totalorder %s21, 1
      %p207 = scmp.ne.s32.totalorder %s202, %s204
      %p208 = scmp.eq.s32.totalorder %s21, 0
      %p209 = por %p207, %p208
      %p210 = scmp.ne.s32.totalorder %s202, %s204
      %p211 = scmp.eq.s32.totalorder %s26, 1
      %p212 = por %p210, %p211
      %p213 = scmp.ne.s32.totalorder %s204, %s205
      %p214 = scmp.eq.s32.totalorder %s26, 0
      %p215 = por %p213, %p214
      %p216 = scmp.ne.s32.totalorder %s204, %s205
      %p217 = scmp.eq.s32.totalorder %s27, 1
      %p218 = por %p216, %p217
      %p220 = scmp.ne.s32.totalorder %s205, %s219
      %p221 = scmp.eq.s32.totalorder %s27, 0
      %p222 = por %p220, %p221
      %s224 = sadd.s32 %s223, 1
      %p227 = scmp.eq.s32.totalorder %s21, 1
      %p228 = scmp.ne.s32.totalorder %s223, %s225
      %p229 = scmp.eq.s32.totalorder %s21, 0
      %p230 = por %p228, %p229
      %p231 = scmp.ne.s32.totalorder %s223, %s225
      %p232 = scmp.eq.s32.totalorder %s26, 1
      %p233 = por %p231, %p232
      %p234 = scmp.ne.s32.totalorder %s225, %s226
      %p235 = scmp.eq.s32.totalorder %s26, 0
      %p236 = por %p234, %p235
      %p237 = scmp.ne.s32.totalorder %s225, %s226
      %p238 = scmp.eq.s32.totalorder %s27, 1
      %p239 = por %p237, %p238
      %p241 = scmp.ne.s32.totalorder %s226, %s240
      %p242 = scmp.eq.s32.totalorder %s27, 0
      %p243 = por %p241, %p242
      %s245 = sadd.s32 %s244, 1
      %p248 = scmp.eq.s32.totalorder %s21, 1
      %p249 = scmp.ne.s32.totalorder %s244, %s246
      %p250 = scmp.eq.s32.totalorder %s21, 0
      %p251 = por %p249, %p250
      %p252 = scmp.ne.s32.totalorder %s244, %s246
      %p253 = scmp.eq.s32.totalorder %s26, 1
      %p254 = por %p252, %p253
      %p255 = scmp.ne.s32.totalorder %s246, %s247
      %p256 = scmp.eq.s32.totalorder %s26, 0
      %p257 = por %p255, %p256
      %p258 = scmp.ne.s32.totalorder %s246, %s247
      %p259 = scmp.eq.s32.totalorder %s27, 1
      %p260 = por %p258, %p259
      %p262 = scmp.ne.s32.totalorder %s247, %s261
      %p263 = scmp.eq.s32.totalorder %s27, 0
      %p264 = por %p262, %p263
      %s266 = sadd.s32 %s265, 1
      %p269 = scmp.eq.s32.totalorder %s21, 1
      %p270 = scmp.ne.s32.totalorder %s265, %s267
      %p271 = scmp.eq.s32.totalorder %s21, 0
      %p272 = por %p270, %p271
      %p273 = scmp.ne.s32.totalorder %s265, %s267
      %p274 = scmp.eq.s32.totalorder %s26, 1
      %p275 = por %p273, %p274
      %p276 = scmp.ne.s32.totalorder %s267, %s268
      %p277 = scmp.eq.s32.totalorder %s26, 0
      %p278 = por %p276, %p277
      %p279 = scmp.ne.s32.totalorder %s267, %s268
      %p280 = scmp.eq.s32.totalorder %s27, 1
      %p281 = por %p279, %p280
      %p283 = scmp.ne.s32.totalorder %s268, %s282
      %p284 = scmp.eq.s32.totalorder %s27, 0
      %p285 = por %p283, %p284
      %s286 = ssub.s32 %s21, %s28
      %p287 = scmp.eq.s32.totalorder %s286, 0
      %s289 = sadd.s32 %s288, 1
      %s290 = scalar_select %p287, %s288, %s289
      %p293 = pneg %p287
      %p294 = scmp.eq.s32.totalorder %s21, 1
      %p295 = por %p293, %p294
      %p296 = scmp.ne.s32.totalorder %s288, %s291
      %p297 = scmp.eq.s32.totalorder %s21, 0
      %p298 = por %p296, %p297
      %p299 = scmp.ne.s32.totalorder %s288, %s291
      %p300 = scmp.eq.s32.totalorder %s26, 1
      %p301 = por %p299, %p300
      %p302 = scmp.ne.s32.totalorder %s291, %s292
      %p303 = scmp.eq.s32.totalorder %s26, 0
      %p304 = por %p302, %p303
      %p305 = scmp.ne.s32.totalorder %s291, %s292
      %p306 = scmp.eq.s32.totalorder %s27, 1
      %p307 = por %p305, %p306
      %p309 = scmp.ne.s32.totalorder %s292, %s308
      %p310 = scmp.eq.s32.totalorder %s27, 0
      %p311 = por %p309, %p310
      %p312 = scmp.le.s32.totalorder 1, %s21
      %p313 = scmp.lt.s32.totalorder %s21, 3
      %p314 = pnand %p312, %p313
      %p315 = pneg %p314
      // Predicated region
      $region9: #{tpu_custom_call.1} parent=5 // pred_check
        _
      $region10: #{tpu_custom_call.1} parent=5 // pred_check_branch
        %317 = sbr.rel (%p314) target = $region12
      $region11: #{tpu_custom_call.1} parent=5 // pred_region
        %s318 = ssub.s32 %s21, 1
        // Predicated region
        $region13: #{tpu_custom_call.1} parent=11 // pred_check
          %p319 = pneg %p68
        $region14: #{tpu_custom_call.1} parent=11 // pred_check_branch
          %321 = sbr.rel (%p319) target = $region16
        $region15: #{tpu_custom_call.1} parent=11 // pred_region
          _
        $region16: #{tpu_custom_call.1} parent=11 // pred_fallthru
          _
        // Predicated region
        $region17: #{tpu_custom_call.1} parent=11 // pred_check
          %p322 = pneg %p89
        $region18: #{tpu_custom_call.1} parent=11 // pred_check_branch
          %324 = sbr.rel (%p322) target = $region20
        $region19: #{tpu_custom_call.1} parent=11 // pred_region
          _
        $region20: #{tpu_custom_call.1} parent=11 // pred_fallthru
          _
        // Predicated region
        $region21: #{tpu_custom_call.1} parent=11 // pred_check
          %p325 = pneg %p110
        $region22: #{tpu_custom_call.1} parent=11 // pred_check_branch
          %327 = sbr.rel (%p325) target = $region24
        $region23: #{tpu_custom_call.1} parent=11 // pred_region
          _
        $region24: #{tpu_custom_call.1} parent=11 // pred_fallthru
          _
        // Predicated region
        $region25: #{tpu_custom_call.1} parent=11 // pred_check
          %p328 = pneg %p131
        $region26: #{tpu_custom_call.1} parent=11 // pred_check_branch
          %330 = sbr.rel (%p328) target = $region28
        $region27: #{tpu_custom_call.1} parent=11 // pred_region
          _
        $region28: #{tpu_custom_call.1} parent=11 // pred_fallthru
          _
        // Predicated region
        $region29: #{tpu_custom_call.1} parent=11 // pred_check
          %p331 = pneg %p152
        $region30: #{tpu_custom_call.1} parent=11 // pred_check_branch
          %333 = sbr.rel (%p331) target = $region32
        $region31: #{tpu_custom_call.1} parent=11 // pred_region
          _
        $region32: #{tpu_custom_call.1} parent=11 // pred_fallthru
          _
        // Predicated region
        $region33: #{tpu_custom_call.1} parent=11 // pred_check
          %p334 = pneg %p173
        $region34: #{tpu_custom_call.1} parent=11 // pred_check_branch
          %336 = sbr.rel (%p334) target = $region36
        $region35: #{tpu_custom_call.1} parent=11 // pred_region
          _
        $region36: #{tpu_custom_call.1} parent=11 // pred_fallthru
          _
        // Predicated region
        $region37: #{tpu_custom_call.1} parent=11 // pred_check
          %p337 = pneg %p194
        $region38: #{tpu_custom_call.1} parent=11 // pred_check_branch
          %339 = sbr.rel (%p337) target = $region40
        $region39: #{tpu_custom_call.1} parent=11 // pred_region
          _
        $region40: #{tpu_custom_call.1} parent=11 // pred_fallthru
          _
        // Predicated region
        $region41: #{tpu_custom_call.1} parent=11 // pred_check
          %p340 = pneg %p215
        $region42: #{tpu_custom_call.1} parent=11 // pred_check_branch
          %342 = sbr.rel (%p340) target = $region44
        $region43: #{tpu_custom_call.1} parent=11 // pred_region
          _
        $region44: #{tpu_custom_call.1} parent=11 // pred_fallthru
          _
        // Predicated region
        $region45: #{tpu_custom_call.1} parent=11 // pred_check
          %p343 = pneg %p236
        $region46: #{tpu_custom_call.1} parent=11 // pred_check_branch
          %345 = sbr.rel (%p343) target = $region48
        $region47: #{tpu_custom_call.1} parent=11 // pred_region
          _
        $region48: #{tpu_custom_call.1} parent=11 // pred_fallthru
          _
        // Predicated region
        $region49: #{tpu_custom_call.1} parent=11 // pred_check
          %p346 = pneg %p257
        $region50: #{tpu_custom_call.1} parent=11 // pred_check_branch
          %348 = sbr.rel (%p346) target = $region52
        $region51: #{tpu_custom_call.1} parent=11 // pred_region
          _
        $region52: #{tpu_custom_call.1} parent=11 // pred_fallthru
          _
        // Predicated region
        $region53: #{tpu_custom_call.1} parent=11 // pred_check
          %p349 = pneg %p278
        $region54: #{tpu_custom_call.1} parent=11 // pred_check_branch
          %351 = sbr.rel (%p349) target = $region56
        $region55: #{tpu_custom_call.1} parent=11 // pred_region
          _
        $region56: #{tpu_custom_call.1} parent=11 // pred_fallthru
          _
      $region12: #{tpu_custom_call.1} parent=5 // pred_fallthru
        _
      %p352 = scmp.lt.s32.totalorder %s21, 2
      // Predicated region
      $region57: #{tpu_custom_call.1} parent=5 // pred_check
        %p353 = pneg %p352
      $region58: #{tpu_custom_call.1} parent=5 // pred_check_branch
        %355 = sbr.rel (%p353) target = $region60
      $region59: #{tpu_custom_call.1} parent=5 // pred_region
        // Predicated region
        $region61: #{tpu_custom_call.1} parent=59 // pred_check
          %p356 = pneg %p41
        $region62: #{tpu_custom_call.1} parent=59 // pred_check_branch
          %358 = sbr.rel (%p356) target = $region64
        $region63: #{tpu_custom_call.1} parent=59 // pred_region
          %p359 = scmp.lt.s32.totalorder %s21, 1
          %s360 = scalar_select %p359, %s21, 1
          %s361 = smul.addr %s360, 8
          %s362 = scalar_lea.vmem %s0, %s361
        $region64: #{tpu_custom_call.1} parent=59 // pred_fallthru
          _
      $region60: #{tpu_custom_call.1} parent=5 // pred_fallthru
        _
      %p363 = scmp.le.s32.totalorder 1, %s21
      %p364 = scmp.lt.s32.totalorder %s21, 3
      %p365 = pnand %p363, %p364
      %p366 = pneg %p365
      // Predicated region
      $region65: #{tpu_custom_call.1} parent=5 // pred_check
        _
      $region66: #{tpu_custom_call.1} parent=5 // pred_check_branch
        %368 = sbr.rel (%p365) target = $region68
      $region67: #{tpu_custom_call.1} parent=5 // pred_region
        %s369 = ssub.s32 %s21, 1
        %p370 = scmp.lt.s32.totalorder %s26, 1
        %s371 = scalar_select %p370, %s26, 1
        %s372 = smul.addr %s371, 8
        %s373 = scalar_lea.vmem %s0, %s372
        %p374 = pneg %p47
        %p375 = pneg %p44
        %p376 = pneg %p68
        %p377 = pneg %p65
        %p378 = pneg %p89
        %p379 = pneg %p86
        %p380 = pneg %p110
        %p381 = pneg %p107
        %p382 = pneg %p131
        %p383 = pneg %p128
        %p384 = pneg %p152
        %p385 = pneg %p149
        %p386 = pneg %p173
        %p387 = pneg %p170
        %p388 = pneg %p194
        %p389 = pneg %p191
        %p390 = pneg %p215
        %p391 = pneg %p212
        %p392 = pneg %p236
        %p393 = pneg %p233
        %p394 = pneg %p257
        %p395 = pneg %p254
        %p396 = pneg %p278
        %p397 = pneg %p275
        %p398 = pneg %p304
        %p399 = pneg %p301
        %s400 = sand.u32 %s291, 1
        %s401 = scalar_lea.sflag [#allocation3], %s400
        %s402 = sand.u32 %s291, 1
        %s403 = smul.addr %s402, 8
        %s404 = scalar_lea.vmem [#allocation2], %s403
        %p405 = scmp.lt.s32.totalorder %s26, 1
        %s406 = scalar_select %p405, %s26, 1
        %s407 = smul.addr %s406, 8
        %s408 = scalar_lea.vmem %s0, %s407
        %v410 = vld [vmem:[%s408] sm:$0xff]
        %v411 = vld [vmem:[%s1] sm:$0x1]
        %v412 = vld [vmem:[%s2] sm:$0x1]
        %vm413 = vcmask 261120
        %v414 = vsel %vm413, %v410, 0.0
        %415 = vadd.xlane.f32.xlu0 %v414
        %v416 = vpop.xlane.xlu0 %415
        %v417 = vrcp.pop 32.0
        %v418 = vmul.f32 %v416, %v417
        %v419 = vmul.f32 %v410, %v410
        %v420 = vsel %vm413, %v419, 0.0
        %421 = vadd.xlane.f32.xlu0 %v420
        %v422 = vpop.xlane.xlu0 %421
        %v423 = vmul.f32 %v422, %v417
        %v424 = vmul.f32 %v418, %v418
        %v425 = vsub.f32 %v423, %v424
        %v426 = vmax.f32 %v425, 0.0
        %v427 = vsub.f32 %v410, %v418
        %v428 = vadd.f32 %v426, 1e-05
        %v429 = vrsqrt.pop %v428
        %v430 = vmul.f32 %v427, %v429
        %v432 = vlaneseq
        %v433 = vshrl.u32 %v432, 7
        %v434 = vsub.s32 0, %v433
        %v435 = vrot.slane %v411, %v434
        %v437 = vmul.f32 %v430, %v435
        %v439 = vlaneseq
        %v440 = vshrl.u32 %v439, 7
        %v441 = vsub.s32 0, %v440
        %v442 = vrot.slane %v412, %v441
        %v444 = vadd.f32 %v437, %v442
        %v445 = vpack.c.bf16 %v444, %v444
        %v446 = vld [vmem:[%s3] sm:$0xf]
        %v447 = vld [vmem:[%s3 + $0x4] sm:$0xf]
        %v448 = vld [vmem:[%s3 + $0x8] sm:$0xf]
        %v449 = vld [vmem:[%s3 + $0xc] sm:$0xf]
        %v454 = vunpack.c.l.b16 %v446
        %v455 = vunpack.c.l.b16 %v447
        %v456 = vunpack.c.l.b16 %v448
        %v457 = vunpack.c.l.b16 %v449
        %v458 = vpack.c.b16 %v455, %v454
        %v459 = vpack.c.b16 %v457, %v456
        %v463 = vsel %vm413, %v445, 0
        %465 = vmatprep.subr.bf16.mxu0 0
        %466 = vmatpush1.bf16.msra.mxu0 0
        %467 = vmatprep.subr.bf16.mxu0 0
        %468 = vmatpush1.bf16.msra.mxu0 0
        %469 = vmatprep.subr.bf16.mxu0 0
        %470 = vmatpush1.bf16.msra.mxu0 0
        %471 = vmatprep.subr.bf16.mxu0 0
        %472 = vmatpush1.bf16.msra.mxu0 0
        %473 = vmatprep.subr.bf16.mxu0 0
        %474 = vmatpush1.bf16.msra.mxu0 0
        %475 = vmatprep.subr.bf16.mxu0 0
        %476 = vmatpush1.bf16.msra.mxu0 0
        %477 = vmatprep.subr.bf16.mxu0 0
        %478 = vmatpush1.bf16.msra.mxu0 %v459
        %479 = vmatprep.subr.bf16.mxu0 0
        %480 = vmatpush1.bf16.msra.mxu0 %v458
        %481 = vmatprep.subr.bf16.mxu0 0
        %482 = vmatpush2.bf16.msra.mxu0 0
        %483 = vmatprep.subr.bf16.mxu0 0
        %484 = vmatpush2.bf16.msra.mxu0 0
        %485 = vmatprep.subr.bf16.mxu0 0
        %486 = vmatpush2.bf16.msra.mxu0 0
        %487 = vmatprep.subr.bf16.mxu0 0
        %488 = vmatpush2.bf16.msra.mxu0 0
        %489 = vmatprep.subr.bf16.mxu0 0
        %490 = vmatpush2.bf16.msra.mxu0 0
        %491 = vmatprep.subr.bf16.mxu0 0
        %492 = vmatpush2.bf16.msra.mxu0 0
        %493 = vmatprep.subr.bf16.mxu0 0
        %494 = vmatpush2.bf16.msra.mxu0 0
        %495 = vmatprep.subr.bf16.mxu0 0
        %496 = vmatpush2.bf16.msra.mxu0 0
        %497 = vmatprep.mubr.bf16.mxu0 0
        %498 = vmatmul.mubr.bf16.gmra.mxu0 %v463
        %v499 = vpop.f32.mrf.mxu0
        %v500 = vadd.f32 0.0, %v499
        %v501 = vpop.f32.mrf.mxu0
        %v502 = vpop.f32.mrf.mxu0
        %v503 = vpop.f32.mrf.mxu0
        %504 = vdwg.mxu0
        %v505 = vpack.c.bf16 %v500, %v500
        %v506 = vlaneseq
        %v507 = vshrl.u32 %v506, 7
        %v508 = vlaneseq
        %v509 = vand.u32 %v508, 127
        %vm510 = vcmp.le.s32.totalorder %v509, %v507
        %v511 = vsel %vm510, 0.0, -1e+30
        %513 = vrot.lane.b32.xlu0 %v505, 96
        %v514 = vpop.permute.xlu0 %513
        %vm515 = vcmask 64512
        %v517 = vsel %vm515, %v505, 0
        %v520 = vsel %vm515, %v514, 0
        %522 = vmatprep.subr.bf16.mxu0 0
        %523 = vmatpush1.bf16.xpose.msra.mxu0 0
        %524 = vmatprep.subr.bf16.mxu0 0
        %525 = vmatpush1.bf16.xpose.msra.mxu0 0
        %526 = vmatprep.subr.bf16.mxu0 0
        %527 = vmatpush1.bf16.xpose.msra.mxu0 0
        %528 = vmatprep.subr.bf16.mxu0 0
        %529 = vmatpush1.bf16.xpose.msra.mxu0 0
        %530 = vmatprep.subr.bf16.mxu0 0
        %531 = vmatpush1.bf16.xpose.msra.mxu0 0
        %532 = vmatprep.subr.bf16.mxu0 0
        %533 = vmatpush1.bf16.xpose.msra.mxu0 0
        %534 = vmatprep.subr.bf16.mxu0 0
        %535 = vmatpush1.bf16.xpose.msra.mxu0 0
        %536 = vmatprep.subr.bf16.mxu0 0
        %537 = vmatpush1.bf16.xpose.msra.mxu0 %v520
        %538 = vmatprep.subr.bf16.mxu0 0
        %539 = vmatpush2.bf16.xpose.msra.mxu0 0
        %540 = vmatprep.subr.bf16.mxu0 0
        %541 = vmatpush2.bf16.xpose.msra.mxu0 0
        %542 = vmatprep.subr.bf16.mxu0 0
        %543 = vmatpush2.bf16.xpose.msra.mxu0 0
        %544 = vmatprep.subr.bf16.mxu0 0
        %545 = vmatpush2.bf16.xpose.msra.mxu0 0
        %546 = vmatprep.subr.bf16.mxu0 0
        %547 = vmatpush2.bf16.xpose.msra.mxu0 0
        %548 = vmatprep.subr.bf16.mxu0 0
        %549 = vmatpush2.bf16.xpose.msra.mxu0 0
        %550 = vmatprep.subr.bf16.mxu0 0
        %551 = vmatpush2.bf16.xpose.msra.mxu0 0
        %552 = vmatprep.subr.bf16.mxu0 0
        %553 = vmatpush2.bf16.xpose.msra.mxu0 0
        %554 = vmatprep.mubr.bf16.mxu0 0
        %555 = vmatmul.mubr.bf16.gmra.mxu0 %v517
        %v556 = vpop.f32.mrf.mxu0
        %v557 = vadd.f32 %v511, %v556
        %v558 = vpop.f32.mrf.mxu0
        %v559 = vpop.f32.mrf.mxu0
        %v560 = vpop.f32.mrf.mxu0
        %561 = vdwg.mxu0
        %v562 = vsel %vm515, %v557, -inf
        %563 = vmax.xlane.f32.xlu0 %v562
        %v564 = vpop.xlane.xlu0 %563
        %v565 = vsub.f32 %v557, %v564
        %v566 = vmul.f32 %v565, 1.442695
        %v567 = vpow.pop %v566
        %v568 = vsel %vm515, %v567, 0.0
        %569 = vadd.xlane.f32.xlu0 %v568
        %v570 = vpop.xlane.xlu0 %569
        %v571 = vrcp.pop %v570
        %v572 = vmul.f32 %v567, %v571
        %v573 = vpack.c.bf16 %v572, %v572
        %574 = vrot.lane.b32.xlu0 %v505, 64
        %v575 = vpop.permute.xlu0 %574
        %v577 = vsel %vm515, %v573, 0
        %vm579 = vcmask 1043456
        %v581 = vsel %vm579, %v575, 0
        %583 = vmatprep.subr.bf16.mxu0 0
        %584 = vmatpush1.bf16.msra.mxu0 0
        %585 = vmatprep.subr.bf16.mxu0 0
        %586 = vmatpush1.bf16.msra.mxu0 0
        %587 = vmatprep.subr.bf16.mxu0 0
        %588 = vmatpush1.bf16.msra.mxu0 0
        %589 = vmatprep.subr.bf16.mxu0 0
        %590 = vmatpush1.bf16.msra.mxu0 0
        %591 = vmatprep.subr.bf16.mxu0 0
        %592 = vmatpush1.bf16.msra.mxu0 0
        %593 = vmatprep.subr.bf16.mxu0 0
        %594 = vmatpush1.bf16.msra.mxu0 0
        %595 = vmatprep.subr.bf16.mxu0 0
        %596 = vmatpush1.bf16.msra.mxu0 0
        %597 = vmatprep.subr.bf16.mxu0 0
        %598 = vmatpush1.bf16.msra.mxu0 %v581
        %599 = vmatprep.subr.bf16.mxu0 0
        %600 = vmatpush2.bf16.msra.mxu0 0
        %601 = vmatprep.subr.bf16.mxu0 0
        %602 = vmatpush2.bf16.msra.mxu0 0
        %603 = vmatprep.subr.bf16.mxu0 0
        %604 = vmatpush2.bf16.msra.mxu0 0
        %605 = vmatprep.subr.bf16.mxu0 0
        %606 = vmatpush2.bf16.msra.mxu0 0
        %607 = vmatprep.subr.bf16.mxu0 0
        %608 = vmatpush2.bf16.msra.mxu0 0
        %609 = vmatprep.subr.bf16.mxu0 0
        %610 = vmatpush2.bf16.msra.mxu0 0
        %611 = vmatprep.subr.bf16.mxu0 0
        %612 = vmatpush2.bf16.msra.mxu0 0
        %613 = vmatprep.subr.bf16.mxu0 0
        %614 = vmatpush2.bf16.msra.mxu0 0
        %615 = vmatprep.mubr.bf16.mxu0 0
        %616 = vmatmul.mubr.bf16.gmra.mxu0 %v577
        %v617 = vpop.f32.mrf.mxu0
        %v618 = vadd.f32 0.0, %v617
        %v619 = vpop.f32.mrf.mxu0
        %v620 = vpop.f32.mrf.mxu0
        %v621 = vpop.f32.mrf.mxu0
        %622 = vdwg.mxu0
        %v623 = vpack.c.bf16 %v618, %v618
        %624 = vrot.lane.b32.xlu0 %v505, 120
        %v625 = vpop.permute.xlu0 %624
        %626 = vrot.lane.b32.xlu0 %v505, 88
        %v627 = vpop.permute.xlu0 %626
        %v629 = vsel %vm515, %v625, 0
        %v632 = vsel %vm515, %v627, 0
        %634 = vmatprep.subr.bf16.mxu0 0
        %635 = vmatpush1.bf16.xpose.msra.mxu0 0
        %636 = vmatprep.subr.bf16.mxu0 0
        %637 = vmatpush1.bf16.xpose.msra.mxu0 0
        %638 = vmatprep.subr.bf16.mxu0 0
        %639 = vmatpush1.bf16.xpose.msra.mxu0 0
        %640 = vmatprep.subr.bf16.mxu0 0
        %641 = vmatpush1.bf16.xpose.msra.mxu0 0
        %642 = vmatprep.subr.bf16.mxu0 0
        %643 = vmatpush1.bf16.xpose.msra.mxu0 0
        %644 = vmatprep.subr.bf16.mxu0 0
        %645 = vmatpush1.bf16.xpose.msra.mxu0 0
        %646 = vmatprep.subr.bf16.mxu0 0
        %647 = vmatpush1.bf16.xpose.msra.mxu0 0
        %648 = vmatprep.subr.bf16.mxu0 0
        %649 = vmatpush1.bf16.xpose.msra.mxu0 %v632
        %650 = vmatprep.subr.bf16.mxu0 0
        %651 = vmatpush2.bf16.xpose.msra.mxu0 0
        %652 = vmatprep.subr.bf16.mxu0 0
        %653 = vmatpush2.bf16.xpose.msra.mxu0 0
        %654 = vmatprep.subr.bf16.mxu0 0
        %655 = vmatpush2.bf16.xpose.msra.mxu0 0
        %656 = vmatprep.subr.bf16.mxu0 0
        %657 = vmatpush2.bf16.xpose.msra.mxu0 0
        %658 = vmatprep.subr.bf16.mxu0 0
        %659 = vmatpush2.bf16.xpose.msra.mxu0 0
        %660 = vmatprep.subr.bf16.mxu0 0
        %661 = vmatpush2.bf16.xpose.msra.mxu0 0
        %662 = vmatprep.subr.bf16.mxu0 0
        %663 = vmatpush2.bf16.xpose.msra.mxu0 0
        %664 = vmatprep.subr.bf16.mxu0 0
        %665 = vmatpush2.bf16.xpose.msra.mxu0 0
        %666 = vmatprep.mubr.bf16.mxu0 0
        %667 = vmatmul.mubr.bf16.gmra.mxu0 %v629
        %v668 = vpop.f32.mrf.mxu0
        %v669 = vadd.f32 %v511, %v668
        %v670 = vpop.f32.mrf.mxu0
        %v671 = vpop.f32.mrf.mxu0
        %v672 = vpop.f32.mrf.mxu0
        %673 = vdwg.mxu0
        %v674 = vsel %vm515, %v669, -inf
        %675 = vmax.xlane.f32.xlu0 %v674
        %v676 = vpop.xlane.xlu0 %675
        %v677 = vsub.f32 %v669, %v676
        %v678 = vmul.f32 %v677, 1.442695
        %v679 = vpow.pop %v678
        %v680 = vsel %vm515, %v679, 0.0
        %681 = vadd.xlane.f32.xlu0 %v680
        %v682 = vpop.xlane.xlu0 %681
        %v683 = vrcp.pop %v682
        %v684 = vmul.f32 %v679, %v683
        %v685 = vpack.c.bf16 %v684, %v684
        %686 = vrot.lane.b32.xlu0 %v505, 56
        %v687 = vpop.permute.xlu0 %686
        %v689 = vsel %vm515, %v685, 0
        %v692 = vsel %vm579, %v687, 0
        %694 = vmatprep.subr.bf16.mxu0 0
        %695 = vmatpush1.bf16.msra.mxu0 0
        %696 = vmatprep.subr.bf16.mxu0 0
        %697 = vmatpush1.bf16.msra.mxu0 0
        %698 = vmatprep.subr.bf16.mxu0 0
        %699 = vmatpush1.bf16.msra.mxu0 0
        %700 = vmatprep.subr.bf16.mxu0 0
        %701 = vmatpush1.bf16.msra.mxu0 0
        %702 = vmatprep.subr.bf16.mxu0 0
        %703 = vmatpush1.bf16.msra.mxu0 0
        %704 = vmatprep.subr.bf16.mxu0 0
        %705 = vmatpush1.bf16.msra.mxu0 0
        %706 = vmatprep.subr.bf16.mxu0 0
        %707 = vmatpush1.bf16.msra.mxu0 0
        %708 = vmatprep.subr.bf16.mxu0 0
        %709 = vmatpush1.bf16.msra.mxu0 %v692
        %710 = vmatprep.subr.bf16.mxu0 0
        %711 = vmatpush2.bf16.msra.mxu0 0
        %712 = vmatprep.subr.bf16.mxu0 0
        %713 = vmatpush2.bf16.msra.mxu0 0
        %714 = vmatprep.subr.bf16.mxu0 0
        %715 = vmatpush2.bf16.msra.mxu0 0
        %716 = vmatprep.subr.bf16.mxu0 0
        %717 = vmatpush2.bf16.msra.mxu0 0
        %718 = vmatprep.subr.bf16.mxu0 0
        %719 = vmatpush2.bf16.msra.mxu0 0
        %720 = vmatprep.subr.bf16.mxu0 0
        %721 = vmatpush2.bf16.msra.mxu0 0
        %722 = vmatprep.subr.bf16.mxu0 0
        %723 = vmatpush2.bf16.msra.mxu0 0
        %724 = vmatprep.subr.bf16.mxu0 0
        %725 = vmatpush2.bf16.msra.mxu0 0
        %726 = vmatprep.mubr.bf16.mxu0 0
        %727 = vmatmul.mubr.bf16.gmra.mxu0 %v689
        %v728 = vpop.f32.mrf.mxu0
        %v729 = vadd.f32 0.0, %v728
        %v730 = vpop.f32.mrf.mxu0
        %v731 = vpop.f32.mrf.mxu0
        %v732 = vpop.f32.mrf.mxu0
        %733 = vdwg.mxu0
        %v734 = vpack.c.bf16 %v729, %v729
        %735 = vrot.lane.b32.xlu0 %v505, 112
        %v736 = vpop.permute.xlu0 %735
        %737 = vrot.lane.b32.xlu0 %v505, 80
        %v738 = vpop.permute.xlu0 %737
        %v740 = vsel %vm515, %v736, 0
        %v743 = vsel %vm515, %v738, 0
        %745 = vmatprep.subr.bf16.mxu0 0
        %746 = vmatpush1.bf16.xpose.msra.mxu0 0
        %747 = vmatprep.subr.bf16.mxu0 0
        %748 = vmatpush1.bf16.xpose.msra.mxu0 0
        %749 = vmatprep.subr.bf16.mxu0 0
        %750 = vmatpush1.bf16.xpose.msra.mxu0 0
        %751 = vmatprep.subr.bf16.mxu0 0
        %752 = vmatpush1.bf16.xpose.msra.mxu0 0
        %753 = vmatprep.subr.bf16.mxu0 0
        %754 = vmatpush1.bf16.xpose.msra.mxu0 0
        %755 = vmatprep.subr.bf16.mxu0 0
        %756 = vmatpush1.bf16.xpose.msra.mxu0 0
        %757 = vmatprep.subr.bf16.mxu0 0
        %758 = vmatpush1.bf16.xpose.msra.mxu0 0
        %759 = vmatprep.subr.bf16.mxu0 0
        %760 = vmatpush1.bf16.xpose.msra.mxu0 %v743
        %761 = vmatprep.subr.bf16.mxu0 0
        %762 = vmatpush2.bf16.xpose.msra.mxu0 0
        %763 = vmatprep.subr.bf16.mxu0 0
        %764 = vmatpush2.bf16.xpose.msra.mxu0 0
        %765 = vmatprep.subr.bf16.mxu0 0
        %766 = vmatpush2.bf16.xpose.msra.mxu0 0
        %767 = vmatprep.subr.bf16.mxu0 0
        %768 = vmatpush2.bf16.xpose.msra.mxu0 0
        %769 = vmatprep.subr.bf16.mxu0 0
        %770 = vmatpush2.bf16.xpose.msra.mxu0 0
        %771 = vmatprep.subr.bf16.mxu0 0
        %772 = vmatpush2.bf16.xpose.msra.mxu0 0
        %773 = vmatprep.subr.bf16.mxu0 0
        %774 = vmatpush2.bf16.xpose.msra.mxu0 0
        %775 = vmatprep.subr.bf16.mxu0 0
        %776 = vmatpush2.bf16.xpose.msra.mxu0 0
        %777 = vmatprep.mubr.bf16.mxu0 0
        %778 = vmatmul.mubr.bf16.gmra.mxu0 %v740
        %v779 = vpop.f32.mrf.mxu0
        %v780 = vadd.f32 %v511, %v779
        %v781 = vpop.f32.mrf.mxu0
        %v782 = vpop.f32.mrf.mxu0
        %v783 = vpop.f32.mrf.mxu0
        %784 = vdwg.mxu0
        %v785 = vsel %vm515, %v780, -inf
        %786 = vmax.xlane.f32.xlu0 %v785
        %v787 = vpop.xlane.xlu0 %786
        %v788 = vsub.f32 %v780, %v787
        %v789 = vmul.f32 %v788, 1.442695
        %v790 = vpow.pop %v789
        %v791 = vsel %vm515, %v790, 0.0
        %792 = vadd.xlane.f32.xlu0 %v791
        %v793 = vpop.xlane.xlu0 %792
        %v794 = vrcp.pop %v793
        %v795 = vmul.f32 %v790, %v794
        %v796 = vpack.c.bf16 %v795, %v795
        %797 = vrot.lane.b32.xlu0 %v505, 48
        %v798 = vpop.permute.xlu0 %797
        %v800 = vsel %vm515, %v796, 0
        %v803 = vsel %vm579, %v798, 0
        %805 = vmatprep.subr.bf16.mxu0 0
        %806 = vmatpush1.bf16.msra.mxu0 0
        %807 = vmatprep.subr.bf16.mxu0 0
        %808 = vmatpush1.bf16.msra.mxu0 0
        %809 = vmatprep.subr.bf16.mxu0 0
        %810 = vmatpush1.bf16.msra.mxu0 0
        %811 = vmatprep.subr.bf16.mxu0 0
        %812 = vmatpush1.bf16.msra.mxu0 0
        %813 = vmatprep.subr.bf16.mxu0 0
        %814 = vmatpush1.bf16.msra.mxu0 0
        %815 = vmatprep.subr.bf16.mxu0 0
        %816 = vmatpush1.bf16.msra.mxu0 0
        %817 = vmatprep.subr.bf16.mxu0 0
        %818 = vmatpush1.bf16.msra.mxu0 0
        %819 = vmatprep.subr.bf16.mxu0 0
        %820 = vmatpush1.bf16.msra.mxu0 %v803
        %821 = vmatprep.subr.bf16.mxu0 0
        %822 = vmatpush2.bf16.msra.mxu0 0
        %823 = vmatprep.subr.bf16.mxu0 0
        %824 = vmatpush2.bf16.msra.mxu0 0
        %825 = vmatprep.subr.bf16.mxu0 0
        %826 = vmatpush2.bf16.msra.mxu0 0
        %827 = vmatprep.subr.bf16.mxu0 0
        %828 = vmatpush2.bf16.msra.mxu0 0
        %829 = vmatprep.subr.bf16.mxu0 0
        %830 = vmatpush2.bf16.msra.mxu0 0
        %831 = vmatprep.subr.bf16.mxu0 0
        %832 = vmatpush2.bf16.msra.mxu0 0
        %833 = vmatprep.subr.bf16.mxu0 0
        %834 = vmatpush2.bf16.msra.mxu0 0
        %835 = vmatprep.subr.bf16.mxu0 0
        %836 = vmatpush2.bf16.msra.mxu0 0
        %837 = vmatprep.mubr.bf16.mxu0 0
        %838 = vmatmul.mubr.bf16.gmra.mxu0 %v800
        %v839 = vpop.f32.mrf.mxu0
        %v840 = vadd.f32 0.0, %v839
        %v841 = vpop.f32.mrf.mxu0
        %v842 = vpop.f32.mrf.mxu0
        %v843 = vpop.f32.mrf.mxu0
        %844 = vdwg.mxu0
        %v845 = vpack.c.bf16 %v840, %v840
        %846 = vrot.lane.b32.xlu0 %v505, 104
        %v847 = vpop.permute.xlu0 %846
        %848 = vrot.lane.b32.xlu0 %v505, 72
        %v849 = vpop.permute.xlu0 %848
        %v851 = vsel %vm515, %v847, 0
        %v854 = vsel %vm515, %v849, 0
        %856 = vmatprep.subr.bf16.mxu0 0
        %857 = vmatpush1.bf16.xpose.msra.mxu0 0
        %858 = vmatprep.subr.bf16.mxu0 0
        %859 = vmatpush1.bf16.xpose.msra.mxu0 0
        %860 = vmatprep.subr.bf16.mxu0 0
        %861 = vmatpush1.bf16.xpose.msra.mxu0 0
        %862 = vmatprep.subr.bf16.mxu0 0
        %863 = vmatpush1.bf16.xpose.msra.mxu0 0
        %864 = vmatprep.subr.bf16.mxu0 0
        %865 = vmatpush1.bf16.xpose.msra.mxu0 0
        %866 = vmatprep.subr.bf16.mxu0 0
        %867 = vmatpush1.bf16.xpose.msra.mxu0 0
        %868 = vmatprep.subr.bf16.mxu0 0
        %869 = vmatpush1.bf16.xpose.msra.mxu0 0
        %870 = vmatprep.subr.bf16.mxu0 0
        %871 = vmatpush1.bf16.xpose.msra.mxu0 %v854
        %872 = vmatprep.subr.bf16.mxu0 0
        %873 = vmatpush2.bf16.xpose.msra.mxu0 0
        %874 = vmatprep.subr.bf16.mxu0 0
        %875 = vmatpush2.bf16.xpose.msra.mxu0 0
        %876 = vmatprep.subr.bf16.mxu0 0
        %877 = vmatpush2.bf16.xpose.msra.mxu0 0
        %878 = vmatprep.subr.bf16.mxu0 0
        %879 = vmatpush2.bf16.xpose.msra.mxu0 0
        %880 = vmatprep.subr.bf16.mxu0 0
        %881 = vmatpush2.bf16.xpose.msra.mxu0 0
        %882 = vmatprep.subr.bf16.mxu0 0
        %883 = vmatpush2.bf16.xpose.msra.mxu0 0
        %884 = vmatprep.subr.bf16.mxu0 0
        %885 = vmatpush2.bf16.xpose.msra.mxu0 0
        %886 = vmatprep.subr.bf16.mxu0 0
        %887 = vmatpush2.bf16.xpose.msra.mxu0 0
        %888 = vmatprep.mubr.bf16.mxu0 0
        %889 = vmatmul.mubr.bf16.gmra.mxu0 %v851
        %v890 = vpop.f32.mrf.mxu0
        %v891 = vadd.f32 %v511, %v890
        %v892 = vpop.f32.mrf.mxu0
        %v893 = vpop.f32.mrf.mxu0
        %v894 = vpop.f32.mrf.mxu0
        %895 = vdwg.mxu0
        %v896 = vsel %vm515, %v891, -inf
        %897 = vmax.xlane.f32.xlu0 %v896
        %v898 = vpop.xlane.xlu0 %897
        %v899 = vsub.f32 %v891, %v898
        %v900 = vmul.f32 %v899, 1.442695
        %v901 = vpow.pop %v900
        %v902 = vsel %vm515, %v901, 0.0
        %903 = vadd.xlane.f32.xlu0 %v902
        %v904 = vpop.xlane.xlu0 %903
        %v905 = vrcp.pop %v904
        %v906 = vmul.f32 %v901, %v905
        %v907 = vpack.c.bf16 %v906, %v906
        %908 = vrot.lane.b32.xlu0 %v505, 40
        %v909 = vpop.permute.xlu0 %908
        %v911 = vsel %vm515, %v907, 0
        %v914 = vsel %vm579, %v909, 0
        %916 = vmatprep.subr.bf16.mxu0 0
        %917 = vmatpush1.bf16.msra.mxu0 0
        %918 = vmatprep.subr.bf16.mxu0 0
        %919 = vmatpush1.bf16.msra.mxu0 0
        %920 = vmatprep.subr.bf16.mxu0 0
        %921 = vmatpush1.bf16.msra.mxu0 0
        %922 = vmatprep.subr.bf16.mxu0 0
        %923 = vmatpush1.bf16.msra.mxu0 0
        %924 = vmatprep.subr.bf16.mxu0 0
        %925 = vmatpush1.bf16.msra.mxu0 0
        %926 = vmatprep.subr.bf16.mxu0 0
        %927 = vmatpush1.bf16.msra.mxu0 0
        %928 = vmatprep.subr.bf16.mxu0 0
        %929 = vmatpush1.bf16.msra.mxu0 0
        %930 = vmatprep.subr.bf16.mxu0 0
        %931 = vmatpush1.bf16.msra.mxu0 %v914
        %932 = vmatprep.subr.bf16.mxu0 0
        %933 = vmatpush2.bf16.msra.mxu0 0
        %934 = vmatprep.subr.bf16.mxu0 0
        %935 = vmatpush2.bf16.msra.mxu0 0
        %936 = vmatprep.subr.bf16.mxu0 0
        %937 = vmatpush2.bf16.msra.mxu0 0
        %938 = vmatprep.subr.bf16.mxu0 0
        %939 = vmatpush2.bf16.msra.mxu0 0
        %940 = vmatprep.subr.bf16.mxu0 0
        %941 = vmatpush2.bf16.msra.mxu0 0
        %942 = vmatprep.subr.bf16.mxu0 0
        %943 = vmatpush2.bf16.msra.mxu0 0
        %944 = vmatprep.subr.bf16.mxu0 0
        %945 = vmatpush2.bf16.msra.mxu0 0
        %946 = vmatprep.subr.bf16.mxu0 0
        %947 = vmatpush2.bf16.msra.mxu0 0
        %948 = vmatprep.mubr.bf16.mxu0 0
        %949 = vmatmul.mubr.bf16.gmra.mxu0 %v911
        %v950 = vpop.f32.mrf.mxu0
        %v951 = vadd.f32 0.0, %v950
        %v952 = vpop.f32.mrf.mxu0
        %v953 = vpop.f32.mrf.mxu0
        %v954 = vpop.f32.mrf.mxu0
        %955 = vdwg.mxu0
        %v956 = vpack.c.bf16 %v951, %v951
        %958 = vrot.lane.b32.xlu0 %v734, 8
        %v959 = vpop.permute.xlu0 %958
        %961 = vrot.lane.b32.xlu0 %v845, 16
        %v962 = vpop.permute.xlu0 %961
        %964 = vrot.lane.b32.xlu0 %v956, 24
        %v965 = vpop.permute.xlu0 %964
        %v968 = vsel %vm515, %v623, %v959
        %vm969 = vcmask 130048
        %v971 = vsel %vm969, %v968, %v962
        %vm972 = vcmask 195584
        %v974 = vsel %vm972, %v971, %v965
        %v975 = vld [vmem:[%s4] sm:$0xf]
        %v976 = vld [vmem:[%s4 + $0x4] sm:$0xf]
        %v977 = vld [vmem:[%s4 + $0x8] sm:$0xf]
        %v978 = vld [vmem:[%s4 + $0xc] sm:$0xf]
        %v979 = vld [vmem:[%s5] sm:$0x1]
        %v981 = vlaneseq
        %v982 = vshrl.u32 %v981, 7
        %v983 = vsub.s32 0, %v982
        %v984 = vrot.slane %v979, %v983
        %v990 = vunpack.c.l.b16 %v975
        %v991 = vunpack.c.l.b16 %v976
        %v992 = vunpack.c.l.b16 %v977
        %v993 = vunpack.c.l.b16 %v978
        %v994 = vpack.c.b16 %v991, %v990
        %v995 = vpack.c.b16 %v993, %v992
        %v998 = vsel %vm413, %v974, 0
        %1000 = vmatprep.subr.bf16.mxu0 0
        %1001 = vmatpush1.bf16.msra.mxu0 0
        %1002 = vmatprep.subr.bf16.mxu0 0
        %1003 = vmatpush1.bf16.msra.mxu0 0
        %1004 = vmatprep.subr.bf16.mxu0 0
        %1005 = vmatpush1.bf16.msra.mxu0 0
        %1006 = vmatprep.subr.bf16.mxu0 0
        %1007 = vmatpush1.bf16.msra.mxu0 0
        %1008 = vmatprep.subr.bf16.mxu0 0
        %1009 = vmatpush1.bf16.msra.mxu0 0
        %1010 = vmatprep.subr.bf16.mxu0 0
        %1011 = vmatpush1.bf16.msra.mxu0 0
        %1012 = vmatprep.subr.bf16.mxu0 0
        %1013 = vmatpush1.bf16.msra.mxu0 %v995
        %1014 = vmatprep.subr.bf16.mxu0 0
        %1015 = vmatpush1.bf16.msra.mxu0 %v994
        %1016 = vmatprep.subr.bf16.mxu0 0
        %1017 = vmatpush2.bf16.msra.mxu0 0
        %1018 = vmatprep.subr.bf16.mxu0 0
        %1019 = vmatpush2.bf16.msra.mxu0 0
        %1020 = vmatprep.subr.bf16.mxu0 0
        %1021 = vmatpush2.bf16.msra.mxu0 0
        %1022 = vmatprep.subr.bf16.mxu0 0
        %1023 = vmatpush2.bf16.msra.mxu0 0
        %1024 = vmatprep.subr.bf16.mxu0 0
        %1025 = vmatpush2.bf16.msra.mxu0 0
        %1026 = vmatprep.subr.bf16.mxu0 0
        %1027 = vmatpush2.bf16.msra.mxu0 0
        %1028 = vmatprep.subr.bf16.mxu0 0
        %1029 = vmatpush2.bf16.msra.mxu0 0
        %1030 = vmatprep.subr.bf16.mxu0 0
        %1031 = vmatpush2.bf16.msra.mxu0 0
        %1032 = vmatprep.mubr.bf16.mxu0 0
        %1033 = vmatmul.mubr.bf16.gmra.mxu0 %v998
        %v1034 = vpop.f32.mrf.mxu0
        %v1035 = vadd.f32 %v984, %v1034
        %v1036 = vpop.f32.mrf.mxu0
        %v1037 = vpop.f32.mrf.mxu0
        %v1038 = vpop.f32.mrf.mxu0
        %1039 = vdwg.mxu0
        %v1040 = vadd.f32 %v410, %v1035
        %v1041 = vld [vmem:[%s6] sm:$0x1]
        %v1042 = vld [vmem:[%s7] sm:$0x1]
        %v1043 = vsel %vm413, %v1040, 0.0
        %1044 = vadd.xlane.f32.xlu0 %v1043
        %v1045 = vpop.xlane.xlu0 %1044
        %v1046 = vmul.f32 %v1045, %v417
        %v1047 = vmul.f32 %v1040, %v1040
        %v1048 = vsel %vm413, %v1047, 0.0
        %1049 = vadd.xlane.f32.xlu0 %v1048
        %v1050 = vpop.xlane.xlu0 %1049
        %v1051 = vmul.f32 %v1050, %v417
        %v1052 = vmul.f32 %v1046, %v1046
        %v1053 = vsub.f32 %v1051, %v1052
        %v1054 = vmax.f32 %v1053, 0.0
        %v1055 = vsub.f32 %v1040, %v1046
        %v1056 = vadd.f32 %v1054, 1e-05
        %v1057 = vrsqrt.pop %v1056
        %v1058 = vmul.f32 %v1055, %v1057
        %v1060 = vlaneseq
        %v1061 = vshrl.u32 %v1060, 7
        %v1062 = vsub.s32 0, %v1061
        %v1063 = vrot.slane %v1041, %v1062
        %v1065 = vmul.f32 %v1058, %v1063
        %v1067 = vlaneseq
        %v1068 = vshrl.u32 %v1067, 7
        %v1069 = vsub.s32 0, %v1068
        %v1070 = vrot.slane %v1042, %v1069
        %v1072 = vadd.f32 %v1065, %v1070
        %v1073 = vpack.c.bf16 %v1072, %v1072
        %v1074 = vld [vmem:[%s8] sm:$0xf]
        %v1075 = vld [vmem:[%s8 + $0x4] sm:$0xf]
        %v1076 = vld [vmem:[%s8 + $0x8] sm:$0xf]
        %v1077 = vld [vmem:[%s8 + $0xc] sm:$0xf]
        %v1078 = vld [vmem:[%s9] sm:$0x1]
        %v1080 = vlaneseq
        %v1081 = vshrl.u32 %v1080, 7
        %v1082 = vsub.s32 0, %v1081
        %v1083 = vrot.slane %v1078, %v1082
        %v1089 = vunpack.c.l.b16 %v1074
        %v1090 = vunpack.c.l.b16 %v1075
        %v1091 = vunpack.c.l.b16 %v1076
        %v1092 = vunpack.c.l.b16 %v1077
        %v1093 = vpack.c.b16 %v1090, %v1089
        %v1094 = vpack.c.b16 %v1092, %v1091
        %v1098 = vsel %vm413, %v1073, 0
        %1100 = vmatprep.subr.bf16.mxu0 0
        %1101 = vmatpush1.bf16.msra.mxu0 0
        %1102 = vmatprep.subr.bf16.mxu0 0
        %1103 = vmatpush1.bf16.msra.mxu0 0
        %1104 = vmatprep.subr.bf16.mxu0 0
        %1105 = vmatpush1.bf16.msra.mxu0 0
        %1106 = vmatprep.subr.bf16.mxu0 0
        %1107 = vmatpush1.bf16.msra.mxu0 0
        %1108 = vmatprep.subr.bf16.mxu0 0
        %1109 = vmatpush1.bf16.msra.mxu0 0
        %1110 = vmatprep.subr.bf16.mxu0 0
        %1111 = vmatpush1.bf16.msra.mxu0 0
        %1112 = vmatprep.subr.bf16.mxu0 0
        %1113 = vmatpush1.bf16.msra.mxu0 %v1094
        %1114 = vmatprep.subr.bf16.mxu0 0
        %1115 = vmatpush1.bf16.msra.mxu0 %v1093
        %1116 = vmatprep.subr.bf16.mxu0 0
        %1117 = vmatpush2.bf16.msra.mxu0 0
        %1118 = vmatprep.subr.bf16.mxu0 0
        %1119 = vmatpush2.bf16.msra.mxu0 0
        %1120 = vmatprep.subr.bf16.mxu0 0
        %1121 = vmatpush2.bf16.msra.mxu0 0
        %1122 = vmatprep.subr.bf16.mxu0 0
        %1123 = vmatpush2.bf16.msra.mxu0 0
        %1124 = vmatprep.subr.bf16.mxu0 0
        %1125 = vmatpush2.bf16.msra.mxu0 0
        %1126 = vmatprep.subr.bf16.mxu0 0
        %1127 = vmatpush2.bf16.msra.mxu0 0
        %1128 = vmatprep.subr.bf16.mxu0 0
        %1129 = vmatpush2.bf16.msra.mxu0 0
        %1130 = vmatprep.subr.bf16.mxu0 0
        %1131 = vmatpush2.bf16.msra.mxu0 0
        %1132 = vmatprep.mubr.bf16.mxu0 0
        %1133 = vmatmul.mubr.bf16.gmra.mxu0 %v1098
        %v1134 = vpop.f32.mrf.mxu0
        %v1135 = vadd.f32 %v1083, %v1134
        %v1136 = vpop.f32.mrf.mxu0
        %v1137 = vpop.f32.mrf.mxu0
        %v1138 = vpop.f32.mrf.mxu0
        %1139 = vdwg.mxu0
        %v1140 = vmax.f32 %v1135, 0.0
        %v1141 = vpack.c.bf16 %v1140, %v1140
        %v1142 = vld [vmem:[%s10] sm:$0xf]
        %v1143 = vld [vmem:[%s10 + $0x4] sm:$0xf]
        %v1144 = vld [vmem:[%s10 + $0x8] sm:$0xf]
        %v1145 = vld [vmem:[%s10 + $0xc] sm:$0xf]
        %v1146 = vld [vmem:[%s10 + $0x10] sm:$0xf]
        %v1147 = vld [vmem:[%s10 + $0x14] sm:$0xf]
        %v1148 = vld [vmem:[%s10 + $0x18] sm:$0xf]
        %v1149 = vld [vmem:[%s10 + $0x1c] sm:$0xf]
        %v1150 = vld [vmem:[%s10 + $0x20] sm:$0xf]
        %v1151 = vld [vmem:[%s10 + $0x24] sm:$0xf]
        %v1152 = vld [vmem:[%s10 + $0x28] sm:$0xf]
        %v1153 = vld [vmem:[%s10 + $0x2c] sm:$0xf]
        %v1154 = vld [vmem:[%s10 + $0x30] sm:$0xf]
        %v1155 = vld [vmem:[%s10 + $0x34] sm:$0xf]
        %v1156 = vld [vmem:[%s10 + $0x38] sm:$0xf]
        %v1157 = vld [vmem:[%s10 + $0x3c] sm:$0xf]
        %v1158 = vld [vmem:[%s11] sm:$0x1]
        %v1160 = vlaneseq
        %v1161 = vshrl.u32 %v1160, 7
        %v1162 = vsub.s32 0, %v1161
        %v1163 = vrot.slane %v1158, %v1162
        %v1181 = vunpack.c.l.b16 %v1142
        %v1182 = vunpack.c.l.b16 %v1143
        %v1183 = vunpack.c.l.b16 %v1144
        %v1184 = vunpack.c.l.b16 %v1145
        %v1185 = vunpack.c.l.b16 %v1146
        %v1186 = vunpack.c.l.b16 %v1147
        %v1187 = vunpack.c.l.b16 %v1148
        %v1188 = vunpack.c.l.b16 %v1149
        %v1189 = vunpack.c.l.b16 %v1150
        %v1190 = vunpack.c.l.b16 %v1151
        %v1191 = vunpack.c.l.b16 %v1152
        %v1192 = vunpack.c.l.b16 %v1153
        %v1193 = vunpack.c.l.b16 %v1154
        %v1194 = vunpack.c.l.b16 %v1155
        %v1195 = vunpack.c.l.b16 %v1156
        %v1196 = vunpack.c.l.b16 %v1157
        %v1197 = vpack.c.b16 %v1182, %v1181
        %v1198 = vpack.c.b16 %v1184, %v1183
        %v1199 = vpack.c.b16 %v1186, %v1185
        %v1200 = vpack.c.b16 %v1188, %v1187
        %v1201 = vpack.c.b16 %v1190, %v1189
        %v1202 = vpack.c.b16 %v1192, %v1191
        %v1203 = vpack.c.b16 %v1194, %v1193
        %v1204 = vpack.c.b16 %v1196, %v1195
        %1213 = vmatprep.subr.bf16.mxu0 0
        %1214 = vmatpush1.bf16.msra.mxu0 %v1204
        %1215 = vmatprep.subr.bf16.mxu0 0
        %1216 = vmatpush1.bf16.msra.mxu0 %v1203
        %1217 = vmatprep.subr.bf16.mxu0 0
        %1218 = vmatpush1.bf16.msra.mxu0 %v1202
        %1219 = vmatprep.subr.bf16.mxu0 0
        %1220 = vmatpush1.bf16.msra.mxu0 %v1201
        %1221 = vmatprep.subr.bf16.mxu0 0
        %1222 = vmatpush1.bf16.msra.mxu0 %v1200
        %1223 = vmatprep.subr.bf16.mxu0 0
        %1224 = vmatpush1.bf16.msra.mxu0 %v1199
        %1225 = vmatprep.subr.bf16.mxu0 0
        %1226 = vmatpush1.bf16.msra.mxu0 %v1198
        %1227 = vmatprep.subr.bf16.mxu0 0
        %1228 = vmatpush1.bf16.msra.mxu0 %v1197
        %1229 = vmatprep.subr.bf16.mxu0 0
        %1230 = vmatpush2.bf16.msra.mxu0 0
        %1231 = vmatprep.subr.bf16.mxu0 0
        %1232 = vmatpush2.bf16.msra.mxu0 0
        %1233 = vmatprep.subr.bf16.mxu0 0
        %1234 = vmatpush2.bf16.msra.mxu0 0
        %1235 = vmatprep.subr.bf16.mxu0 0
        %1236 = vmatpush2.bf16.msra.mxu0 0
        %1237 = vmatprep.subr.bf16.mxu0 0
        %1238 = vmatpush2.bf16.msra.mxu0 0
        %1239 = vmatprep.subr.bf16.mxu0 0
        %1240 = vmatpush2.bf16.msra.mxu0 0
        %1241 = vmatprep.subr.bf16.mxu0 0
        %1242 = vmatpush2.bf16.msra.mxu0 0
        %1243 = vmatprep.subr.bf16.mxu0 0
        %1244 = vmatpush2.bf16.msra.mxu0 0
        %1245 = vmatprep.mubr.bf16.mxu0 0
        %1246 = vmatmul.mubr.bf16.gmra.mxu0 %v1141
        %v1247 = vpop.f32.mrf.mxu0
        %v1248 = vadd.f32 %v1163, %v1247
        %v1249 = vpop.f32.mrf.mxu0
        %v1250 = vpop.f32.mrf.mxu0
        %v1251 = vpop.f32.mrf.mxu0
        %1252 = vdwg.mxu0
        %v1253 = vadd.f32 %v1040, %v1248
        %1254 = vst.msk [vmem:[%s404] sm:$0xff] %vm413, %v1253
        %s1255 = sand.u32 %s291, 1
        %s1256 = scalar_lea.sflag [#allocation3], %s1255
        %s1257 = sand.u32 %s291, 1
        %s1258 = smul.addr %s1257, 8
        %s1259 = scalar_lea.vmem [#allocation2], %s1258
        // Predicated region
        $region69: #{tpu_custom_call.1} parent=67 // pred_check
          %p1260 = pneg %p301
        $region70: #{tpu_custom_call.1} parent=67 // pred_check_branch
          %1262 = sbr.rel (%p1260) target = $region72
        $region71: #{tpu_custom_call.1} parent=67 // pred_region
          %s1264 = ssub.s32 128, 128
          %1265 = vsyncadd %s1256, %s1264
          %s1266 = smul.addr %s26, 128
          %s1267 = scalar_lea.hbm %s12, %s1266
          %s1269 = sshll.u32 %s1259, 4
          %s1270 = int_to_ptr.vmem [resolvable:$true] %s1269
          %1272 = dma.vmem_to_hbm [thread:$0]  %s1270, 128, %s1267, %s1256
        $region72: #{tpu_custom_call.1} parent=67 // pred_fallthru
          _
      $region68: #{tpu_custom_call.1} parent=5 // pred_fallthru
        _
      %p1273 = scmp.le.s32.totalorder 2, %s21
      // Predicated region
      $region73: #{tpu_custom_call.1} parent=5 // pred_check
        %p1274 = pneg %p1273
      $region74: #{tpu_custom_call.1} parent=5 // pred_check_branch
        %1276 = sbr.rel (%p1274) target = $region76
      $region75: #{tpu_custom_call.1} parent=5 // pred_region
        %s1277 = ssub.s32 %s21, 2
        // Predicated region
        $region77: #{tpu_custom_call.1} parent=75 // pred_check
          %p1278 = pneg %p307
        $region78: #{tpu_custom_call.1} parent=75 // pred_check_branch
          %1280 = sbr.rel (%p1278) target = $region80
        $region79: #{tpu_custom_call.1} parent=75 // pred_region
          %s1281 = sand.u32 %s292, 1
          %s1282 = scalar_lea.sflag [#allocation3], %s1281
          %s1283 = sand.u32 %s292, 1
          %s1284 = smul.addr %s1283, 8
          %s1285 = scalar_lea.vmem [#allocation2], %s1284
          %1286 = dma.done %s1282, 128
        $region80: #{tpu_custom_call.1} parent=75 // pred_fallthru
          _
      $region76: #{tpu_custom_call.1} parent=5 // pred_fallthru
        _
    $region6: #{tpu_custom_call.1} parent=1 // loop_footer
      %s25 = sadd.s32 1, %s21
    $region7: #{tpu_custom_call.1} parent=1 // loop_footer_branch
      %20 = sbr.rel target = $region3
    $region8: #{tpu_custom_call.1} parent=1 // loop_exit
      _
    %1287 = vsyncpa [#allocation3], 1
    %s1288 = scalar_lea.sflag [#allocation3], 1
    %1289 = vsyncpa %s1288, 1

</llo_original>
